<compile_context>
chip_gen: v7x
topology: tpu7x:2x2x1
jax: 0.10.0
libtpu: 0.0.40
codegen_flags: <defaults>
</compile_context>

<pallas_src>
import math
import functools

import jax
import jax.numpy as jnp
from jax.experimental import pallas as pl
from jax.experimental.pallas import tpu as pltpu


def transformer_block_kernel(
    # ---- inputs ----
    x_ref,        # (S, E)   f32   full sequence, current batch (lane slice of (S, B*E))
    wq_ref,       # (E, E)   bf16
    bq_ref,       # (1, E)   f32
    wk_ref,       # (E, E)   bf16
    bk_ref,       # (1, E)   f32
    wv_ref,       # (E, E)   bf16
    bv_ref,       # (1, E)   f32
    wout_ref,     # (E, E)   bf16
    bout_ref,     # (1, E)   f32
    ln1g_ref,     # (1, E)   f32
    ln1b_ref,     # (1, E)   f32
    w1_ref,       # (E, 4E)  bf16
    b1_ref,       # (1, 4E)  f32
    w2_ref,       # (4E, E)  bf16
    b2_ref,       # (1, E)   f32
    ln2g_ref,     # (1, E)   f32
    ln2b_ref,     # (1, E)   f32
    # ---- output ----
    o_ref,        # (TQ, E)
    # ---- scratch ----
    k_scr,        # (S, E) bf16   per-batch K cache, head-concatenated
    v_scr,        # (S, E) bf16   per-batch V cache, head-concatenated
    *, n_head, block_q, block_k, eps,
):
    S = x_ref.shape[0]
    E = wq_ref.shape[0]
    Dh = E // n_head
    TQ = block_q
    TK = block_k
    NK = S // TK
    scale = 1.0 / math.sqrt(Dh)
    qi = pl.program_id(1)

    # ---- (1) per-batch K/V cache build: once per batch (qi == 0), in TK-row chunks ----
    @pl.when(qi == 0)
    def _():
        def build(i, carry):
            r = pl.multiple_of(i * TK, TK)
            xc = x_ref[pl.ds(r, TK), :].astype(jnp.bfloat16)               # (TK, E)
            k_scr[pl.ds(r, TK), :] = (
                jnp.dot(xc, wk_ref[...], preferred_element_type=jnp.float32)
                + bk_ref[...]).astype(jnp.bfloat16)
            v_scr[pl.ds(r, TK), :] = (
                jnp.dot(xc, wv_ref[...], preferred_element_type=jnp.float32)
                + bv_ref[...]).astype(jnp.bfloat16)
            return carry
        jax.lax.fori_loop(0, NK, build, 0)

    # ---- (2) query tile: projection (pre-scaled), kept head-concatenated (TQ, E) ----
    q_start = pl.multiple_of(qi * TQ, TQ)
    xq = x_ref[pl.ds(q_start, TQ), :]                                       # (TQ, E) f32
    q = (jnp.dot(xq.astype(jnp.bfloat16), wq_ref[...],
                 preferred_element_type=jnp.float32) + bq_ref[...]) * scale
    q = q.astype(jnp.bfloat16)

    # ---- (3) flash attention: online softmax over TK-sized KV tiles ----
    def init_head():
        return (jnp.full((TQ, 1), -jnp.inf, jnp.float32),    # running max m
                jnp.zeros((TQ, 1), jnp.float32),              # running denom l
                jnp.zeros((TQ, Dh), jnp.float32))             # running accumulator
    carry0 = tuple(init_head() for _ in range(n_head))

    def kv_step(j, carry):
        r = pl.multiple_of(j * TK, TK)
        k_t = k_scr[pl.ds(r, TK), :]                                        # (TK, E) bf16
        v_t = v_scr[pl.ds(r, TK), :]
        new = []
        for h in range(n_head):
            m_h, l_h, acc_h = carry[h]
            q_h = q[:, h * Dh:(h + 1) * Dh]                                 # (TQ, Dh)
            k_h = k_t[:, h * Dh:(h + 1) * Dh]                               # (TK, Dh)
            v_h = v_t[:, h * Dh:(h + 1) * Dh]                               # (TK, Dh)
            # q_h @ k_h.T on the MXU, f32 accumulation
            s_h = jax.lax.dot_general(q_h, k_h, (((1,), (1,)), ((), ())),
                                      preferred_element_type=jnp.float32)   # (TQ, TK)
            m_new = jnp.maximum(m_h, jnp.max(s_h, axis=-1, keepdims=True))
            alpha = jnp.exp(m_h - m_new)
            p_h = jnp.exp(s_h - m_new)
            l_new = alpha * l_h + jnp.sum(p_h, axis=-1, keepdims=True)
            acc_new = alpha * acc_h + jnp.dot(p_h.astype(jnp.bfloat16), v_h,
                                              preferred_element_type=jnp.float32)
            new.append((m_new, l_new, acc_new))
        return tuple(new)

    carry = jax.lax.fori_loop(0, NK, kv_step, carry0)

    # normalize each head (EUP approx reciprocal) and merge heads -> (TQ, E) f32
    attn = jnp.concatenate(
        [carry[h][2] * pl.reciprocal(carry[h][1], approx=True) for h in range(n_head)],
        axis=-1)

    # ---- (4) out-projection, residual, LayerNorm 1 (f32) ----
    attn = (jnp.dot(attn.astype(jnp.bfloat16), wout_ref[...],
                    preferred_element_type=jnp.float32) + bout_ref[...])
    x1 = xq + attn
    mu1 = jnp.mean(x1, axis=-1, keepdims=True)
    var1 = jnp.mean((x1 - mu1) ** 2, axis=-1, keepdims=True)
    x1n = (x1 - mu1) * jax.lax.rsqrt(var1 + eps) * ln1g_ref[...] + ln1b_ref[...]

    # ---- (5) MLP: Linear(E,4E) -> ReLU -> Linear(4E,E); bf16 operands, f32 accumulate ----
    h1 = (jnp.dot(x1n.astype(jnp.bfloat16), w1_ref[...],
                  preferred_element_type=jnp.float32) + b1_ref[...])
    h1 = jnp.maximum(h1, 0.0)
    mlp = (jnp.dot(h1.astype(jnp.bfloat16), w2_ref[...],
                   preferred_element_type=jnp.float32) + b2_ref[...])

    # ---- (6) residual + LayerNorm 2 (f32) ----
    x2 = x1n + mlp
    mu2 = jnp.mean(x2, axis=-1, keepdims=True)
    var2 = jnp.mean((x2 - mu2) ** 2, axis=-1, keepdims=True)
    x2n = (x2 - mu2) * jax.lax.rsqrt(var2 + eps) * ln2g_ref[...] + ln2b_ref[...]

    o_ref[...] = x2n.astype(o_ref.dtype)


def _spec_const(shape, *, buffers=1):
    """Full-array block, constant index map; single-buffered when supported."""
    idx = lambda b, qi, _n=len(shape): (0,) * _n
    try:
        return pl.BlockSpec(shape, idx, pipeline_mode=pl.Buffered(buffers))
    except Exception:  # older JAX without pipeline_mode / Buffered
        return pl.BlockSpec(shape, idx)


def _preferred_tile(default=128):
    """256-wide tiles feed the 2x256x256 MXU on v6e/v7x; v5e MXU is 128-wide."""
    try:
        kind = jax.devices()[0].device_kind.lower()
    except Exception:
        return default
    if "v5 lite" in kind or "v5e" in kind or "v5litepod" in kind:
        return 128
    return 256


def _vmem_limit_bytes():
    """Scoped VMEM request with headroom (do not ask for all of v7x's 64 MiB/TC)."""
    cap = 128 * 1024 * 1024
    try:
        cap = int(getattr(pltpu.get_tpu_info(), "vmem_capacity_bytes", cap))
    except Exception:
        pass
    return max(32 * 1024 * 1024, min(cap - 16 * 1024 * 1024, 96 * 1024 * 1024))


def transformer_block(x_sbe, params, *, n_head, block_q=None, block_k=None, eps=1e-5):
    """x_sbe: (S, B, E) float32, PyTorch seq-first convention."""
    S, B, E = x_sbe.shape
    if E % n_head != 0:
        raise ValueError("n_embd must be divisible by n_head")
    if B > 1 and E % 128 != 0:
        raise ValueError("for B > 1 the no-transpose lane layout needs n_embd % 128 == 0")

    tile = _preferred_tile()
    TQ = min(block_q if block_q is not None else tile, S)
    TK = min(block_k if block_k is not None else tile, S)
    if S % TQ != 0 or TQ % 8 != 0 or S % TK != 0 or TK % 8 != 0:
        raise ValueError("seq length must be divisible by 8-aligned query/key tiles")

    (win_t, bin_, wout_t, bout, ln1g, ln1b,
     w1_t, b1, w2_t, b2, ln2g, ln2b) = params

    bf16 = jnp.bfloat16
    # Split the fused in_proj into Q/K/V pieces on the host; weights to bf16,
    # biases / LayerNorm params stay f32 (applied after f32 accumulation).
    wq = win_t[:, :E].astype(bf16)
    wk = win_t[:, E:2 * E].astype(bf16)
    wv = win_t[:, 2 * E:].astype(bf16)
    bq = bin_[:, :E]
    bk = bin_[:, E:2 * E]
    bv = bin_[:, 2 * E:]
    wout = wout_t.astype(bf16)
    w1 = w1_t.astype(bf16)
    w2 = w2_t.astype(bf16)

    # Free layout change: (S, B, E) -> (S, B*E).  Batch b lives in lanes [b*E, (b+1)*E).
    x2d = x_sbe.reshape(S, B * E)

    kernel = functools.partial(
        transformer_block_kernel,
        n_head=n_head, block_q=TQ, block_k=TK, eps=eps,
    )

    flops = 24 * B * S * E * E + 4 * B * S * S * E
    transcendentals = B * n_head * S * S
    bytes_accessed = 2 * S * B * E * 4 + 12 * E * E * 2

    out2d = pl.pallas_call(
        kernel,
        out_shape=jax.ShapeDtypeStruct((S, B * E), x_sbe.dtype),
        grid=(B, S // TQ),
        in_specs=[
            # x: full sequence for the current batch only (changes with b, not with qi)
            pl.BlockSpec((S, E), lambda b, qi: (0, b)),
            _spec_const((E, E)),            # wq
            _spec_const((1, E)),            # bq
            _spec_const((E, E)),            # wk
            _spec_const((1, E)),            # bk
            _spec_const((E, E)),            # wv
            _spec_const((1, E)),            # bv
            _spec_const((E, E)),            # wout
            _spec_const((1, E)),            # bout
            _spec_const((1, E)),            # ln1 gamma
            _spec_const((1, E)),            # ln1 beta
            _spec_const((E, 4 * E)),        # mlp fc1
            _spec_const((1, 4 * E)),        # fc1 bias
            _spec_const((4 * E, E)),        # mlp fc2
            _spec_const((1, E)),            # fc2 bias
            _spec_const((1, E)),            # ln2 gamma
            _spec_const((1, E)),            # ln2 beta
        ],
        out_specs=pl.BlockSpec((TQ, E), lambda b, qi: (qi, b)),
        scratch_shapes=[
            pltpu.VMEM((S, E), jnp.bfloat16),   # per-batch K cache (head-concatenated)
            pltpu.VMEM((S, E), jnp.bfloat16),   # per-batch V cache
        ],
        compiler_params=pltpu.CompilerParams(
            # batch axis -> megacore sharding; query axis is sequential because the
            # per-batch K/V cache is built at qi == 0 and reused by later qi steps.
            dimension_semantics=("parallel", "arbitrary"),
            vmem_limit_bytes=_vmem_limit_bytes(),
        ),
        cost_estimate=pl.CostEstimate(
            flops=flops,
            transcendentals=transcendentals,
            bytes_accessed=bytes_accessed,
        ),
    )(x2d, wq, bq, wk, bk, wv, bv, wout, bout,
      ln1g, ln1b, w1, b1, w2, b2, ln2g, ln2b)

    return out2d.reshape(S, B, E)


def reference_block(x_sbe, params, *, n_head, eps=1e-5):
    """Pure-JAX f32 reference matching PyTorch TransformerBlock.forward semantics."""
    (win_t, bin_, wout_t, bout, ln1g, ln1b,
     w1_t, b1, w2_t, b2, ln2g, ln2b) = params
    S, B, E = x_sbe.shape
    Dh = E // n_head
    x = jnp.transpose(x_sbe, (1, 0, 2))                       # (B, S, E)

    qkv = x @ win_t + bin_
    q, k, v = jnp.split(qkv, 3, axis=-1)
    sh = lambda t: t.reshape(B, S, n_head, Dh).transpose(0, 2, 1, 3)
    qh, kh, vh = sh(q), sh(k), sh(v)
    s = jnp.einsum("bhqd,bhkd->bhqk", qh, kh) / math.sqrt(Dh)
    p = jax.nn.softmax(s, axis=-1)
    a = jnp.einsum("bhqk,bhkd->bhqd", p, vh).transpose(0, 2, 1, 3).reshape(B, S, E)
    attn = a @ wout_t + bout

    def ln(t, g, bb):
        mu = jnp.mean(t, -1, keepdims=True)
        var = jnp.mean((t - mu) ** 2, -1, keepdims=True)
        return (t - mu) * jax.lax.rsqrt(var + eps) * g + bb

    x1 = ln(x + attn, ln1g, ln1b)
    mlp = jnp.maximum(x1 @ w1_t + b1, 0.0) @ w2_t + b2
    x2 = ln(x1 + mlp, ln2g, ln2b)
    return jnp.transpose(x2, (1, 0, 2))


def init_params(key, n_embd):
    E = n_embd
    ks = jax.random.split(key, 12)
    std = 0.02
    win_t = jax.random.normal(ks[0], (E, 3 * E), jnp.float32) * std   # in_proj_weight.T
    bin_ = jax.random.normal(ks[1], (1, 3 * E), jnp.float32) * std
    wout_t = jax.random.normal(ks[2], (E, E), jnp.float32) * std      # out_proj.weight.T
    bout = jax.random.normal(ks[3], (1, E), jnp.float32) * std
    ln1g = 1.0 + jax.random.normal(ks[4], (1, E), jnp.float32) * std
    ln1b = jax.random.normal(ks[5], (1, E), jnp.float32) * std
    w1_t = jax.random.normal(ks[6], (E, 4 * E), jnp.float32) * std    # fc1.weight.T
    b1 = jax.random.normal(ks[7], (1, 4 * E), jnp.float32) * std
    w2_t = jax.random.normal(ks[8], (4 * E, E), jnp.float32) * std    # fc2.weight.T
    b2 = jax.random.normal(ks[9], (1, E), jnp.float32) * std
    ln2g = 1.0 + jax.random.normal(ks[10], (1, E), jnp.float32) * std
    ln2b = jax.random.normal(ks[11], (1, E), jnp.float32) * std
    return (win_t, bin_, wout_t, bout, ln1g, ln1b, w1_t, b1, w2_t, b2, ln2g, ln2b)


if __name__ == "__main__":
    # Small BabyJoey-like config with lane-aligned embedding: n_embd=128, n_head=4,
    # seq=64, batch=2.  block_q=16 / block_k=32 -> grid (2, 4) and a 2-step flash loop,
    # exercising the batch-parallel grid, the per-batch K/V cache, and online softmax.
    S, B, E, H = 64, 2, 128, 4
    key = jax.random.PRNGKey(0)
    k_x, k_p = jax.random.split(key)
    x = jax.random.normal(k_x, (S, B, E), jnp.float32)   # PyTorch (S, B, E) layout
    params = init_params(k_p, E)

    out = transformer_block(x, params, n_head=H, block_q=16, block_k=32)
    out = jax.block_until_ready(out)

    ref = reference_block(x, params, n_head=H)
    assert out.shape == (S, B, E)
    max_err = jnp.max(jnp.abs(out - ref))
    # bf16 MXU operands (f32 accumulation) + approx reciprocal -> relaxed tolerance.
    assert jnp.allclose(out, ref, rtol=3e-2, atol=3e-2), f"max abs err {max_err}"
    print("KERNEL_OK")
</pallas_src>

<mosaic_0001>
module attributes {stable_mosaic.version = 11 : i64} {
  func.func @transformer_block_kernel(%arg0: i32, %arg1: i32, %arg2: memref<64x128xf32, #tpu.memory_space<vmem>>, %arg3: memref<128x128xbf16, #tpu.memory_space<vmem>>, %arg4: memref<1x128xf32, #tpu.memory_space<vmem>>, %arg5: memref<128x128xbf16, #tpu.memory_space<vmem>>, %arg6: memref<1x128xf32, #tpu.memory_space<vmem>>, %arg7: memref<128x128xbf16, #tpu.memory_space<vmem>>, %arg8: memref<1x128xf32, #tpu.memory_space<vmem>>, %arg9: memref<128x128xbf16, #tpu.memory_space<vmem>>, %arg10: memref<1x128xf32, #tpu.memory_space<vmem>>, %arg11: memref<1x128xf32, #tpu.memory_space<vmem>>, %arg12: memref<1x128xf32, #tpu.memory_space<vmem>>, %arg13: memref<128x512xbf16, #tpu.memory_space<vmem>>, %arg14: memref<1x512xf32, #tpu.memory_space<vmem>>, %arg15: memref<512x128xbf16, #tpu.memory_space<vmem>>, %arg16: memref<1x128xf32, #tpu.memory_space<vmem>>, %arg17: memref<1x128xf32, #tpu.memory_space<vmem>>, %arg18: memref<1x128xf32, #tpu.memory_space<vmem>>, %arg19: memref<16x128xf32, #tpu.memory_space<vmem>>, %arg20: memref<64x128xbf16, #tpu.memory_space<vmem>>, %arg21: memref<64x128xbf16, #tpu.memory_space<vmem>>) attributes {dimension_semantics = [#tpu.dimension_semantics<parallel>, #tpu.dimension_semantics<arbitrary>], iteration_bounds = array<i64: 2, 4>, scalar_prefetch = 0 : i64, scratch_operands = 2 : i64, tpu.core_type = #tpu.core_type<tc>, window_params = [{transform_indices = @transform_0, window_bounds = array<i64: 64, 128>}, {pipeline_mode = #tpu.pipeline_mode<synchronous>, transform_indices = @transform_1, window_bounds = array<i64: 128, 128>}, {pipeline_mode = #tpu.pipeline_mode<synchronous>, transform_indices = @transform_2, window_bounds = array<i64: 1, 128>}, {pipeline_mode = #tpu.pipeline_mode<synchronous>, transform_indices = @transform_3, window_bounds = array<i64: 128, 128>}, {pipeline_mode = #tpu.pipeline_mode<synchronous>, transform_indices = @transform_4, window_bounds = array<i64: 1, 128>}, {pipeline_mode = #tpu.pipeline_mode<synchronous>, transform_indices = @transform_5, window_bounds = array<i64: 128, 128>}, {pipeline_mode = #tpu.pipeline_mode<synchronous>, transform_indices = @transform_6, window_bounds = array<i64: 1, 128>}, {pipeline_mode = #tpu.pipeline_mode<synchronous>, transform_indices = @transform_7, window_bounds = array<i64: 128, 128>}, {pipeline_mode = #tpu.pipeline_mode<synchronous>, transform_indices = @transform_8, window_bounds = array<i64: 1, 128>}, {pipeline_mode = #tpu.pipeline_mode<synchronous>, transform_indices = @transform_9, window_bounds = array<i64: 1, 128>}, {pipeline_mode = #tpu.pipeline_mode<synchronous>, transform_indices = @transform_10, window_bounds = array<i64: 1, 128>}, {pipeline_mode = #tpu.pipeline_mode<synchronous>, transform_indices = @transform_11, window_bounds = array<i64: 128, 512>}, {pipeline_mode = #tpu.pipeline_mode<synchronous>, transform_indices = @transform_12, window_bounds = array<i64: 1, 512>}, {pipeline_mode = #tpu.pipeline_mode<synchronous>, transform_indices = @transform_13, window_bounds = array<i64: 512, 128>}, {pipeline_mode = #tpu.pipeline_mode<synchronous>, transform_indices = @transform_14, window_bounds = array<i64: 1, 128>}, {pipeline_mode = #tpu.pipeline_mode<synchronous>, transform_indices = @transform_15, window_bounds = array<i64: 1, 128>}, {pipeline_mode = #tpu.pipeline_mode<synchronous>, transform_indices = @transform_16, window_bounds = array<i64: 1, 128>}, {transform_indices = @transform_17, window_bounds = array<i64: 16, 128>}]} {
    %c0_i32 = arith.constant 0 : i32
    %0 = arith.cmpi eq, %arg1, %c0_i32 : i32
    %1 = arith.extui %0 : i1 to i32
    %c0_i32_0 = arith.constant 0 : i32
    %2 = arith.cmpi ne, %1, %c0_i32_0 : i32
    scf.if %2 {
      %c0_i32_56 = arith.constant 0 : i32
      %c2_i32_57 = arith.constant 2 : i32
      %114 = arith.addi %c0_i32_56, %c2_i32_57 : i32
      %c1_i32_58 = arith.constant 1 : i32
      scf.for %arg22 = %c0_i32_56 to %114 step %c1_i32_58  : i32 {
        %c32_i32 = arith.constant 32 : i32
        %115 = arith.muli %arg22, %c32_i32 : i32
        %116 = tpu.assume_multiple %115, 32 : i32
        %117 = arith.index_cast %116 : i32 to index
        %c0_60 = arith.constant 0 : index
        %118 = vector.load %arg2[%117, %c0_60] : memref<64x128xf32, #tpu.memory_space<vmem>>, vector<32x128xf32>
        %119 = arith.truncf %118 : vector<32x128xf32> to vector<32x128xbf16>
        %c0_61 = arith.constant 0 : index
        %c0_62 = arith.constant 0 : index
        %120 = vector.load %arg5[%c0_61, %c0_62] : memref<128x128xbf16, #tpu.memory_space<vmem>>, vector<128x128xbf16>
        %cst_63 = arith.constant dense<0.000000e+00> : vector<32x128xf32>
        %121 = tpu.matmul %119, %120, %cst_63 {dimension_numbers = #tpu.dot_dimension_numbers<[1], [0], [0], [1], [0, 0, 1, 1], [], []>} : vector<32x128xbf16>, vector<128x128xbf16>, vector<32x128xf32> -> vector<32x128xf32>
        %c0_64 = arith.constant 0 : index
        %c0_65 = arith.constant 0 : index
        %122 = vector.load %arg6[%c0_64, %c0_65] : memref<1x128xf32, #tpu.memory_space<vmem>>, vector<1x128xf32>
        %123 = vector.broadcast %122 : vector<1x128xf32> to vector<32x128xf32>
        %124 = arith.addf %121, %123 : vector<32x128xf32>
        %125 = arith.truncf %124 : vector<32x128xf32> to vector<32x128xbf16>
        %126 = arith.index_cast %116 : i32 to index
        %c0_66 = arith.constant 0 : index
        %127 = vector.load %arg20[%126, %c0_66] : memref<64x128xbf16, #tpu.memory_space<vmem>>, vector<32x128xbf16>
        tpu.vector_store %arg20[%126, %c0_66], %125 {strides = array<i32>} : memref<64x128xbf16, #tpu.memory_space<vmem>>, vector<32x128xbf16>,
        %c0_67 = arith.constant 0 : index
        %c0_68 = arith.constant 0 : index
        %128 = vector.load %arg7[%c0_67, %c0_68] : memref<128x128xbf16, #tpu.memory_space<vmem>>, vector<128x128xbf16>
        %cst_69 = arith.constant dense<0.000000e+00> : vector<32x128xf32>
        %129 = tpu.matmul %119, %128, %cst_69 {dimension_numbers = #tpu.dot_dimension_numbers<[1], [0], [0], [1], [0, 0, 1, 1], [], []>} : vector<32x128xbf16>, vector<128x128xbf16>, vector<32x128xf32> -> vector<32x128xf32>
        %c0_70 = arith.constant 0 : index
        %c0_71 = arith.constant 0 : index
        %130 = vector.load %arg8[%c0_70, %c0_71] : memref<1x128xf32, #tpu.memory_space<vmem>>, vector<1x128xf32>
        %131 = vector.broadcast %130 : vector<1x128xf32> to vector<32x128xf32>
        %132 = arith.addf %129, %131 : vector<32x128xf32>
        %133 = arith.truncf %132 : vector<32x128xf32> to vector<32x128xbf16>
        %134 = arith.index_cast %116 : i32 to index
        %c0_72 = arith.constant 0 : index
        %135 = vector.load %arg21[%134, %c0_72] : memref<64x128xbf16, #tpu.memory_space<vmem>>, vector<32x128xbf16>
        tpu.vector_store %arg21[%134, %c0_72], %133 {strides = array<i32>} : memref<64x128xbf16, #tpu.memory_space<vmem>>, vector<32x128xbf16>,
      }
      %c2_i32_59 = arith.constant 2 : i32
    } else {
    }
    %c16_i32 = arith.constant 16 : i32
    %3 = arith.muli %arg1, %c16_i32 : i32
    %4 = tpu.assume_multiple %3, 16 : i32
    %5 = arith.index_cast %4 : i32 to index
    %c0 = arith.constant 0 : index
    %6 = vector.load %arg2[%5, %c0] : memref<64x128xf32, #tpu.memory_space<vmem>>, vector<16x128xf32>
    %7 = arith.truncf %6 : vector<16x128xf32> to vector<16x128xbf16>
    %c0_1 = arith.constant 0 : index
    %c0_2 = arith.constant 0 : index
    %8 = vector.load %arg3[%c0_1, %c0_2] : memref<128x128xbf16, #tpu.memory_space<vmem>>, vector<128x128xbf16>
    %cst = arith.constant dense<0.000000e+00> : vector<16x128xf32>
    %9 = tpu.matmul %7, %8, %cst {dimension_numbers = #tpu.dot_dimension_numbers<[1], [0], [0], [1], [0, 0, 1, 1], [], []>} : vector<16x128xbf16>, vector<128x128xbf16>, vector<16x128xf32> -> vector<16x128xf32>
    %c0_3 = arith.constant 0 : index
    %c0_4 = arith.constant 0 : index
    %10 = vector.load %arg4[%c0_3, %c0_4] : memref<1x128xf32, #tpu.memory_space<vmem>>, vector<1x128xf32>
    %11 = vector.broadcast %10 : vector<1x128xf32> to vector<16x128xf32>
    %12 = arith.addf %9, %11 : vector<16x128xf32>
    %cst_5 = arith.constant 0.176776692 : f32
    %13 = vector.broadcast %cst_5 : f32 to vector<16x128xf32>
    %14 = arith.mulf %12, %13 : vector<16x128xf32>
    %15 = arith.truncf %14 : vector<16x128xf32> to vector<16x128xbf16>
    %cst_6 = arith.constant 0xFF800000 : f32
    %16 = vector.broadcast %cst_6 : f32 to vector<16x1xf32>
    %cst_7 = arith.constant 0.000000e+00 : f32
    %17 = vector.broadcast %cst_7 : f32 to vector<16x1xf32>
    %cst_8 = arith.constant 0.000000e+00 : f32
    %18 = vector.broadcast %cst_8 : f32 to vector<16x32xf32>
    %cst_9 = arith.constant 0xFF800000 : f32
    %19 = vector.broadcast %cst_9 : f32 to vector<16x1xf32>
    %cst_10 = arith.constant 0.000000e+00 : f32
    %20 = vector.broadcast %cst_10 : f32 to vector<16x1xf32>
    %cst_11 = arith.constant 0.000000e+00 : f32
    %21 = vector.broadcast %cst_11 : f32 to vector<16x32xf32>
    %cst_12 = arith.constant 0xFF800000 : f32
    %22 = vector.broadcast %cst_12 : f32 to vector<16x1xf32>
    %cst_13 = arith.constant 0.000000e+00 : f32
    %23 = vector.broadcast %cst_13 : f32 to vector<16x1xf32>
    %cst_14 = arith.constant 0.000000e+00 : f32
    %24 = vector.broadcast %cst_14 : f32 to vector<16x32xf32>
    %cst_15 = arith.constant 0xFF800000 : f32
    %25 = vector.broadcast %cst_15 : f32 to vector<16x1xf32>
    %cst_16 = arith.constant 0.000000e+00 : f32
    %26 = vector.broadcast %cst_16 : f32 to vector<16x1xf32>
    %cst_17 = arith.constant 0.000000e+00 : f32
    %27 = vector.broadcast %cst_17 : f32 to vector<16x32xf32>
    %c0_i32_18 = arith.constant 0 : i32
    %c2_i32 = arith.constant 2 : i32
    %28 = arith.addi %c0_i32_18, %c2_i32 : i32
    %c1_i32 = arith.constant 1 : i32
    %29:12 = scf.for %arg22 = %c0_i32_18 to %28 step %c1_i32 iter_args(%arg23 = %16, %arg24 = %17, %arg25 = %18, %arg26 = %19, %arg27 = %20, %arg28 = %21, %arg29 = %22, %arg30 = %23, %arg31 = %24, %arg32 = %25, %arg33 = %26, %arg34 = %27) -> (vector<16x1xf32>, vector<16x1xf32>, vector<16x32xf32>, vector<16x1xf32>, vector<16x1xf32>, vector<16x32xf32>, vector<16x1xf32>, vector<16x1xf32>, vector<16x32xf32>, vector<16x1xf32>, vector<16x1xf32>, vector<16x32xf32>)  : i32 {
      %c32_i32 = arith.constant 32 : i32
      %114 = arith.muli %arg22, %c32_i32 : i32
      %115 = tpu.assume_multiple %114, 32 : i32
      %116 = arith.index_cast %115 : i32 to index
      %c0_56 = arith.constant 0 : index
      %117 = vector.load %arg20[%116, %c0_56] : memref<64x128xbf16, #tpu.memory_space<vmem>>, vector<32x128xbf16>
      %118 = arith.index_cast %115 : i32 to index
      %c0_57 = arith.constant 0 : index
      %119 = vector.load %arg21[%118, %c0_57] : memref<64x128xbf16, #tpu.memory_space<vmem>>, vector<32x128xbf16>
      %120 = vector.extract_strided_slice %15 {offsets = [0, 0], sizes = [16, 32], strides = [1, 1]} : vector<16x128xbf16> to vector<16x32xbf16>
      %121 = vector.extract_strided_slice %117 {offsets = [0, 0], sizes = [32, 32], strides = [1, 1]} : vector<32x128xbf16> to vector<32x32xbf16>
      %122 = vector.extract_strided_slice %119 {offsets = [0, 0], sizes = [32, 32], strides = [1, 1]} : vector<32x128xbf16> to vector<32x32xbf16>
      %cst_58 = arith.constant dense<0.000000e+00> : vector<16x32xf32>
      %123 = tpu.matmul %120, %121, %cst_58 {dimension_numbers = #tpu.dot_dimension_numbers<[1], [1], [0], [0], [0, 0, 1, 0], [], []>} : vector<16x32xbf16>, vector<32x32xbf16>, vector<16x32xf32> -> vector<16x32xf32>
      %cst_59 = arith.constant dense<0xFF800000> : vector<16xf32>
      %124 = vector.multi_reduction <maximumf>, %123, %cst_59 [1] : vector<16x32xf32> to vector<16xf32>
      %125 = vector.shape_cast %124 : vector<16xf32> to vector<16x1xf32>
      %126 = arith.maximumf %arg23, %125 : vector<16x1xf32>
      %127 = arith.subf %arg23, %126 : vector<16x1xf32>
      %128 = math.exp %127 : vector<16x1xf32>
      %129 = vector.broadcast %126 : vector<16x1xf32> to vector<16x32xf32>
      %130 = arith.subf %123, %129 : vector<16x32xf32>
      %131 = math.exp %130 : vector<16x32xf32>
      %132 = arith.mulf %128, %arg24 : vector<16x1xf32>
      %cst_60 = arith.constant dense<0.000000e+00> : vector<16xf32>
      %133 = vector.multi_reduction <add>, %131, %cst_60 [1] : vector<16x32xf32> to vector<16xf32>
      %134 = vector.shape_cast %133 : vector<16xf32> to vector<16x1xf32>
      %135 = arith.addf %132, %134 : vector<16x1xf32>
      %136 = vector.broadcast %128 : vector<16x1xf32> to vector<16x32xf32>
      %137 = arith.mulf %136, %arg25 : vector<16x32xf32>
      %138 = arith.truncf %131 : vector<16x32xf32> to vector<16x32xbf16>
      %cst_61 = arith.constant dense<0.000000e+00> : vector<16x32xf32>
      %139 = tpu.matmul %138, %122, %cst_61 {dimension_numbers = #tpu.dot_dimension_numbers<[1], [0], [0], [1], [0, 0, 1, 1], [], []>} : vector<16x32xbf16>, vector<32x32xbf16>, vector<16x32xf32> -> vector<16x32xf32>
      %140 = arith.addf %137, %139 : vector<16x32xf32>
      %141 = vector.extract_strided_slice %15 {offsets = [0, 32], sizes = [16, 32], strides = [1, 1]} : vector<16x128xbf16> to vector<16x32xbf16>
      %142 = vector.extract_strided_slice %117 {offsets = [0, 32], sizes = [32, 32], strides = [1, 1]} : vector<32x128xbf16> to vector<32x32xbf16>
      %143 = vector.extract_strided_slice %119 {offsets = [0, 32], sizes = [32, 32], strides = [1, 1]} : vector<32x128xbf16> to vector<32x32xbf16>
      %cst_62 = arith.constant dense<0.000000e+00> : vector<16x32xf32>
      %144 = tpu.matmul %141, %142, %cst_62 {dimension_numbers = #tpu.dot_dimension_numbers<[1], [1], [0], [0], [0, 0, 1, 0], [], []>} : vector<16x32xbf16>, vector<32x32xbf16>, vector<16x32xf32> -> vector<16x32xf32>
      %cst_63 = arith.constant dense<0xFF800000> : vector<16xf32>
      %145 = vector.multi_reduction <maximumf>, %144, %cst_63 [1] : vector<16x32xf32> to vector<16xf32>
      %146 = vector.shape_cast %145 : vector<16xf32> to vector<16x1xf32>
      %147 = arith.maximumf %arg26, %146 : vector<16x1xf32>
      %148 = arith.subf %arg26, %147 : vector<16x1xf32>
      %149 = math.exp %148 : vector<16x1xf32>
      %150 = vector.broadcast %147 : vector<16x1xf32> to vector<16x32xf32>
      %151 = arith.subf %144, %150 : vector<16x32xf32>
      %152 = math.exp %151 : vector<16x32xf32>
      %153 = arith.mulf %149, %arg27 : vector<16x1xf32>
      %cst_64 = arith.constant dense<0.000000e+00> : vector<16xf32>
      %154 = vector.multi_reduction <add>, %152, %cst_64 [1] : vector<16x32xf32> to vector<16xf32>
      %155 = vector.shape_cast %154 : vector<16xf32> to vector<16x1xf32>
      %156 = arith.addf %153, %155 : vector<16x1xf32>
      %157 = vector.broadcast %149 : vector<16x1xf32> to vector<16x32xf32>
      %158 = arith.mulf %157, %arg28 : vector<16x32xf32>
      %159 = arith.truncf %152 : vector<16x32xf32> to vector<16x32xbf16>
      %cst_65 = arith.constant dense<0.000000e+00> : vector<16x32xf32>
      %160 = tpu.matmul %159, %143, %cst_65 {dimension_numbers = #tpu.dot_dimension_numbers<[1], [0], [0], [1], [0, 0, 1, 1], [], []>} : vector<16x32xbf16>, vector<32x32xbf16>, vector<16x32xf32> -> vector<16x32xf32>
      %161 = arith.addf %158, %160 : vector<16x32xf32>
      %162 = vector.extract_strided_slice %15 {offsets = [0, 64], sizes = [16, 32], strides = [1, 1]} : vector<16x128xbf16> to vector<16x32xbf16>
      %163 = vector.extract_strided_slice %117 {offsets = [0, 64], sizes = [32, 32], strides = [1, 1]} : vector<32x128xbf16> to vector<32x32xbf16>
      %164 = vector.extract_strided_slice %119 {offsets = [0, 64], sizes = [32, 32], strides = [1, 1]} : vector<32x128xbf16> to vector<32x32xbf16>
      %cst_66 = arith.constant dense<0.000000e+00> : vector<16x32xf32>
      %165 = tpu.matmul %162, %163, %cst_66 {dimension_numbers = #tpu.dot_dimension_numbers<[1], [1], [0], [0], [0, 0, 1, 0], [], []>} : vector<16x32xbf16>, vector<32x32xbf16>, vector<16x32xf32> -> vector<16x32xf32>
      %cst_67 = arith.constant dense<0xFF800000> : vector<16xf32>
      %166 = vector.multi_reduction <maximumf>, %165, %cst_67 [1] : vector<16x32xf32> to vector<16xf32>
      %167 = vector.shape_cast %166 : vector<16xf32> to vector<16x1xf32>
      %168 = arith.maximumf %arg29, %167 : vector<16x1xf32>
      %169 = arith.subf %arg29, %168 : vector<16x1xf32>
      %170 = math.exp %169 : vector<16x1xf32>
      %171 = vector.broadcast %168 : vector<16x1xf32> to vector<16x32xf32>
      %172 = arith.subf %165, %171 : vector<16x32xf32>
      %173 = math.exp %172 : vector<16x32xf32>
      %174 = arith.mulf %170, %arg30 : vector<16x1xf32>
      %cst_68 = arith.constant dense<0.000000e+00> : vector<16xf32>
      %175 = vector.multi_reduction <add>, %173, %cst_68 [1] : vector<16x32xf32> to vector<16xf32>
      %176 = vector.shape_cast %175 : vector<16xf32> to vector<16x1xf32>
      %177 = arith.addf %174, %176 : vector<16x1xf32>
      %178 = vector.broadcast %170 : vector<16x1xf32> to vector<16x32xf32>
      %179 = arith.mulf %178, %arg31 : vector<16x32xf32>
      %180 = arith.truncf %173 : vector<16x32xf32> to vector<16x32xbf16>
      %cst_69 = arith.constant dense<0.000000e+00> : vector<16x32xf32>
      %181 = tpu.matmul %180, %164, %cst_69 {dimension_numbers = #tpu.dot_dimension_numbers<[1], [0], [0], [1], [0, 0, 1, 1], [], []>} : vector<16x32xbf16>, vector<32x32xbf16>, vector<16x32xf32> -> vector<16x32xf32>
      %182 = arith.addf %179, %181 : vector<16x32xf32>
      %183 = vector.extract_strided_slice %15 {offsets = [0, 96], sizes = [16, 32], strides = [1, 1]} : vector<16x128xbf16> to vector<16x32xbf16>
      %184 = vector.extract_strided_slice %117 {offsets = [0, 96], sizes = [32, 32], strides = [1, 1]} : vector<32x128xbf16> to vector<32x32xbf16>
      %185 = vector.extract_strided_slice %119 {offsets = [0, 96], sizes = [32, 32], strides = [1, 1]} : vector<32x128xbf16> to vector<32x32xbf16>
      %cst_70 = arith.constant dense<0.000000e+00> : vector<16x32xf32>
      %186 = tpu.matmul %183, %184, %cst_70 {dimension_numbers = #tpu.dot_dimension_numbers<[1], [1], [0], [0], [0, 0, 1, 0], [], []>} : vector<16x32xbf16>, vector<32x32xbf16>, vector<16x32xf32> -> vector<16x32xf32>
      %cst_71 = arith.constant dense<0xFF800000> : vector<16xf32>
      %187 = vector.multi_reduction <maximumf>, %186, %cst_71 [1] : vector<16x32xf32> to vector<16xf32>
      %188 = vector.shape_cast %187 : vector<16xf32> to vector<16x1xf32>
      %189 = arith.maximumf %arg32, %188 : vector<16x1xf32>
      %190 = arith.subf %arg32, %189 : vector<16x1xf32>
      %191 = math.exp %190 : vector<16x1xf32>
      %192 = vector.broadcast %189 : vector<16x1xf32> to vector<16x32xf32>
      %193 = arith.subf %186, %192 : vector<16x32xf32>
      %194 = math.exp %193 : vector<16x32xf32>
      %195 = arith.mulf %191, %arg33 : vector<16x1xf32>
      %cst_72 = arith.constant dense<0.000000e+00> : vector<16xf32>
      %196 = vector.multi_reduction <add>, %194, %cst_72 [1] : vector<16x32xf32> to vector<16xf32>
      %197 = vector.shape_cast %196 : vector<16xf32> to vector<16x1xf32>
      %198 = arith.addf %195, %197 : vector<16x1xf32>
      %199 = vector.broadcast %191 : vector<16x1xf32> to vector<16x32xf32>
      %200 = arith.mulf %199, %arg34 : vector<16x32xf32>
      %201 = arith.truncf %194 : vector<16x32xf32> to vector<16x32xbf16>
      %cst_73 = arith.constant dense<0.000000e+00> : vector<16x32xf32>
      %202 = tpu.matmul %201, %185, %cst_73 {dimension_numbers = #tpu.dot_dimension_numbers<[1], [0], [0], [1], [0, 0, 1, 1], [], []>} : vector<16x32xbf16>, vector<32x32xbf16>, vector<16x32xf32> -> vector<16x32xf32>
      %203 = arith.addf %200, %202 : vector<16x32xf32>
      scf.yield %126, %135, %140, %147, %156, %161, %168, %177, %182, %189, %198, %203 : vector<16x1xf32>, vector<16x1xf32>, vector<16x32xf32>, vector<16x1xf32>, vector<16x1xf32>, vector<16x32xf32>, vector<16x1xf32>, vector<16x1xf32>, vector<16x32xf32>, vector<16x1xf32>, vector<16x1xf32>, vector<16x32xf32>
    }
    %c2_i32_19 = arith.constant 2 : i32
    %30 = tpu.reciprocal %29#1 {approx = true} : vector<16x1xf32> -> vector<16x1xf32>
    %31 = vector.broadcast %30 : vector<16x1xf32> to vector<16x32xf32>
    %32 = arith.mulf %29#2, %31 : vector<16x32xf32>
    %33 = tpu.reciprocal %29#4 {approx = true} : vector<16x1xf32> -> vector<16x1xf32>
    %34 = vector.broadcast %33 : vector<16x1xf32> to vector<16x32xf32>
    %35 = arith.mulf %29#5, %34 : vector<16x32xf32>
    %36 = tpu.reciprocal %29#7 {approx = true} : vector<16x1xf32> -> vector<16x1xf32>
    %37 = vector.broadcast %36 : vector<16x1xf32> to vector<16x32xf32>
    %38 = arith.mulf %29#8, %37 : vector<16x32xf32>
    %39 = tpu.reciprocal %29#10 {approx = true} : vector<16x1xf32> -> vector<16x1xf32>
    %40 = vector.broadcast %39 : vector<16x1xf32> to vector<16x32xf32>
    %41 = arith.mulf %29#11, %40 : vector<16x32xf32>
    %42 = tpu.concatenate %32, %35, %38, %41 in 1 : vector<16x32xf32>, vector<16x32xf32>, vector<16x32xf32>, vector<16x32xf32> -> vector<16x128xf32>
    %43 = arith.truncf %42 : vector<16x128xf32> to vector<16x128xbf16>
    %c0_20 = arith.constant 0 : index
    %c0_21 = arith.constant 0 : index
    %44 = vector.load %arg9[%c0_20, %c0_21] : memref<128x128xbf16, #tpu.memory_space<vmem>>, vector<128x128xbf16>
    %cst_22 = arith.constant dense<0.000000e+00> : vector<16x128xf32>
    %45 = tpu.matmul %43, %44, %cst_22 {dimension_numbers = #tpu.dot_dimension_numbers<[1], [0], [0], [1], [0, 0, 1, 1], [], []>} : vector<16x128xbf16>, vector<128x128xbf16>, vector<16x128xf32> -> vector<16x128xf32>
    %c0_23 = arith.constant 0 : index
    %c0_24 = arith.constant 0 : index
    %46 = vector.load %arg10[%c0_23, %c0_24] : memref<1x128xf32, #tpu.memory_space<vmem>>, vector<1x128xf32>
    %47 = vector.broadcast %46 : vector<1x128xf32> to vector<16x128xf32>
    %48 = arith.addf %45, %47 : vector<16x128xf32>
    %49 = arith.addf %6, %48 : vector<16x128xf32>
    %cst_25 = arith.constant dense<0.000000e+00> : vector<16xf32>
    %50 = vector.multi_reduction <add>, %49, %cst_25 [1] : vector<16x128xf32> to vector<16xf32>
    %51 = vector.shape_cast %50 : vector<16xf32> to vector<16x1xf32>
    %cst_26 = arith.constant 1.280000e+02 : f32
    %52 = vector.broadcast %cst_26 : f32 to vector<16x1xf32>
    %53 = arith.divf %51, %52 : vector<16x1xf32>
    %54 = vector.broadcast %53 : vector<16x1xf32> to vector<16x128xf32>
    %55 = arith.subf %49, %54 : vector<16x128xf32>
    %56 = arith.mulf %55, %55 : vector<16x128xf32>
    %cst_27 = arith.constant dense<0.000000e+00> : vector<16xf32>
    %57 = vector.multi_reduction <add>, %56, %cst_27 [1] : vector<16x128xf32> to vector<16xf32>
    %58 = vector.shape_cast %57 : vector<16xf32> to vector<16x1xf32>
    %cst_28 = arith.constant 1.280000e+02 : f32
    %59 = vector.broadcast %cst_28 : f32 to vector<16x1xf32>
    %60 = arith.divf %58, %59 : vector<16x1xf32>
    %61 = vector.broadcast %53 : vector<16x1xf32> to vector<16x128xf32>
    %62 = arith.subf %49, %61 : vector<16x128xf32>
    %cst_29 = arith.constant 9.99999974E-6 : f32
    %63 = vector.broadcast %cst_29 : f32 to vector<16x1xf32>
    %64 = arith.addf %60, %63 : vector<16x1xf32>
    %65 = math.rsqrt %64 : vector<16x1xf32>
    %66 = vector.broadcast %65 : vector<16x1xf32> to vector<16x128xf32>
    %67 = arith.mulf %62, %66 : vector<16x128xf32>
    %c0_30 = arith.constant 0 : index
    %c0_31 = arith.constant 0 : index
    %68 = vector.load %arg11[%c0_30, %c0_31] : memref<1x128xf32, #tpu.memory_space<vmem>>, vector<1x128xf32>
    %69 = vector.broadcast %68 : vector<1x128xf32> to vector<16x128xf32>
    %70 = arith.mulf %67, %69 : vector<16x128xf32>
    %c0_32 = arith.constant 0 : index
    %c0_33 = arith.constant 0 : index
    %71 = vector.load %arg12[%c0_32, %c0_33] : memref<1x128xf32, #tpu.memory_space<vmem>>, vector<1x128xf32>
    %72 = vector.broadcast %71 : vector<1x128xf32> to vector<16x128xf32>
    %73 = arith.addf %70, %72 : vector<16x128xf32>
    %74 = arith.truncf %73 : vector<16x128xf32> to vector<16x128xbf16>
    %c0_34 = arith.constant 0 : index
    %c0_35 = arith.constant 0 : index
    %75 = vector.load %arg13[%c0_34, %c0_35] : memref<128x512xbf16, #tpu.memory_space<vmem>>, vector<128x512xbf16>
    %cst_36 = arith.constant dense<0.000000e+00> : vector<16x512xf32>
    %76 = tpu.matmul %74, %75, %cst_36 {dimension_numbers = #tpu.dot_dimension_numbers<[1], [0], [0], [1], [0, 0, 1, 1], [], []>} : vector<16x128xbf16>, vector<128x512xbf16>, vector<16x512xf32> -> vector<16x512xf32>
    %c0_37 = arith.constant 0 : index
    %c0_38 = arith.constant 0 : index
    %77 = vector.load %arg14[%c0_37, %c0_38] : memref<1x512xf32, #tpu.memory_space<vmem>>, vector<1x512xf32>
    %78 = vector.broadcast %77 : vector<1x512xf32> to vector<16x512xf32>
    %79 = arith.addf %76, %78 : vector<16x512xf32>
    %cst_39 = arith.constant 0.000000e+00 : f32
    %80 = vector.broadcast %cst_39 : f32 to vector<16x512xf32>
    %81 = arith.maximumf %79, %80 : vector<16x512xf32>
    %82 = arith.truncf %81 : vector<16x512xf32> to vector<16x512xbf16>
    %c0_40 = arith.constant 0 : index
    %c0_41 = arith.constant 0 : index
    %83 = vector.load %arg15[%c0_40, %c0_41] : memref<512x128xbf16, #tpu.memory_space<vmem>>, vector<512x128xbf16>
    %cst_42 = arith.constant dense<0.000000e+00> : vector<16x128xf32>
    %84 = tpu.matmul %82, %83, %cst_42 {dimension_numbers = #tpu.dot_dimension_numbers<[1], [0], [0], [1], [0, 0, 1, 1], [], []>} : vector<16x512xbf16>, vector<512x128xbf16>, vector<16x128xf32> -> vector<16x128xf32>
    %c0_43 = arith.constant 0 : index
    %c0_44 = arith.constant 0 : index
    %85 = vector.load %arg16[%c0_43, %c0_44] : memref<1x128xf32, #tpu.memory_space<vmem>>, vector<1x128xf32>
    %86 = vector.broadcast %85 : vector<1x128xf32> to vector<16x128xf32>
    %87 = arith.addf %84, %86 : vector<16x128xf32>
    %88 = arith.addf %73, %87 : vector<16x128xf32>
    %cst_45 = arith.constant dense<0.000000e+00> : vector<16xf32>
    %89 = vector.multi_reduction <add>, %88, %cst_45 [1] : vector<16x128xf32> to vector<16xf32>
    %90 = vector.shape_cast %89 : vector<16xf32> to vector<16x1xf32>
    %cst_46 = arith.constant 1.280000e+02 : f32
    %91 = vector.broadcast %cst_46 : f32 to vector<16x1xf32>
    %92 = arith.divf %90, %91 : vector<16x1xf32>
    %93 = vector.broadcast %92 : vector<16x1xf32> to vector<16x128xf32>
    %94 = arith.subf %88, %93 : vector<16x128xf32>
    %95 = arith.mulf %94, %94 : vector<16x128xf32>
    %cst_47 = arith.constant dense<0.000000e+00> : vector<16xf32>
    %96 = vector.multi_reduction <add>, %95, %cst_47 [1] : vector<16x128xf32> to vector<16xf32>
    %97 = vector.shape_cast %96 : vector<16xf32> to vector<16x1xf32>
    %cst_48 = arith.constant 1.280000e+02 : f32
    %98 = vector.broadcast %cst_48 : f32 to vector<16x1xf32>
    %99 = arith.divf %97, %98 : vector<16x1xf32>
    %100 = vector.broadcast %92 : vector<16x1xf32> to vector<16x128xf32>
    %101 = arith.subf %88, %100 : vector<16x128xf32>
    %cst_49 = arith.constant 9.99999974E-6 : f32
    %102 = vector.broadcast %cst_49 : f32 to vector<16x1xf32>
    %103 = arith.addf %99, %102 : vector<16x1xf32>
    %104 = math.rsqrt %103 : vector<16x1xf32>
    %105 = vector.broadcast %104 : vector<16x1xf32> to vector<16x128xf32>
    %106 = arith.mulf %101, %105 : vector<16x128xf32>
    %c0_50 = arith.constant 0 : index
    %c0_51 = arith.constant 0 : index
    %107 = vector.load %arg17[%c0_50, %c0_51] : memref<1x128xf32, #tpu.memory_space<vmem>>, vector<1x128xf32>
    %108 = vector.broadcast %107 : vector<1x128xf32> to vector<16x128xf32>
    %109 = arith.mulf %106, %108 : vector<16x128xf32>
    %c0_52 = arith.constant 0 : index
    %c0_53 = arith.constant 0 : index
    %110 = vector.load %arg18[%c0_52, %c0_53] : memref<1x128xf32, #tpu.memory_space<vmem>>, vector<1x128xf32>
    %111 = vector.broadcast %110 : vector<1x128xf32> to vector<16x128xf32>
    %112 = arith.addf %109, %111 : vector<16x128xf32>
    %c0_54 = arith.constant 0 : index
    %c0_55 = arith.constant 0 : index
    %113 = vector.load %arg19[%c0_54, %c0_55] : memref<16x128xf32, #tpu.memory_space<vmem>>, vector<16x128xf32>
    tpu.vector_store %arg19[%c0_54, %c0_55], %112 {strides = array<i32>} : memref<16x128xf32, #tpu.memory_space<vmem>>, vector<16x128xf32>,
    return
  }
  func.func @transform_0(%arg0: i32, %arg1: i32) -> (i32, i32) {
    %c0_i32 = arith.constant 0 : i32
    %c0_i32_0 = arith.constant 0 : i32
    return %c0_i32, %arg0 : i32, i32
  }
  func.func @transform_1(%arg0: i32, %arg1: i32) -> (i32, i32) {
    %c0_i32 = arith.constant 0 : i32
    %c0_i32_0 = arith.constant 0 : i32
    %c0_i32_1 = arith.constant 0 : i32
    return %c0_i32, %c0_i32_0 : i32, i32
  }
  func.func @transform_2(%arg0: i32, %arg1: i32) -> (i32, i32) {
    %c0_i32 = arith.constant 0 : i32
    %c0_i32_0 = arith.constant 0 : i32
    %c0_i32_1 = arith.constant 0 : i32
    return %c0_i32, %c0_i32_0 : i32, i32
  }
  func.func @transform_3(%arg0: i32, %arg1: i32) -> (i32, i32) {
    %c0_i32 = arith.constant 0 : i32
    %c0_i32_0 = arith.constant 0 : i32
    %c0_i32_1 = arith.constant 0 : i32
    return %c0_i32, %c0_i32_0 : i32, i32
  }
  func.func @transform_4(%arg0: i32, %arg1: i32) -> (i32, i32) {
    %c0_i32 = arith.constant 0 : i32
    %c0_i32_0 = arith.constant 0 : i32
    %c0_i32_1 = arith.constant 0 : i32
    return %c0_i32, %c0_i32_0 : i32, i32
  }
  func.func @transform_5(%arg0: i32, %arg1: i32) -> (i32, i32) {
    %c0_i32 = arith.constant 0 : i32
    %c0_i32_0 = arith.constant 0 : i32
    %c0_i32_1 = arith.constant 0 : i32
    return %c0_i32, %c0_i32_0 : i32, i32
  }
  func.func @transform_6(%arg0: i32, %arg1: i32) -> (i32, i32) {
    %c0_i32 = arith.constant 0 : i32
    %c0_i32_0 = arith.constant 0 : i32
    %c0_i32_1 = arith.constant 0 : i32
    return %c0_i32, %c0_i32_0 : i32, i32
  }
  func.func @transform_7(%arg0: i32, %arg1: i32) -> (i32, i32) {
    %c0_i32 = arith.constant 0 : i32
    %c0_i32_0 = arith.constant 0 : i32
    %c0_i32_1 = arith.constant 0 : i32
    return %c0_i32, %c0_i32_0 : i32, i32
  }
  func.func @transform_8(%arg0: i32, %arg1: i32) -> (i32, i32) {
    %c0_i32 = arith.constant 0 : i32
    %c0_i32_0 = arith.constant 0 : i32
    %c0_i32_1 = arith.constant 0 : i32
    return %c0_i32, %c0_i32_0 : i32, i32
  }
  func.func @transform_9(%arg0: i32, %arg1: i32) -> (i32, i32) {
    %c0_i32 = arith.constant 0 : i32
    %c0_i32_0 = arith.constant 0 : i32
    %c0_i32_1 = arith.constant 0 : i32
    return %c0_i32, %c0_i32_0 : i32, i32
  }
  func.func @transform_10(%arg0: i32, %arg1: i32) -> (i32, i32) {
    %c0_i32 = arith.constant 0 : i32
    %c0_i32_0 = arith.constant 0 : i32
    %c0_i32_1 = arith.constant 0 : i32
    return %c0_i32, %c0_i32_0 : i32, i32
  }
  func.func @transform_11(%arg0: i32, %arg1: i32) -> (i32, i32) {
    %c0_i32 = arith.constant 0 : i32
    %c0_i32_0 = arith.constant 0 : i32
    %c0_i32_1 = arith.constant 0 : i32
    return %c0_i32, %c0_i32_0 : i32, i32
  }
  func.func @transform_12(%arg0: i32, %arg1: i32) -> (i32, i32) {
    %c0_i32 = arith.constant 0 : i32
    %c0_i32_0 = arith.constant 0 : i32
    %c0_i32_1 = arith.constant 0 : i32
    return %c0_i32, %c0_i32_0 : i32, i32
  }
  func.func @transform_13(%arg0: i32, %arg1: i32) -> (i32, i32) {
    %c0_i32 = arith.constant 0 : i32
    %c0_i32_0 = arith.constant 0 : i32
    %c0_i32_1 = arith.constant 0 : i32
    return %c0_i32, %c0_i32_0 : i32, i32
  }
  func.func @transform_14(%arg0: i32, %arg1: i32) -> (i32, i32) {
    %c0_i32 = arith.constant 0 : i32
    %c0_i32_0 = arith.constant 0 : i32
    %c0_i32_1 = arith.constant 0 : i32
    return %c0_i32, %c0_i32_0 : i32, i32
  }
  func.func @transform_15(%arg0: i32, %arg1: i32) -> (i32, i32) {
    %c0_i32 = arith.constant 0 : i32
    %c0_i32_0 = arith.constant 0 : i32
    %c0_i32_1 = arith.constant 0 : i32
    return %c0_i32, %c0_i32_0 : i32, i32
  }
  func.func @transform_16(%arg0: i32, %arg1: i32) -> (i32, i32) {
    %c0_i32 = arith.constant 0 : i32
    %c0_i32_0 = arith.constant 0 : i32
    %c0_i32_1 = arith.constant 0 : i32
    return %c0_i32, %c0_i32_0 : i32, i32
  }
  func.func @transform_17(%arg0: i32, %arg1: i32) -> (i32, i32) {
    %c0_i32 = arith.constant 0 : i32
    return %arg1, %arg0 : i32, i32
  }
}

</mosaic_0001>

<llo_original>
// kernel: tpu_custom_call.1
$region0: #{tpu_custom_call.1}
  #allocation0 [shape = 'u32[]', space=smem, size = 0x4, offset = 0x4, fixed_abs, tag = 'smem constant byte address 0x4 - core index']
  #allocation1 [shape = 'u32[144,128]{1,0:T(1,128)}', space=vmem, size = 0x12000, scoped, tag = 'internal scratch']
  #allocation2 [shape = 'bf16[64,128]{1,0:T(16,128)(2,1)}', space=vmem, size = 0x4000, scoped, tag = 'scratch operand']
  #allocation3 [shape = 'bf16[64,128]{1,0:T(16,128)(2,1)}', space=vmem, size = 0x4000, scoped, tag = 'scratch operand']
  %s0 = inlined_call_operand.hbm [shape: f32[64,256], index: 0, kind: input, shape index: {}]
  %s1 = inlined_call_operand.hbm [shape: bf16[128,128], index: 1, kind: input, shape index: {}]
  %s2 = inlined_call_operand.hbm [shape: f32[1,128], index: 2, kind: input, shape index: {}]
  %s3 = inlined_call_operand.hbm [shape: bf16[128,128], index: 3, kind: input, shape index: {}]
  %s4 = inlined_call_operand.hbm [shape: f32[1,128], index: 4, kind: input, shape index: {}]
  %s5 = inlined_call_operand.hbm [shape: bf16[128,128], index: 5, kind: input, shape index: {}]
  %s6 = inlined_call_operand.hbm [shape: f32[1,128], index: 6, kind: input, shape index: {}]
  %s7 = inlined_call_operand.hbm [shape: bf16[128,128], index: 7, kind: input, shape index: {}]
  %s8 = inlined_call_operand.hbm [shape: f32[1,128], index: 8, kind: input, shape index: {}]
  %s9 = inlined_call_operand.hbm [shape: f32[1,128], index: 9, kind: input, shape index: {}]
  %s10 = inlined_call_operand.hbm [shape: f32[1,128], index: 10, kind: input, shape index: {}]
  %s11 = inlined_call_operand.hbm [shape: bf16[128,512], index: 11, kind: input, shape index: {}]
  %s12 = inlined_call_operand.hbm [shape: f32[1,512], index: 12, kind: input, shape index: {}]
  %s13 = inlined_call_operand.hbm [shape: bf16[512,128], index: 13, kind: input, shape index: {}]
  %s14 = inlined_call_operand.hbm [shape: f32[1,128], index: 14, kind: input, shape index: {}]
  %s15 = inlined_call_operand.hbm [shape: f32[1,128], index: 15, kind: input, shape index: {}]
  %s16 = inlined_call_operand.hbm [shape: f32[1,128], index: 16, kind: input, shape index: {}]
  %s17 = inlined_call_operand.hbm [shape: f32[64,256], index: 17, kind: output, shape index: {}]
  %s18 = sld [smem:[#allocation0]]
  $region187: #{tpu_custom_call.1} parent=0
    _
  %s20 = ssub.s32 1, %s18
  %s21 = scalar_select 0, %s20, %s18
  $region1: #{tpu_custom_call.1} parent=0
    #allocation4 [shape = 'u8[65536]{0}', space=vmem, size = 0x10000, scoped, tag = 'input window, operand 0']
    #allocation5 [shape = 's32[2]{0}', space=sflag, size = 0x8, scoped, tag = 'scoped memory for tpu_custom_call.1']
    #allocation6 [shape = 's32[2]{0}', space=sflag, size = 0x8, scoped, tag = 'scoped memory for tpu_custom_call.1']
    #allocation7 [shape = 'u8[32768]{0}', space=vmem, size = 0x8000, scoped, tag = 'input window, operand 1, single buffered']
    #allocation8 [shape = 's32[1]{0}', space=sflag, size = 0x4, scoped, tag = 'scoped memory for tpu_custom_call.1']
    #allocation9 [shape = 'u8[512]{0}', space=vmem, size = 0x400, scoped, tag = 'input window, operand 2, single buffered']
    #allocation10 [shape = 'u8[32768]{0}', space=vmem, size = 0x8000, scoped, tag = 'input window, operand 3, single buffered']
    #allocation11 [shape = 's32[1]{0}', space=sflag, size = 0x4, scoped, tag = 'scoped memory for tpu_custom_call.1']
    #allocation12 [shape = 'u8[512]{0}', space=vmem, size = 0x400, scoped, tag = 'input window, operand 4, single buffered']
    #allocation13 [shape = 'u8[32768]{0}', space=vmem, size = 0x8000, scoped, tag = 'input window, operand 5, single buffered']
    #allocation14 [shape = 's32[1]{0}', space=sflag, size = 0x4, scoped, tag = 'scoped memory for tpu_custom_call.1']
    #allocation15 [shape = 'u8[512]{0}', space=vmem, size = 0x400, scoped, tag = 'input window, operand 6, single buffered']
    #allocation16 [shape = 'u8[32768]{0}', space=vmem, size = 0x8000, scoped, tag = 'input window, operand 7, single buffered']
    #allocation17 [shape = 's32[1]{0}', space=sflag, size = 0x4, scoped, tag = 'scoped memory for tpu_custom_call.1']
    #allocation18 [shape = 'u8[512]{0}', space=vmem, size = 0x400, scoped, tag = 'input window, operand 8, single buffered']
    #allocation19 [shape = 'u8[512]{0}', space=vmem, size = 0x400, scoped, tag = 'input window, operand 9, single buffered']
    #allocation20 [shape = 's32[1]{0}', space=sflag, size = 0x4, scoped, tag = 'scoped memory for tpu_custom_call.1']
    #allocation21 [shape = 'u8[512]{0}', space=vmem, size = 0x400, scoped, tag = 'input window, operand 10, single buffered']
    #allocation22 [shape = 'u8[131072]{0}', space=vmem, size = 0x20000, scoped, tag = 'input window, operand 11, single buffered']
    #allocation23 [shape = 's32[1]{0}', space=sflag, size = 0x4, scoped, tag = 'scoped memory for tpu_custom_call.1']
    #allocation24 [shape = 'u8[2048]{0}', space=vmem, size = 0x800, scoped, tag = 'input window, operand 12, single buffered']
    #allocation25 [shape = 'u8[131072]{0}', space=vmem, size = 0x20000, scoped, tag = 'input window, operand 13, single buffered']
    #allocation26 [shape = 's32[1]{0}', space=sflag, size = 0x4, scoped, tag = 'scoped memory for tpu_custom_call.1']
    #allocation27 [shape = 'u8[512]{0}', space=vmem, size = 0x400, scoped, tag = 'input window, operand 14, single buffered']
    #allocation28 [shape = 'u8[512]{0}', space=vmem, size = 0x400, scoped, tag = 'input window, operand 15, single buffered']
    #allocation29 [shape = 's32[1]{0}', space=sflag, size = 0x4, scoped, tag = 'scoped memory for tpu_custom_call.1']
    #allocation30 [shape = 'u8[512]{0}', space=vmem, size = 0x400, scoped, tag = 'input window, operand 16, single buffered']
    #allocation31 [shape = 'u8[16384]{0}', space=vmem, size = 0x4000, scoped, tag = 'output window, operand 0']
    %22 = vsyncpa [#allocation5], 0
    %s23 = scalar_lea.sflag [#allocation5], 1
    %24 = vsyncpa %s23, 0
    %25 = vsyncpa [#allocation8], 0
    %26 = vsyncpa [#allocation11], 0
    %27 = vsyncpa [#allocation14], 0
    %28 = vsyncpa [#allocation17], 0
    %29 = vsyncpa [#allocation20], 0
    %30 = vsyncpa [#allocation23], 0
    %31 = vsyncpa [#allocation26], 0
    %32 = vsyncpa [#allocation29], 0
    %33 = vsyncpa [#allocation6], 0
    %s34 = scalar_lea.sflag [#allocation6], 1
    %35 = vsyncpa %s34, 0
    loop: start=0, step=1, limit=10
    $region2: #{tpu_custom_call.1} parent=1 // loop_pre_header
      _
    $region3: #{tpu_custom_call.1} parent=1 // loop_header
      %s37 = sphi 0, %s41
      %p38 = scmp.ge.s32.totalorder %s37, 10
      %s44 = sphi 0, %s56
      %s45 = sphi 0, %s52
      %s46 = sphi 0, %s44
      %s47 = sphi 0, %s45
      %s48 = sphi 0, %s46
      %s49 = sphi 0, %s47
      %s59 = sphi 0, %s61
      %s62 = sphi 0, %s59
      %s63 = sphi 0, %s62
      %s79 = sphi 0, %s63
      %s83 = sphi 0, %s83
      %s85 = sphi 0, %s83
      %s86 = sphi 0, %s85
      %s100 = sphi 0, %s86
      %s104 = sphi 0, %s104
      %s106 = sphi 0, %s104
      %s107 = sphi 0, %s106
      %s121 = sphi 0, %s107
      %s125 = sphi 0, %s125
      %s127 = sphi 0, %s125
      %s128 = sphi 0, %s127
      %s142 = sphi 0, %s128
      %s146 = sphi 0, %s146
      %s148 = sphi 0, %s146
      %s149 = sphi 0, %s148
      %s163 = sphi 0, %s149
      %s167 = sphi 0, %s167
      %s169 = sphi 0, %s167
      %s170 = sphi 0, %s169
      %s184 = sphi 0, %s170
      %s188 = sphi 0, %s188
      %s190 = sphi 0, %s188
      %s191 = sphi 0, %s190
      %s205 = sphi 0, %s191
      %s209 = sphi 0, %s209
      %s211 = sphi 0, %s209
      %s212 = sphi 0, %s211
      %s226 = sphi 0, %s212
      %s230 = sphi 0, %s230
      %s232 = sphi 0, %s230
      %s233 = sphi 0, %s232
      %s247 = sphi 0, %s233
      %s251 = sphi 0, %s251
      %s253 = sphi 0, %s251
      %s254 = sphi 0, %s253
      %s268 = sphi 0, %s254
      %s272 = sphi 0, %s272
      %s274 = sphi 0, %s272
      %s275 = sphi 0, %s274
      %s289 = sphi 0, %s275
      %s293 = sphi 0, %s293
      %s295 = sphi 0, %s293
      %s296 = sphi 0, %s295
      %s310 = sphi 0, %s296
      %s314 = sphi 0, %s314
      %s316 = sphi 0, %s314
      %s317 = sphi 0, %s316
      %s331 = sphi 0, %s317
      %s335 = sphi 0, %s335
      %s337 = sphi 0, %s335
      %s338 = sphi 0, %s337
      %s352 = sphi 0, %s338
      %s356 = sphi 0, %s356
      %s358 = sphi 0, %s356
      %s359 = sphi 0, %s358
      %s373 = sphi 0, %s359
      %s377 = sphi 0, %s377
      %s379 = sphi 0, %s377
      %s380 = sphi 0, %s379
      %s394 = sphi 0, %s380
      %s398 = sphi 0, %s398
      %s400 = sphi 0, %s398
      %s401 = sphi 0, %s400
      %s415 = sphi 0, %s401
      %s423 = sphi 0, %s425
      %s426 = sphi 0, %s423
      %s427 = sphi 0, %s426
      %s443 = sphi 0, %s427
    $region4: #{tpu_custom_call.1} parent=1 // loop_header_branch
      %40 = sbr.rel (%p38) target = $region8
    $region5: #{tpu_custom_call.1} parent=1 // loop_body
      %s42 = ssub.s32 %s37, 1
      %s43 = ssub.s32 %s37, 2
      %s50 = sadd.s32 1, %s45
      %p51 = scmp.ge.s32.totalorder %s50, 4
      %s52 = scalar_select %p51, 0, %s50
      %s53 = sadd.s32 1, %s44
      %s54 = scalar_select %p51, %s53, %s44
      %p55 = scmp.ge.s32.totalorder %s54, 2
      %s56 = scalar_select %p55, 0, %s54
      %s57 = ssub.s32 %s44, %s56
      %p58 = scmp.eq.s32.totalorder %s57, 0
      %s60 = sadd.s32 %s59, 1
      %s61 = scalar_select %p58, %s59, %s60
      %p64 = pneg %p58
      %p65 = scmp.eq.s32.totalorder %s37, 7
      %p66 = por %p64, %p65
      %p67 = scmp.ne.s32.totalorder %s59, %s62
      %p68 = scmp.eq.s32.totalorder %s37, 0
      %p69 = por %p67, %p68
      %p70 = scmp.ne.s32.totalorder %s59, %s62
      %p71 = scmp.eq.s32.totalorder %s42, 7
      %p72 = por %p70, %p71
      %p73 = scmp.ne.s32.totalorder %s62, %s63
      %p74 = scmp.eq.s32.totalorder %s42, 0
      %p75 = por %p73, %p74
      %p76 = scmp.ne.s32.totalorder %s62, %s63
      %p77 = scmp.eq.s32.totalorder %s43, 7
      %p78 = por %p76, %p77
      %p80 = scmp.ne.s32.totalorder %s63, %s79
      %p81 = scmp.eq.s32.totalorder %s43, 0
      %p82 = por %p80, %p81
      %s84 = sadd.s32 %s83, 1
      %p87 = scmp.eq.s32.totalorder %s37, 7
      %p88 = scmp.ne.s32.totalorder %s83, %s85
      %p89 = scmp.eq.s32.totalorder %s37, 0
      %p90 = por %p88, %p89
      %p91 = scmp.ne.s32.totalorder %s83, %s85
      %p92 = scmp.eq.s32.totalorder %s42, 7
      %p93 = por %p91, %p92
      %p94 = scmp.ne.s32.totalorder %s85, %s86
      %p95 = scmp.eq.s32.totalorder %s42, 0
      %p96 = por %p94, %p95
      %p97 = scmp.ne.s32.totalorder %s85, %s86
      %p98 = scmp.eq.s32.totalorder %s43, 7
      %p99 = por %p97, %p98
      %p101 = scmp.ne.s32.totalorder %s86, %s100
      %p102 = scmp.eq.s32.totalorder %s43, 0
      %p103 = por %p101, %p102
      %s105 = sadd.s32 %s104, 1
      %p108 = scmp.eq.s32.totalorder %s37, 7
      %p109 = scmp.ne.s32.totalorder %s104, %s106
      %p110 = scmp.eq.s32.totalorder %s37, 0
      %p111 = por %p109, %p110
      %p112 = scmp.ne.s32.totalorder %s104, %s106
      %p113 = scmp.eq.s32.totalorder %s42, 7
      %p114 = por %p112, %p113
      %p115 = scmp.ne.s32.totalorder %s106, %s107
      %p116 = scmp.eq.s32.totalorder %s42, 0
      %p117 = por %p115, %p116
      %p118 = scmp.ne.s32.totalorder %s106, %s107
      %p119 = scmp.eq.s32.totalorder %s43, 7
      %p120 = por %p118, %p119
      %p122 = scmp.ne.s32.totalorder %s107, %s121
      %p123 = scmp.eq.s32.totalorder %s43, 0
      %p124 = por %p122, %p123
      %s126 = sadd.s32 %s125, 1
      %p129 = scmp.eq.s32.totalorder %s37, 7
      %p130 = scmp.ne.s32.totalorder %s125, %s127
      %p131 = scmp.eq.s32.totalorder %s37, 0
      %p132 = por %p130, %p131
      %p133 = scmp.ne.s32.totalorder %s125, %s127
      %p134 = scmp.eq.s32.totalorder %s42, 7
      %p135 = por %p133, %p134
      %p136 = scmp.ne.s32.totalorder %s127, %s128
      %p137 = scmp.eq.s32.totalorder %s42, 0
      %p138 = por %p136, %p137
      %p139 = scmp.ne.s32.totalorder %s127, %s128
      %p140 = scmp.eq.s32.totalorder %s43, 7
      %p141 = por %p139, %p140
      %p143 = scmp.ne.s32.totalorder %s128, %s142
      %p144 = scmp.eq.s32.totalorder %s43, 0
      %p145 = por %p143, %p144
      %s147 = sadd.s32 %s146, 1
      %p150 = scmp.eq.s32.totalorder %s37, 7
      %p151 = scmp.ne.s32.totalorder %s146, %s148
      %p152 = scmp.eq.s32.totalorder %s37, 0
      %p153 = por %p151, %p152
      %p154 = scmp.ne.s32.totalorder %s146, %s148
      %p155 = scmp.eq.s32.totalorder %s42, 7
      %p156 = por %p154, %p155
      %p157 = scmp.ne.s32.totalorder %s148, %s149
      %p158 = scmp.eq.s32.totalorder %s42, 0
      %p159 = por %p157, %p158
      %p160 = scmp.ne.s32.totalorder %s148, %s149
      %p161 = scmp.eq.s32.totalorder %s43, 7
      %p162 = por %p160, %p161
      %p164 = scmp.ne.s32.totalorder %s149, %s163
      %p165 = scmp.eq.s32.totalorder %s43, 0
      %p166 = por %p164, %p165
      %s168 = sadd.s32 %s167, 1
      %p171 = scmp.eq.s32.totalorder %s37, 7
      %p172 = scmp.ne.s32.totalorder %s167, %s169
      %p173 = scmp.eq.s32.totalorder %s37, 0
      %p174 = por %p172, %p173
      %p175 = scmp.ne.s32.totalorder %s167, %s169
      %p176 = scmp.eq.s32.totalorder %s42, 7
      %p177 = por %p175, %p176
      %p178 = scmp.ne.s32.totalorder %s169, %s170
      %p179 = scmp.eq.s32.totalorder %s42, 0
      %p180 = por %p178, %p179
      %p181 = scmp.ne.s32.totalorder %s169, %s170
      %p182 = scmp.eq.s32.totalorder %s43, 7
      %p183 = por %p181, %p182
      %p185 = scmp.ne.s32.totalorder %s170, %s184
      %p186 = scmp.eq.s32.totalorder %s43, 0
      %p187 = por %p185, %p186
      %s189 = sadd.s32 %s188, 1
      %p192 = scmp.eq.s32.totalorder %s37, 7
      %p193 = scmp.ne.s32.totalorder %s188, %s190
      %p194 = scmp.eq.s32.totalorder %s37, 0
      %p195 = por %p193, %p194
      %p196 = scmp.ne.s32.totalorder %s188, %s190
      %p197 = scmp.eq.s32.totalorder %s42, 7
      %p198 = por %p196, %p197
      %p199 = scmp.ne.s32.totalorder %s190, %s191
      %p200 = scmp.eq.s32.totalorder %s42, 0
      %p201 = por %p199, %p200
      %p202 = scmp.ne.s32.totalorder %s190, %s191
      %p203 = scmp.eq.s32.totalorder %s43, 7
      %p204 = por %p202, %p203
      %p206 = scmp.ne.s32.totalorder %s191, %s205
      %p207 = scmp.eq.s32.totalorder %s43, 0
      %p208 = por %p206, %p207
      %s210 = sadd.s32 %s209, 1
      %p213 = scmp.eq.s32.totalorder %s37, 7
      %p214 = scmp.ne.s32.totalorder %s209, %s211
      %p215 = scmp.eq.s32.totalorder %s37, 0
      %p216 = por %p214, %p215
      %p217 = scmp.ne.s32.totalorder %s209, %s211
      %p218 = scmp.eq.s32.totalorder %s42, 7
      %p219 = por %p217, %p218
      %p220 = scmp.ne.s32.totalorder %s211, %s212
      %p221 = scmp.eq.s32.totalorder %s42, 0
      %p222 = por %p220, %p221
      %p223 = scmp.ne.s32.totalorder %s211, %s212
      %p224 = scmp.eq.s32.totalorder %s43, 7
      %p225 = por %p223, %p224
      %p227 = scmp.ne.s32.totalorder %s212, %s226
      %p228 = scmp.eq.s32.totalorder %s43, 0
      %p229 = por %p227, %p228
      %s231 = sadd.s32 %s230, 1
      %p234 = scmp.eq.s32.totalorder %s37, 7
      %p235 = scmp.ne.s32.totalorder %s230, %s232
      %p236 = scmp.eq.s32.totalorder %s37, 0
      %p237 = por %p235, %p236
      %p238 = scmp.ne.s32.totalorder %s230, %s232
      %p239 = scmp.eq.s32.totalorder %s42, 7
      %p240 = por %p238, %p239
      %p241 = scmp.ne.s32.totalorder %s232, %s233
      %p242 = scmp.eq.s32.totalorder %s42, 0
      %p243 = por %p241, %p242
      %p244 = scmp.ne.s32.totalorder %s232, %s233
      %p245 = scmp.eq.s32.totalorder %s43, 7
      %p246 = por %p244, %p245
      %p248 = scmp.ne.s32.totalorder %s233, %s247
      %p249 = scmp.eq.s32.totalorder %s43, 0
      %p250 = por %p248, %p249
      %s252 = sadd.s32 %s251, 1
      %p255 = scmp.eq.s32.totalorder %s37, 7
      %p256 = scmp.ne.s32.totalorder %s251, %s253
      %p257 = scmp.eq.s32.totalorder %s37, 0
      %p258 = por %p256, %p257
      %p259 = scmp.ne.s32.totalorder %s251, %s253
      %p260 = scmp.eq.s32.totalorder %s42, 7
      %p261 = por %p259, %p260
      %p262 = scmp.ne.s32.totalorder %s253, %s254
      %p263 = scmp.eq.s32.totalorder %s42, 0
      %p264 = por %p262, %p263
      %p265 = scmp.ne.s32.totalorder %s253, %s254
      %p266 = scmp.eq.s32.totalorder %s43, 7
      %p267 = por %p265, %p266
      %p269 = scmp.ne.s32.totalorder %s254, %s268
      %p270 = scmp.eq.s32.totalorder %s43, 0
      %p271 = por %p269, %p270
      %s273 = sadd.s32 %s272, 1
      %p276 = scmp.eq.s32.totalorder %s37, 7
      %p277 = scmp.ne.s32.totalorder %s272, %s274
      %p278 = scmp.eq.s32.totalorder %s37, 0
      %p279 = por %p277, %p278
      %p280 = scmp.ne.s32.totalorder %s272, %s274
      %p281 = scmp.eq.s32.totalorder %s42, 7
      %p282 = por %p280, %p281
      %p283 = scmp.ne.s32.totalorder %s274, %s275
      %p284 = scmp.eq.s32.totalorder %s42, 0
      %p285 = por %p283, %p284
      %p286 = scmp.ne.s32.totalorder %s274, %s275
      %p287 = scmp.eq.s32.totalorder %s43, 7
      %p288 = por %p286, %p287
      %p290 = scmp.ne.s32.totalorder %s275, %s289
      %p291 = scmp.eq.s32.totalorder %s43, 0
      %p292 = por %p290, %p291
      %s294 = sadd.s32 %s293, 1
      %p297 = scmp.eq.s32.totalorder %s37, 7
      %p298 = scmp.ne.s32.totalorder %s293, %s295
      %p299 = scmp.eq.s32.totalorder %s37, 0
      %p300 = por %p298, %p299
      %p301 = scmp.ne.s32.totalorder %s293, %s295
      %p302 = scmp.eq.s32.totalorder %s42, 7
      %p303 = por %p301, %p302
      %p304 = scmp.ne.s32.totalorder %s295, %s296
      %p305 = scmp.eq.s32.totalorder %s42, 0
      %p306 = por %p304, %p305
      %p307 = scmp.ne.s32.totalorder %s295, %s296
      %p308 = scmp.eq.s32.totalorder %s43, 7
      %p309 = por %p307, %p308
      %p311 = scmp.ne.s32.totalorder %s296, %s310
      %p312 = scmp.eq.s32.totalorder %s43, 0
      %p313 = por %p311, %p312
      %s315 = sadd.s32 %s314, 1
      %p318 = scmp.eq.s32.totalorder %s37, 7
      %p319 = scmp.ne.s32.totalorder %s314, %s316
      %p320 = scmp.eq.s32.totalorder %s37, 0
      %p321 = por %p319, %p320
      %p322 = scmp.ne.s32.totalorder %s314, %s316
      %p323 = scmp.eq.s32.totalorder %s42, 7
      %p324 = por %p322, %p323
      %p325 = scmp.ne.s32.totalorder %s316, %s317
      %p326 = scmp.eq.s32.totalorder %s42, 0
      %p327 = por %p325, %p326
      %p328 = scmp.ne.s32.totalorder %s316, %s317
      %p329 = scmp.eq.s32.totalorder %s43, 7
      %p330 = por %p328, %p329
      %p332 = scmp.ne.s32.totalorder %s317, %s331
      %p333 = scmp.eq.s32.totalorder %s43, 0
      %p334 = por %p332, %p333
      %s336 = sadd.s32 %s335, 1
      %p339 = scmp.eq.s32.totalorder %s37, 7
      %p340 = scmp.ne.s32.totalorder %s335, %s337
      %p341 = scmp.eq.s32.totalorder %s37, 0
      %p342 = por %p340, %p341
      %p343 = scmp.ne.s32.totalorder %s335, %s337
      %p344 = scmp.eq.s32.totalorder %s42, 7
      %p345 = por %p343, %p344
      %p346 = scmp.ne.s32.totalorder %s337, %s338
      %p347 = scmp.eq.s32.totalorder %s42, 0
      %p348 = por %p346, %p347
      %p349 = scmp.ne.s32.totalorder %s337, %s338
      %p350 = scmp.eq.s32.totalorder %s43, 7
      %p351 = por %p349, %p350
      %p353 = scmp.ne.s32.totalorder %s338, %s352
      %p354 = scmp.eq.s32.totalorder %s43, 0
      %p355 = por %p353, %p354
      %s357 = sadd.s32 %s356, 1
      %p360 = scmp.eq.s32.totalorder %s37, 7
      %p361 = scmp.ne.s32.totalorder %s356, %s358
      %p362 = scmp.eq.s32.totalorder %s37, 0
      %p363 = por %p361, %p362
      %p364 = scmp.ne.s32.totalorder %s356, %s358
      %p365 = scmp.eq.s32.totalorder %s42, 7
      %p366 = por %p364, %p365
      %p367 = scmp.ne.s32.totalorder %s358, %s359
      %p368 = scmp.eq.s32.totalorder %s42, 0
      %p369 = por %p367, %p368
      %p370 = scmp.ne.s32.totalorder %s358, %s359
      %p371 = scmp.eq.s32.totalorder %s43, 7
      %p372 = por %p370, %p371
      %p374 = scmp.ne.s32.totalorder %s359, %s373
      %p375 = scmp.eq.s32.totalorder %s43, 0
      %p376 = por %p374, %p375
      %s378 = sadd.s32 %s377, 1
      %p381 = scmp.eq.s32.totalorder %s37, 7
      %p382 = scmp.ne.s32.totalorder %s377, %s379
      %p383 = scmp.eq.s32.totalorder %s37, 0
      %p384 = por %p382, %p383
      %p385 = scmp.ne.s32.totalorder %s377, %s379
      %p386 = scmp.eq.s32.totalorder %s42, 7
      %p387 = por %p385, %p386
      %p388 = scmp.ne.s32.totalorder %s379, %s380
      %p389 = scmp.eq.s32.totalorder %s42, 0
      %p390 = por %p388, %p389
      %p391 = scmp.ne.s32.totalorder %s379, %s380
      %p392 = scmp.eq.s32.totalorder %s43, 7
      %p393 = por %p391, %p392
      %p395 = scmp.ne.s32.totalorder %s380, %s394
      %p396 = scmp.eq.s32.totalorder %s43, 0
      %p397 = por %p395, %p396
      %s399 = sadd.s32 %s398, 1
      %p402 = scmp.eq.s32.totalorder %s37, 7
      %p403 = scmp.ne.s32.totalorder %s398, %s400
      %p404 = scmp.eq.s32.totalorder %s37, 0
      %p405 = por %p403, %p404
      %p406 = scmp.ne.s32.totalorder %s398, %s400
      %p407 = scmp.eq.s32.totalorder %s42, 7
      %p408 = por %p406, %p407
      %p409 = scmp.ne.s32.totalorder %s400, %s401
      %p410 = scmp.eq.s32.totalorder %s42, 0
      %p411 = por %p409, %p410
      %p412 = scmp.ne.s32.totalorder %s400, %s401
      %p413 = scmp.eq.s32.totalorder %s43, 7
      %p414 = por %p412, %p413
      %p416 = scmp.ne.s32.totalorder %s401, %s415
      %p417 = scmp.eq.s32.totalorder %s43, 0
      %p418 = por %p416, %p417
      %s419 = ssub.s32 %s45, %s52
      %s420 = ssub.s32 %s44, %s56
      %s421 = sor.u32 %s419, %s420
      %p422 = scmp.eq.s32.totalorder %s421, 0
      %s424 = sadd.s32 %s423, 1
      %s425 = scalar_select %p422, %s423, %s424
      %p428 = pneg %p422
      %p429 = scmp.eq.s32.totalorder %s37, 7
      %p430 = por %p428, %p429
      %p431 = scmp.ne.s32.totalorder %s423, %s426
      %p432 = scmp.eq.s32.totalorder %s37, 0
      %p433 = por %p431, %p432
      %p434 = scmp.ne.s32.totalorder %s423, %s426
      %p435 = scmp.eq.s32.totalorder %s42, 7
      %p436 = por %p434, %p435
      %p437 = scmp.ne.s32.totalorder %s426, %s427
      %p438 = scmp.eq.s32.totalorder %s42, 0
      %p439 = por %p437, %p438
      %p440 = scmp.ne.s32.totalorder %s426, %s427
      %p441 = scmp.eq.s32.totalorder %s43, 7
      %p442 = por %p440, %p441
      %p444 = scmp.ne.s32.totalorder %s427, %s443
      %p445 = scmp.eq.s32.totalorder %s43, 0
      %p446 = por %p444, %p445
      %p447 = scmp.le.s32.totalorder 1, %s37
      %p448 = scmp.lt.s32.totalorder %s37, 9
      %p449 = pnand %p447, %p448
      %p450 = pneg %p449
      // Predicated region
      $region9: #{tpu_custom_call.1} parent=5 // pred_check
        _
      $region10: #{tpu_custom_call.1} parent=5 // pred_check_branch
        %452 = sbr.rel (%p449) target = $region12
      $region11: #{tpu_custom_call.1} parent=5 // pred_region
        %s453 = ssub.s32 %s37, 1
        // Predicated region
        $region13: #{tpu_custom_call.1} parent=11 // pred_check
          %p454 = pneg %p96
        $region14: #{tpu_custom_call.1} parent=11 // pred_check_branch
          %456 = sbr.rel (%p454) target = $region16
        $region15: #{tpu_custom_call.1} parent=11 // pred_region
          %s458 = ssub.s32 1024, 1024
          %459 = vsyncadd [#allocation8], %s458
          %s460 = sshll.u32 [#allocation7], 4
          %s461 = int_to_ptr.vmem [resolvable:$true] %s460
          %466 = dma.hbm_to_vmem [thread:$0]  %s1, 1024, %s461, [#allocation8], 64, 64, 4
        $region16: #{tpu_custom_call.1} parent=11 // pred_fallthru
          _
        // Predicated region
        $region17: #{tpu_custom_call.1} parent=11 // pred_check
          %p467 = pneg %p117
        $region18: #{tpu_custom_call.1} parent=11 // pred_check_branch
          %469 = sbr.rel (%p467) target = $region20
        $region19: #{tpu_custom_call.1} parent=11 // pred_region
          %s471 = ssub.s32 16, 16
          %472 = vsyncadd [#allocation8], %s471
          %s474 = sshll.u32 [#allocation9], 4
          %s475 = int_to_ptr.vmem [resolvable:$true] %s474
          %477 = dma.hbm_to_vmem [thread:$0]  %s2, 16, %s475, [#allocation8]
        $region20: #{tpu_custom_call.1} parent=11 // pred_fallthru
          _
        // Predicated region
        $region21: #{tpu_custom_call.1} parent=11 // pred_check
          %p478 = pneg %p138
        $region22: #{tpu_custom_call.1} parent=11 // pred_check_branch
          %480 = sbr.rel (%p478) target = $region24
        $region23: #{tpu_custom_call.1} parent=11 // pred_region
          %s482 = ssub.s32 1024, 1024
          %483 = vsyncadd [#allocation11], %s482
          %s484 = sshll.u32 [#allocation10], 4
          %s485 = int_to_ptr.vmem [resolvable:$true] %s484
          %490 = dma.hbm_to_vmem [thread:$0]  %s3, 1024, %s485, [#allocation11], 64, 64, 4
        $region24: #{tpu_custom_call.1} parent=11 // pred_fallthru
          _
        // Predicated region
        $region25: #{tpu_custom_call.1} parent=11 // pred_check
          %p491 = pneg %p159
        $region26: #{tpu_custom_call.1} parent=11 // pred_check_branch
          %493 = sbr.rel (%p491) target = $region28
        $region27: #{tpu_custom_call.1} parent=11 // pred_region
          %s495 = ssub.s32 16, 16
          %496 = vsyncadd [#allocation11], %s495
          %s498 = sshll.u32 [#allocation12], 4
          %s499 = int_to_ptr.vmem [resolvable:$true] %s498
          %501 = dma.hbm_to_vmem [thread:$0]  %s4, 16, %s499, [#allocation11]
        $region28: #{tpu_custom_call.1} parent=11 // pred_fallthru
          _
        // Predicated region
        $region29: #{tpu_custom_call.1} parent=11 // pred_check
          %p502 = pneg %p180
        $region30: #{tpu_custom_call.1} parent=11 // pred_check_branch
          %504 = sbr.rel (%p502) target = $region32
        $region31: #{tpu_custom_call.1} parent=11 // pred_region
          %s506 = ssub.s32 1024, 1024
          %507 = vsyncadd [#allocation14], %s506
          %s508 = sshll.u32 [#allocation13], 4
          %s509 = int_to_ptr.vmem [resolvable:$true] %s508
          %514 = dma.hbm_to_vmem [thread:$0]  %s5, 1024, %s509, [#allocation14], 64, 64, 4
        $region32: #{tpu_custom_call.1} parent=11 // pred_fallthru
          _
        // Predicated region
        $region33: #{tpu_custom_call.1} parent=11 // pred_check
          %p515 = pneg %p201
        $region34: #{tpu_custom_call.1} parent=11 // pred_check_branch
          %517 = sbr.rel (%p515) target = $region36
        $region35: #{tpu_custom_call.1} parent=11 // pred_region
          %s519 = ssub.s32 16, 16
          %520 = vsyncadd [#allocation14], %s519
          %s522 = sshll.u32 [#allocation15], 4
          %s523 = int_to_ptr.vmem [resolvable:$true] %s522
          %525 = dma.hbm_to_vmem [thread:$0]  %s6, 16, %s523, [#allocation14]
        $region36: #{tpu_custom_call.1} parent=11 // pred_fallthru
          _
        // Predicated region
        $region37: #{tpu_custom_call.1} parent=11 // pred_check
          %p526 = pneg %p222
        $region38: #{tpu_custom_call.1} parent=11 // pred_check_branch
          %528 = sbr.rel (%p526) target = $region40
        $region39: #{tpu_custom_call.1} parent=11 // pred_region
          %s530 = ssub.s32 1024, 1024
          %531 = vsyncadd [#allocation17], %s530
          %s532 = sshll.u32 [#allocation16], 4
          %s533 = int_to_ptr.vmem [resolvable:$true] %s532
          %538 = dma.hbm_to_vmem [thread:$0]  %s7, 1024, %s533, [#allocation17], 64, 64, 4
        $region40: #{tpu_custom_call.1} parent=11 // pred_fallthru
          _
        // Predicated region
        $region41: #{tpu_custom_call.1} parent=11 // pred_check
          %p539 = pneg %p243
        $region42: #{tpu_custom_call.1} parent=11 // pred_check_branch
          %541 = sbr.rel (%p539) target = $region44
        $region43: #{tpu_custom_call.1} parent=11 // pred_region
          %s543 = ssub.s32 16, 16
          %544 = vsyncadd [#allocation17], %s543
          %s546 = sshll.u32 [#allocation18], 4
          %s547 = int_to_ptr.vmem [resolvable:$true] %s546
          %549 = dma.hbm_to_vmem [thread:$0]  %s8, 16, %s547, [#allocation17]
        $region44: #{tpu_custom_call.1} parent=11 // pred_fallthru
          _
        // Predicated region
        $region45: #{tpu_custom_call.1} parent=11 // pred_check
          %p550 = pneg %p264
        $region46: #{tpu_custom_call.1} parent=11 // pred_check_branch
          %552 = sbr.rel (%p550) target = $region48
        $region47: #{tpu_custom_call.1} parent=11 // pred_region
          %s554 = ssub.s32 16, 16
          %555 = vsyncadd [#allocation20], %s554
          %s557 = sshll.u32 [#allocation19], 4
          %s558 = int_to_ptr.vmem [resolvable:$true] %s557
          %560 = dma.hbm_to_vmem [thread:$0]  %s9, 16, %s558, [#allocation20]
        $region48: #{tpu_custom_call.1} parent=11 // pred_fallthru
          _
        // Predicated region
        $region49: #{tpu_custom_call.1} parent=11 // pred_check
          %p561 = pneg %p285
        $region50: #{tpu_custom_call.1} parent=11 // pred_check_branch
          %563 = sbr.rel (%p561) target = $region52
        $region51: #{tpu_custom_call.1} parent=11 // pred_region
          %s565 = ssub.s32 16, 16
          %566 = vsyncadd [#allocation20], %s565
          %s568 = sshll.u32 [#allocation21], 4
          %s569 = int_to_ptr.vmem [resolvable:$true] %s568
          %571 = dma.hbm_to_vmem [thread:$0]  %s10, 16, %s569, [#allocation20]
        $region52: #{tpu_custom_call.1} parent=11 // pred_fallthru
          _
        // Predicated region
        $region53: #{tpu_custom_call.1} parent=11 // pred_check
          %p572 = pneg %p306
        $region54: #{tpu_custom_call.1} parent=11 // pred_check_branch
          %574 = sbr.rel (%p572) target = $region56
        $region55: #{tpu_custom_call.1} parent=11 // pred_region
          %s576 = ssub.s32 4096, 4096
          %577 = vsyncadd [#allocation23], %s576
          %s578 = sshll.u32 [#allocation22], 4
          %s579 = int_to_ptr.vmem [resolvable:$true] %s578
          %584 = dma.hbm_to_vmem [thread:$0]  %s11, 4096, %s579, [#allocation23], 256, 256, 16
        $region56: #{tpu_custom_call.1} parent=11 // pred_fallthru
          _
        // Predicated region
        $region57: #{tpu_custom_call.1} parent=11 // pred_check
          %p585 = pneg %p327
        $region58: #{tpu_custom_call.1} parent=11 // pred_check_branch
          %587 = sbr.rel (%p585) target = $region60
        $region59: #{tpu_custom_call.1} parent=11 // pred_region
          %s589 = ssub.s32 64, 64
          %590 = vsyncadd [#allocation23], %s589
          %s592 = sshll.u32 [#allocation24], 4
          %s593 = int_to_ptr.vmem [resolvable:$true] %s592
          %595 = dma.hbm_to_vmem [thread:$0]  %s12, 64, %s593, [#allocation23]
        $region60: #{tpu_custom_call.1} parent=11 // pred_fallthru
          _
        // Predicated region
        $region61: #{tpu_custom_call.1} parent=11 // pred_check
          %p596 = pneg %p348
        $region62: #{tpu_custom_call.1} parent=11 // pred_check_branch
          %598 = sbr.rel (%p596) target = $region64
        $region63: #{tpu_custom_call.1} parent=11 // pred_region
          %s600 = ssub.s32 4096, 4096
          %601 = vsyncadd [#allocation26], %s600
          %s602 = sshll.u32 [#allocation25], 4
          %s603 = int_to_ptr.vmem [resolvable:$true] %s602
          %608 = dma.hbm_to_vmem [thread:$0]  %s13, 4096, %s603, [#allocation26], 64, 64, 4
        $region64: #{tpu_custom_call.1} parent=11 // pred_fallthru
          _
        // Predicated region
        $region65: #{tpu_custom_call.1} parent=11 // pred_check
          %p609 = pneg %p369
        $region66: #{tpu_custom_call.1} parent=11 // pred_check_branch
          %611 = sbr.rel (%p609) target = $region68
        $region67: #{tpu_custom_call.1} parent=11 // pred_region
          %s613 = ssub.s32 16, 16
          %614 = vsyncadd [#allocation26], %s613
          %s616 = sshll.u32 [#allocation27], 4
          %s617 = int_to_ptr.vmem [resolvable:$true] %s616
          %619 = dma.hbm_to_vmem [thread:$0]  %s14, 16, %s617, [#allocation26]
        $region68: #{tpu_custom_call.1} parent=11 // pred_fallthru
          _
        // Predicated region
        $region69: #{tpu_custom_call.1} parent=11 // pred_check
          %p620 = pneg %p390
        $region70: #{tpu_custom_call.1} parent=11 // pred_check_branch
          %622 = sbr.rel (%p620) target = $region72
        $region71: #{tpu_custom_call.1} parent=11 // pred_region
          %s624 = ssub.s32 16, 16
          %625 = vsyncadd [#allocation29], %s624
          %s627 = sshll.u32 [#allocation28], 4
          %s628 = int_to_ptr.vmem [resolvable:$true] %s627
          %630 = dma.hbm_to_vmem [thread:$0]  %s15, 16, %s628, [#allocation29]
        $region72: #{tpu_custom_call.1} parent=11 // pred_fallthru
          _
        // Predicated region
        $region73: #{tpu_custom_call.1} parent=11 // pred_check
          %p631 = pneg %p411
        $region74: #{tpu_custom_call.1} parent=11 // pred_check_branch
          %633 = sbr.rel (%p631) target = $region76
        $region75: #{tpu_custom_call.1} parent=11 // pred_region
          %s635 = ssub.s32 16, 16
          %636 = vsyncadd [#allocation29], %s635
          %s638 = sshll.u32 [#allocation30], 4
          %s639 = int_to_ptr.vmem [resolvable:$true] %s638
          %641 = dma.hbm_to_vmem [thread:$0]  %s16, 16, %s639, [#allocation29]
        $region76: #{tpu_custom_call.1} parent=11 // pred_fallthru
          _
      $region12: #{tpu_custom_call.1} parent=5 // pred_fallthru
        _
      %p642 = scmp.lt.s32.totalorder %s37, 8
      // Predicated region
      $region77: #{tpu_custom_call.1} parent=5 // pred_check
        %p643 = pneg %p642
      $region78: #{tpu_custom_call.1} parent=5 // pred_check_branch
        %645 = sbr.rel (%p643) target = $region80
      $region79: #{tpu_custom_call.1} parent=5 // pred_region
        // Predicated region
        $region81: #{tpu_custom_call.1} parent=79 // pred_check
          %p646 = pneg %p69
        $region82: #{tpu_custom_call.1} parent=79 // pred_check_branch
          %648 = sbr.rel (%p646) target = $region84
        $region83: #{tpu_custom_call.1} parent=79 // pred_region
          %s649 = sand.u32 %s59, 1
          %s650 = scalar_lea.sflag [#allocation5], %s649
          %s651 = sand.u32 %s59, 1
          %s652 = smul.addr %s651, 64
          %s653 = scalar_lea.vmem [#allocation4], %s652
          %s655 = ssub.s32 1024, 1024
          %656 = vsyncadd %s650, %s655
          %s657 = smul.addr %s44, 128
          %s658 = scalar_lea.hbm %s0, %s657
          %s659 = sshll.u32 %s653, 4
          %s660 = int_to_ptr.vmem [resolvable:$true] %s659
          %665 = dma.hbm_to_vmem [thread:$0]  %s658, 1024, %s660, %s650, 256, 128, 8
        $region84: #{tpu_custom_call.1} parent=79 // pred_fallthru
          _
      $region80: #{tpu_custom_call.1} parent=5 // pred_fallthru
        _
      %p666 = scmp.le.s32.totalorder 1, %s37
      %p667 = scmp.lt.s32.totalorder %s37, 9
      %p668 = pnand %p666, %p667
      %p669 = pneg %p668
      // Predicated region
      $region85: #{tpu_custom_call.1} parent=5 // pred_check
        _
      $region86: #{tpu_custom_call.1} parent=5 // pred_check_branch
        %671 = sbr.rel (%p668) target = $region88
      $region87: #{tpu_custom_call.1} parent=5 // pred_region
        %s672 = ssub.s32 %s37, 1
        %s673 = sand.u32 %s62, 1
        %s674 = scalar_lea.sflag [#allocation5], %s673
        %s675 = sand.u32 %s62, 1
        %s676 = smul.addr %s675, 64
        %s677 = scalar_lea.vmem [#allocation4], %s676
        // Predicated region
        $region89: #{tpu_custom_call.1} parent=87 // pred_check
          %p678 = pneg %p75
        $region90: #{tpu_custom_call.1} parent=87 // pred_check_branch
          %680 = sbr.rel (%p678) target = $region92
        $region91: #{tpu_custom_call.1} parent=87 // pred_region
          %681 = dma.done %s674, 1024
        $region92: #{tpu_custom_call.1} parent=87 // pred_fallthru
          _
        // Predicated region
        $region93: #{tpu_custom_call.1} parent=87 // pred_check
          %p682 = pneg %p96
        $region94: #{tpu_custom_call.1} parent=87 // pred_check_branch
          %684 = sbr.rel (%p682) target = $region96
        $region95: #{tpu_custom_call.1} parent=87 // pred_region
          %685 = dma.done [#allocation8], 1024
        $region96: #{tpu_custom_call.1} parent=87 // pred_fallthru
          _
        // Predicated region
        $region97: #{tpu_custom_call.1} parent=87 // pred_check
          %p686 = pneg %p117
        $region98: #{tpu_custom_call.1} parent=87 // pred_check_branch
          %688 = sbr.rel (%p686) target = $region100
        $region99: #{tpu_custom_call.1} parent=87 // pred_region
          %689 = dma.done [#allocation8], 16
        $region100: #{tpu_custom_call.1} parent=87 // pred_fallthru
          _
        // Predicated region
        $region101: #{tpu_custom_call.1} parent=87 // pred_check
          %p690 = pneg %p138
        $region102: #{tpu_custom_call.1} parent=87 // pred_check_branch
          %692 = sbr.rel (%p690) target = $region104
        $region103: #{tpu_custom_call.1} parent=87 // pred_region
          %693 = dma.done [#allocation11], 1024
        $region104: #{tpu_custom_call.1} parent=87 // pred_fallthru
          _
        // Predicated region
        $region105: #{tpu_custom_call.1} parent=87 // pred_check
          %p694 = pneg %p159
        $region106: #{tpu_custom_call.1} parent=87 // pred_check_branch
          %696 = sbr.rel (%p694) target = $region108
        $region107: #{tpu_custom_call.1} parent=87 // pred_region
          %697 = dma.done [#allocation11], 16
        $region108: #{tpu_custom_call.1} parent=87 // pred_fallthru
          _
        // Predicated region
        $region109: #{tpu_custom_call.1} parent=87 // pred_check
          %p698 = pneg %p180
        $region110: #{tpu_custom_call.1} parent=87 // pred_check_branch
          %700 = sbr.rel (%p698) target = $region112
        $region111: #{tpu_custom_call.1} parent=87 // pred_region
          %701 = dma.done [#allocation14], 1024
        $region112: #{tpu_custom_call.1} parent=87 // pred_fallthru
          _
        // Predicated region
        $region113: #{tpu_custom_call.1} parent=87 // pred_check
          %p702 = pneg %p201
        $region114: #{tpu_custom_call.1} parent=87 // pred_check_branch
          %704 = sbr.rel (%p702) target = $region116
        $region115: #{tpu_custom_call.1} parent=87 // pred_region
          %705 = dma.done [#allocation14], 16
        $region116: #{tpu_custom_call.1} parent=87 // pred_fallthru
          _
        // Predicated region
        $region117: #{tpu_custom_call.1} parent=87 // pred_check
          %p706 = pneg %p222
        $region118: #{tpu_custom_call.1} parent=87 // pred_check_branch
          %708 = sbr.rel (%p706) target = $region120
        $region119: #{tpu_custom_call.1} parent=87 // pred_region
          %709 = dma.done [#allocation17], 1024
        $region120: #{tpu_custom_call.1} parent=87 // pred_fallthru
          _
        // Predicated region
        $region121: #{tpu_custom_call.1} parent=87 // pred_check
          %p710 = pneg %p243
        $region122: #{tpu_custom_call.1} parent=87 // pred_check_branch
          %712 = sbr.rel (%p710) target = $region124
        $region123: #{tpu_custom_call.1} parent=87 // pred_region
          %713 = dma.done [#allocation17], 16
        $region124: #{tpu_custom_call.1} parent=87 // pred_fallthru
          _
        // Predicated region
        $region125: #{tpu_custom_call.1} parent=87 // pred_check
          %p714 = pneg %p264
        $region126: #{tpu_custom_call.1} parent=87 // pred_check_branch
          %716 = sbr.rel (%p714) target = $region128
        $region127: #{tpu_custom_call.1} parent=87 // pred_region
          %717 = dma.done [#allocation20], 16
        $region128: #{tpu_custom_call.1} parent=87 // pred_fallthru
          _
        // Predicated region
        $region129: #{tpu_custom_call.1} parent=87 // pred_check
          %p718 = pneg %p285
        $region130: #{tpu_custom_call.1} parent=87 // pred_check_branch
          %720 = sbr.rel (%p718) target = $region132
        $region131: #{tpu_custom_call.1} parent=87 // pred_region
          %721 = dma.done [#allocation20], 16
        $region132: #{tpu_custom_call.1} parent=87 // pred_fallthru
          _
        // Predicated region
        $region133: #{tpu_custom_call.1} parent=87 // pred_check
          %p722 = pneg %p306
        $region134: #{tpu_custom_call.1} parent=87 // pred_check_branch
          %724 = sbr.rel (%p722) target = $region136
        $region135: #{tpu_custom_call.1} parent=87 // pred_region
          %725 = dma.done [#allocation23], 4096
        $region136: #{tpu_custom_call.1} parent=87 // pred_fallthru
          _
        // Predicated region
        $region137: #{tpu_custom_call.1} parent=87 // pred_check
          %p726 = pneg %p327
        $region138: #{tpu_custom_call.1} parent=87 // pred_check_branch
          %728 = sbr.rel (%p726) target = $region140
        $region139: #{tpu_custom_call.1} parent=87 // pred_region
          %729 = dma.done [#allocation23], 64
        $region140: #{tpu_custom_call.1} parent=87 // pred_fallthru
          _
        // Predicated region
        $region141: #{tpu_custom_call.1} parent=87 // pred_check
          %p730 = pneg %p348
        $region142: #{tpu_custom_call.1} parent=87 // pred_check_branch
          %732 = sbr.rel (%p730) target = $region144
        $region143: #{tpu_custom_call.1} parent=87 // pred_region
          %733 = dma.done [#allocation26], 4096
        $region144: #{tpu_custom_call.1} parent=87 // pred_fallthru
          _
        // Predicated region
        $region145: #{tpu_custom_call.1} parent=87 // pred_check
          %p734 = pneg %p369
        $region146: #{tpu_custom_call.1} parent=87 // pred_check_branch
          %736 = sbr.rel (%p734) target = $region148
        $region147: #{tpu_custom_call.1} parent=87 // pred_region
          %737 = dma.done [#allocation26], 16
        $region148: #{tpu_custom_call.1} parent=87 // pred_fallthru
          _
        // Predicated region
        $region149: #{tpu_custom_call.1} parent=87 // pred_check
          %p738 = pneg %p390
        $region150: #{tpu_custom_call.1} parent=87 // pred_check_branch
          %740 = sbr.rel (%p738) target = $region152
        $region151: #{tpu_custom_call.1} parent=87 // pred_region
          %741 = dma.done [#allocation29], 16
        $region152: #{tpu_custom_call.1} parent=87 // pred_fallthru
          _
        // Predicated region
        $region153: #{tpu_custom_call.1} parent=87 // pred_check
          %p742 = pneg %p411
        $region154: #{tpu_custom_call.1} parent=87 // pred_check_branch
          %744 = sbr.rel (%p742) target = $region156
        $region155: #{tpu_custom_call.1} parent=87 // pred_region
          %745 = dma.done [#allocation29], 16
        $region156: #{tpu_custom_call.1} parent=87 // pred_fallthru
          _
        %s746 = sand.u32 %s62, 1
        %s747 = scalar_lea.sflag [#allocation5], %s746
        %s748 = sand.u32 %s62, 1
        %s749 = smul.addr %s748, 64
        %s750 = scalar_lea.vmem [#allocation4], %s749
        %p751 = pneg %p75
        %p752 = pneg %p72
        %p753 = pneg %p96
        %p754 = pneg %p93
        %p755 = pneg %p117
        %p756 = pneg %p114
        %p757 = pneg %p138
        %p758 = pneg %p135
        %p759 = pneg %p159
        %p760 = pneg %p156
        %p761 = pneg %p180
        %p762 = pneg %p177
        %p763 = pneg %p201
        %p764 = pneg %p198
        %p765 = pneg %p222
        %p766 = pneg %p219
        %p767 = pneg %p243
        %p768 = pneg %p240
        %p769 = pneg %p264
        %p770 = pneg %p261
        %p771 = pneg %p285
        %p772 = pneg %p282
        %p773 = pneg %p306
        %p774 = pneg %p303
        %p775 = pneg %p327
        %p776 = pneg %p324
        %p777 = pneg %p348
        %p778 = pneg %p345
        %p779 = pneg %p369
        %p780 = pneg %p366
        %p781 = pneg %p390
        %p782 = pneg %p387
        %p783 = pneg %p411
        %p784 = pneg %p408
        %p785 = pneg %p439
        %p786 = pneg %p436
        %s787 = sand.u32 %s426, 1
        %s788 = scalar_lea.sflag [#allocation6], %s787
        %s789 = sand.u32 %s426, 1
        %s790 = smul.addr %s789, 16
        %s791 = scalar_lea.vmem [#allocation31], %s790
        %s792 = smul.u32 2, %s47
        %p794 = scmp.eq.s32.totalorder %s47, 0
        // Predicated region
        $region157: #{tpu_custom_call.1} parent=87 // pred_check
          %p795 = pneg %p794
        $region158: #{tpu_custom_call.1} parent=87 // pred_check_branch
          %797 = sbr.rel (%p795) target = $region160
        $region159: #{tpu_custom_call.1} parent=87 // pred_region
          loop: start=0, step=1, limit=2
          $region161: #{tpu_custom_call.1} parent=159 // loop_pre_header
            _
          $region162: #{tpu_custom_call.1} parent=159 // loop_header
            %s799 = sphi 0, %s803
            %p800 = scmp.ge.s32.totalorder %s799, 2
          $region163: #{tpu_custom_call.1} parent=159 // loop_header_branch
            %802 = sbr.rel (%p800) target = $region167
          $region164: #{tpu_custom_call.1} parent=159 // loop_body
            %s804 = smul.u32 %s799, 32
            %s805 = scalar_lea.vmem %s677, %s804 [#allocation4]
            %v806 = vld [vmem:[%s805] sm:$0xff]
            %v807 = vld [vmem:[%s805 + $0x8] sm:$0xff]
            %v808 = vld [vmem:[%s805 + $0x10] sm:$0xff]
            %v809 = vld [vmem:[%s805 + $0x18] sm:$0xff]
            %v810 = vpack.c.bf16 %v807, %v806
            %v811 = vpack.c.bf16 %v809, %v808
            %v812 = vld [vmem:[#allocation10] sm:$0xf]
            %v813 = vld [vmem:[#allocation10 + $0x4] sm:$0xf]
            %v814 = vld [vmem:[#allocation10 + $0x8] sm:$0xf]
            %v815 = vld [vmem:[#allocation10 + $0xc] sm:$0xf]
            %v816 = vld [vmem:[#allocation10 + $0x10] sm:$0xf]
            %v817 = vld [vmem:[#allocation10 + $0x14] sm:$0xf]
            %v818 = vld [vmem:[#allocation10 + $0x18] sm:$0xf]
            %v819 = vld [vmem:[#allocation10 + $0x1c] sm:$0xf]
            %v820 = vld [vmem:[#allocation10 + $0x20] sm:$0xf]
            %v821 = vld [vmem:[#allocation10 + $0x24] sm:$0xf]
            %v822 = vld [vmem:[#allocation10 + $0x28] sm:$0xf]
            %v823 = vld [vmem:[#allocation10 + $0x2c] sm:$0xf]
            %v824 = vld [vmem:[#allocation10 + $0x30] sm:$0xf]
            %v825 = vld [vmem:[#allocation10 + $0x34] sm:$0xf]
            %v826 = vld [vmem:[#allocation10 + $0x38] sm:$0xf]
            %v827 = vld [vmem:[#allocation10 + $0x3c] sm:$0xf]
            %v828 = vld [vmem:[#allocation12] sm:$0x1]
            %v830 = vlaneseq
            %v831 = vshrl.u32 %v830, 7
            %v832 = vsub.s32 0, %v831
            %v833 = vrot.slane %v828, %v832
            %v851 = vunpack.c.l.b16 %v812
            %v852 = vunpack.c.l.b16 %v813
            %v853 = vunpack.c.l.b16 %v814
            %v854 = vunpack.c.l.b16 %v815
            %v855 = vunpack.c.l.b16 %v816
            %v856 = vunpack.c.l.b16 %v817
            %v857 = vunpack.c.l.b16 %v818
            %v858 = vunpack.c.l.b16 %v819
            %v859 = vunpack.c.l.b16 %v820
            %v860 = vunpack.c.l.b16 %v821
            %v861 = vunpack.c.l.b16 %v822
            %v862 = vunpack.c.l.b16 %v823
            %v863 = vunpack.c.l.b16 %v824
            %v864 = vunpack.c.l.b16 %v825
            %v865 = vunpack.c.l.b16 %v826
            %v866 = vunpack.c.l.b16 %v827
            %v867 = vpack.c.b16 %v852, %v851
            %v868 = vpack.c.b16 %v854, %v853
            %v869 = vpack.c.b16 %v856, %v855
            %v870 = vpack.c.b16 %v858, %v857
            %v871 = vpack.c.b16 %v860, %v859
            %v872 = vpack.c.b16 %v862, %v861
            %v873 = vpack.c.b16 %v864, %v863
            %v874 = vpack.c.b16 %v866, %v865
            %883 = vmatprep.subr.bf16.mxu0 0
            %884 = vmatpush1.bf16.msra.mxu0 %v867
            %885 = vmatprep.subr.bf16.mxu0 0
            %886 = vmatpush1.bf16.msra.mxu0 %v868
            %887 = vmatprep.subr.bf16.mxu0 0
            %888 = vmatpush1.bf16.msra.mxu0 %v869
            %889 = vmatprep.subr.bf16.mxu0 0
            %890 = vmatpush1.bf16.msra.mxu0 %v870
            %891 = vmatprep.subr.bf16.mxu0 0
            %892 = vmatpush1.bf16.msra.mxu0 %v871
            %893 = vmatprep.subr.bf16.mxu0 0
            %894 = vmatpush1.bf16.msra.mxu0 %v872
            %895 = vmatprep.subr.bf16.mxu0 0
            %896 = vmatpush1.bf16.msra.mxu0 %v873
            %897 = vmatprep.subr.bf16.mxu0 0
            %898 = vmatpush1.bf16.msra.mxu0 %v874
            %899 = vmatprep.subr.bf16.mxu0 0
            %900 = vmatpush1.bf16.msra.mxu0 0
            %901 = vmatprep.subr.bf16.mxu0 0
            %902 = vmatpush1.bf16.msra.mxu0 0
            %903 = vmatprep.subr.bf16.mxu0 0
            %904 = vmatpush1.bf16.msra.mxu0 0
            %905 = vmatprep.subr.bf16.mxu0 0
            %906 = vmatpush1.bf16.msra.mxu0 0
            %907 = vmatprep.subr.bf16.mxu0 0
            %908 = vmatpush1.bf16.msra.mxu0 0
            %909 = vmatprep.subr.bf16.mxu0 0
            %910 = vmatpush1.bf16.msra.mxu0 0
            %911 = vmatprep.subr.bf16.mxu0 0
            %912 = vmatpush1.bf16.msra.mxu0 0
            %913 = vmatprep.subr.bf16.mxu0 0
            %914 = vmatpush1.bf16.msra.mxu0 0
            %915 = vmatprep.mubr.bf16.mxu0 0
            %916 = vmatmul.mubr.bf16.gmra.mrb[0].mxu0 %v810
            %v917 = vpop.f32.mrb[0].mxu0
            %v918 = vadd.f32 %v833, %v917
            %v919 = vpop.f32.mrb[0].mxu0
            %v920 = vpop.f32.mrb[0].mxu0
            %v921 = vadd.f32 %v833, %v920
            %v922 = vpop.f32.mrb[0].mxu0
            %923 = vmatprep.mubr.bf16.mxu0 0
            %924 = vmatmul.mubr.bf16.gmra.mrb[0].mxu0 %v811
            %v925 = vpop.f32.mrb[0].mxu0
            %v926 = vadd.f32 %v833, %v925
            %v927 = vpop.f32.mrb[0].mxu0
            %v928 = vpop.f32.mrb[0].mxu0
            %v929 = vadd.f32 %v833, %v928
            %v930 = vpop.f32.mrb[0].mxu0
            %931 = vdwg.mxu0
            %v932 = vpack.c.bf16 %v921, %v918
            %v933 = vpack.c.bf16 %v929, %v926
            %s934 = sshra.s32 %s804, 4
            %s935 = sand.u32 %s804, 15
            %s936 = smul.addr %s934, 8
            %s937 = scalar_lea.vmem [#allocation2], %s936
            %938 = vst [vmem:[%s937] sm:$0xff] %v932
            %939 = vst [vmem:[%s937 + $0x8] sm:$0xff] %v933
            %v940 = vld [vmem:[#allocation13] sm:$0xf]
            %v941 = vld [vmem:[#allocation13 + $0x4] sm:$0xf]
            %v942 = vld [vmem:[#allocation13 + $0x8] sm:$0xf]
            %v943 = vld [vmem:[#allocation13 + $0xc] sm:$0xf]
            %v944 = vld [vmem:[#allocation13 + $0x10] sm:$0xf]
            %v945 = vld [vmem:[#allocation13 + $0x14] sm:$0xf]
            %v946 = vld [vmem:[#allocation13 + $0x18] sm:$0xf]
            %v947 = vld [vmem:[#allocation13 + $0x1c] sm:$0xf]
            %v948 = vld [vmem:[#allocation13 + $0x20] sm:$0xf]
            %v949 = vld [vmem:[#allocation13 + $0x24] sm:$0xf]
            %v950 = vld [vmem:[#allocation13 + $0x28] sm:$0xf]
            %v951 = vld [vmem:[#allocation13 + $0x2c] sm:$0xf]
            %v952 = vld [vmem:[#allocation13 + $0x30] sm:$0xf]
            %v953 = vld [vmem:[#allocation13 + $0x34] sm:$0xf]
            %v954 = vld [vmem:[#allocation13 + $0x38] sm:$0xf]
            %v955 = vld [vmem:[#allocation13 + $0x3c] sm:$0xf]
            %v956 = vld [vmem:[#allocation15] sm:$0x1]
            %v958 = vlaneseq
            %v959 = vshrl.u32 %v958, 7
            %v960 = vsub.s32 0, %v959
            %v961 = vrot.slane %v956, %v960
            %v979 = vunpack.c.l.b16 %v940
            %v980 = vunpack.c.l.b16 %v941
            %v981 = vunpack.c.l.b16 %v942
            %v982 = vunpack.c.l.b16 %v943
            %v983 = vunpack.c.l.b16 %v944
            %v984 = vunpack.c.l.b16 %v945
            %v985 = vunpack.c.l.b16 %v946
            %v986 = vunpack.c.l.b16 %v947
            %v987 = vunpack.c.l.b16 %v948
            %v988 = vunpack.c.l.b16 %v949
            %v989 = vunpack.c.l.b16 %v950
            %v990 = vunpack.c.l.b16 %v951
            %v991 = vunpack.c.l.b16 %v952
            %v992 = vunpack.c.l.b16 %v953
            %v993 = vunpack.c.l.b16 %v954
            %v994 = vunpack.c.l.b16 %v955
            %v995 = vpack.c.b16 %v980, %v979
            %v996 = vpack.c.b16 %v982, %v981
            %v997 = vpack.c.b16 %v984, %v983
            %v998 = vpack.c.b16 %v986, %v985
            %v999 = vpack.c.b16 %v988, %v987
            %v1000 = vpack.c.b16 %v990, %v989
            %v1001 = vpack.c.b16 %v992, %v991
            %v1002 = vpack.c.b16 %v994, %v993
            %1011 = vmatprep.subr.bf16.mxu0 0
            %1012 = vmatpush1.bf16.msra.mxu0 %v995
            %1013 = vmatprep.subr.bf16.mxu0 0
            %1014 = vmatpush1.bf16.msra.mxu0 %v996
            %1015 = vmatprep.subr.bf16.mxu0 0
            %1016 = vmatpush1.bf16.msra.mxu0 %v997
            %1017 = vmatprep.subr.bf16.mxu0 0
            %1018 = vmatpush1.bf16.msra.mxu0 %v998
            %1019 = vmatprep.subr.bf16.mxu0 0
            %1020 = vmatpush1.bf16.msra.mxu0 %v999
            %1021 = vmatprep.subr.bf16.mxu0 0
            %1022 = vmatpush1.bf16.msra.mxu0 %v1000
            %1023 = vmatprep.subr.bf16.mxu0 0
            %1024 = vmatpush1.bf16.msra.mxu0 %v1001
            %1025 = vmatprep.subr.bf16.mxu0 0
            %1026 = vmatpush1.bf16.msra.mxu0 %v1002
            %1027 = vmatprep.subr.bf16.mxu0 0
            %1028 = vmatpush1.bf16.msra.mxu0 0
            %1029 = vmatprep.subr.bf16.mxu0 0
            %1030 = vmatpush1.bf16.msra.mxu0 0
            %1031 = vmatprep.subr.bf16.mxu0 0
            %1032 = vmatpush1.bf16.msra.mxu0 0
            %1033 = vmatprep.subr.bf16.mxu0 0
            %1034 = vmatpush1.bf16.msra.mxu0 0
            %1035 = vmatprep.subr.bf16.mxu0 0
            %1036 = vmatpush1.bf16.msra.mxu0 0
            %1037 = vmatprep.subr.bf16.mxu0 0
            %1038 = vmatpush1.bf16.msra.mxu0 0
            %1039 = vmatprep.subr.bf16.mxu0 0
            %1040 = vmatpush1.bf16.msra.mxu0 0
            %1041 = vmatprep.subr.bf16.mxu0 0
            %1042 = vmatpush1.bf16.msra.mxu0 0
            %1043 = vmatprep.mubr.bf16.mxu0 0
            %1044 = vmatmul.mubr.bf16.gmra.mrb[0].mxu0 %v810
            %v1045 = vpop.f32.mrb[0].mxu0
            %v1046 = vadd.f32 %v961, %v1045
            %v1047 = vpop.f32.mrb[0].mxu0
            %v1048 = vpop.f32.mrb[0].mxu0
            %v1049 = vadd.f32 %v961, %v1048
            %v1050 = vpop.f32.mrb[0].mxu0
            %1051 = vmatprep.mubr.bf16.mxu0 0
            %1052 = vmatmul.mubr.bf16.gmra.mrb[0].mxu0 %v811
            %v1053 = vpop.f32.mrb[0].mxu0
            %v1054 = vadd.f32 %v961, %v1053
            %v1055 = vpop.f32.mrb[0].mxu0
            %v1056 = vpop.f32.mrb[0].mxu0
            %v1057 = vadd.f32 %v961, %v1056
            %v1058 = vpop.f32.mrb[0].mxu0
            %1059 = vdwg.mxu0
            %v1060 = vpack.c.bf16 %v1049, %v1046
            %v1061 = vpack.c.bf16 %v1057, %v1054
            %s1062 = smul.addr %s934, 8
            %s1063 = scalar_lea.vmem [#allocation3], %s1062
            %1064 = vst [vmem:[%s1063] sm:$0xff] %v1060
            %1065 = vst [vmem:[%s1063 + $0x8] sm:$0xff] %v1061
          $region165: #{tpu_custom_call.1} parent=159 // loop_footer
            %s803 = sadd.s32 1, %s799
          $region166: #{tpu_custom_call.1} parent=159 // loop_footer_branch
            %798 = sbr.rel target = $region162
          $region167: #{tpu_custom_call.1} parent=159 // loop_exit
            _
        $region160: #{tpu_custom_call.1} parent=87 // pred_fallthru
          _
        %s1066 = smul.u32 %s47, 16
        %s1067 = scalar_lea.vmem %s677, %s1066 [#allocation4]
        %v1068 = vld [vmem:[%s1067] sm:$0xff]
        %v1069 = vld [vmem:[%s1067 + $0x8] sm:$0xff]
        %v1070 = vpack.c.bf16 %v1069, %v1068
        %v1071 = vld [vmem:[#allocation7] sm:$0xf]
        %v1072 = vld [vmem:[#allocation7 + $0x4] sm:$0xf]
        %v1073 = vld [vmem:[#allocation7 + $0x8] sm:$0xf]
        %v1074 = vld [vmem:[#allocation7 + $0xc] sm:$0xf]
        %v1075 = vld [vmem:[#allocation7 + $0x10] sm:$0xf]
        %v1076 = vld [vmem:[#allocation7 + $0x14] sm:$0xf]
        %v1077 = vld [vmem:[#allocation7 + $0x18] sm:$0xf]
        %v1078 = vld [vmem:[#allocation7 + $0x1c] sm:$0xf]
        %v1079 = vld [vmem:[#allocation7 + $0x20] sm:$0xf]
        %v1080 = vld [vmem:[#allocation7 + $0x24] sm:$0xf]
        %v1081 = vld [vmem:[#allocation7 + $0x28] sm:$0xf]
        %v1082 = vld [vmem:[#allocation7 + $0x2c] sm:$0xf]
        %v1083 = vld [vmem:[#allocation7 + $0x30] sm:$0xf]
        %v1084 = vld [vmem:[#allocation7 + $0x34] sm:$0xf]
        %v1085 = vld [vmem:[#allocation7 + $0x38] sm:$0xf]
        %v1086 = vld [vmem:[#allocation7 + $0x3c] sm:$0xf]
        %v1087 = vld [vmem:[#allocation9] sm:$0x1]
        %v1089 = vlaneseq
        %v1090 = vshrl.u32 %v1089, 7
        %v1091 = vsub.s32 0, %v1090
        %v1092 = vrot.slane %v1087, %v1091
        %v1110 = vunpack.c.l.b16 %v1071
        %v1111 = vunpack.c.l.b16 %v1072
        %v1112 = vunpack.c.l.b16 %v1073
        %v1113 = vunpack.c.l.b16 %v1074
        %v1114 = vunpack.c.l.b16 %v1075
        %v1115 = vunpack.c.l.b16 %v1076
        %v1116 = vunpack.c.l.b16 %v1077
        %v1117 = vunpack.c.l.b16 %v1078
        %v1118 = vunpack.c.l.b16 %v1079
        %v1119 = vunpack.c.l.b16 %v1080
        %v1120 = vunpack.c.l.b16 %v1081
        %v1121 = vunpack.c.l.b16 %v1082
        %v1122 = vunpack.c.l.b16 %v1083
        %v1123 = vunpack.c.l.b16 %v1084
        %v1124 = vunpack.c.l.b16 %v1085
        %v1125 = vunpack.c.l.b16 %v1086
        %v1126 = vpack.c.b16 %v1111, %v1110
        %v1127 = vpack.c.b16 %v1113, %v1112
        %v1128 = vpack.c.b16 %v1115, %v1114
        %v1129 = vpack.c.b16 %v1117, %v1116
        %v1130 = vpack.c.b16 %v1119, %v1118
        %v1131 = vpack.c.b16 %v1121, %v1120
        %v1132 = vpack.c.b16 %v1123, %v1122
        %v1133 = vpack.c.b16 %v1125, %v1124
        %1142 = vmatprep.subr.bf16.mxu0 0
        %1143 = vmatpush1.bf16.msra.mxu0 %v1126
        %1144 = vmatprep.subr.bf16.mxu0 0
        %1145 = vmatpush1.bf16.msra.mxu0 %v1127
        %1146 = vmatprep.subr.bf16.mxu0 0
        %1147 = vmatpush1.bf16.msra.mxu0 %v1128
        %1148 = vmatprep.subr.bf16.mxu0 0
        %1149 = vmatpush1.bf16.msra.mxu0 %v1129
        %1150 = vmatprep.subr.bf16.mxu0 0
        %1151 = vmatpush1.bf16.msra.mxu0 %v1130
        %1152 = vmatprep.subr.bf16.mxu0 0
        %1153 = vmatpush1.bf16.msra.mxu0 %v1131
        %1154 = vmatprep.subr.bf16.mxu0 0
        %1155 = vmatpush1.bf16.msra.mxu0 %v1132
        %1156 = vmatprep.subr.bf16.mxu0 0
        %1157 = vmatpush1.bf16.msra.mxu0 %v1133
        %1158 = vmatprep.subr.bf16.mxu0 0
        %1159 = vmatpush1.bf16.msra.mxu0 0
        %1160 = vmatprep.subr.bf16.mxu0 0
        %1161 = vmatpush1.bf16.msra.mxu0 0
        %1162 = vmatprep.subr.bf16.mxu0 0
        %1163 = vmatpush1.bf16.msra.mxu0 0
        %1164 = vmatprep.subr.bf16.mxu0 0
        %1165 = vmatpush1.bf16.msra.mxu0 0
        %1166 = vmatprep.subr.bf16.mxu0 0
        %1167 = vmatpush1.bf16.msra.mxu0 0
        %1168 = vmatprep.subr.bf16.mxu0 0
        %1169 = vmatpush1.bf16.msra.mxu0 0
        %1170 = vmatprep.subr.bf16.mxu0 0
        %1171 = vmatpush1.bf16.msra.mxu0 0
        %1172 = vmatprep.subr.bf16.mxu0 0
        %1173 = vmatpush1.bf16.msra.mxu0 0
        %1174 = vmatprep.mubr.bf16.mxu0 0
        %1175 = vmatmul.mubr.bf16.gmra.mrb[0].mxu0 %v1070
        %v1176 = vpop.f32.mrb[0].mxu0
        %v1177 = vadd.f32 %v1092, %v1176
        %v1178 = vpop.f32.mrb[0].mxu0
        %v1179 = vpop.f32.mrb[0].mxu0
        %v1180 = vadd.f32 %v1092, %v1179
        %v1181 = vpop.f32.mrb[0].mxu0
        %1182 = vdwg.mxu0
        %v1183 = vmul.f32 %v1177, 0.17677669
        %v1184 = vmul.f32 %v1180, 0.17677669
        %v1185 = vpack.c.bf16 %v1184, %v1183
        loop: start=0, step=1, limit=2
        $region168: #{tpu_custom_call.1} parent=87 // loop_pre_header
          _
        $region169: #{tpu_custom_call.1} parent=87 // loop_header
          %s1187 = sphi 0, %s1191
          %p1188 = scmp.ge.s32.totalorder %s1187, 2
          %v1192 = vphi -inf, %v1284
          %v1193 = vphi -inf, %v1285
          %v1194 = vphi 0.0, %v1306
          %v1195 = vphi 0.0, %v1307
          %v1196 = vphi 0.0, %v1355
          %v1197 = vphi 0.0, %v1356
          %v1198 = vphi -inf, %v1422
          %v1199 = vphi -inf, %v1423
          %v1200 = vphi 0.0, %v1444
          %v1201 = vphi 0.0, %v1445
          %v1202 = vphi 0.0, %v1501
          %v1203 = vphi 0.0, %v1502
          %v1204 = vphi -inf, %v1565
          %v1205 = vphi -inf, %v1566
          %v1206 = vphi 0.0, %v1587
          %v1207 = vphi 0.0, %v1588
          %v1208 = vphi 0.0, %v1642
          %v1209 = vphi 0.0, %v1643
          %v1210 = vphi -inf, %v1706
          %v1211 = vphi -inf, %v1707
          %v1212 = vphi 0.0, %v1728
          %v1213 = vphi 0.0, %v1729
          %v1214 = vphi 0.0, %v1783
          %v1215 = vphi 0.0, %v1784
        $region170: #{tpu_custom_call.1} parent=87 // loop_header_branch
          %1190 = sbr.rel (%p1188) target = $region174
        $region171: #{tpu_custom_call.1} parent=87 // loop_body
          %s1216 = smul.u32 %s1187, 32
          %s1217 = sshra.s32 %s1216, 4
          %s1218 = sand.u32 %s1216, 15
          %s1219 = smul.addr %s1217, 8
          %s1220 = scalar_lea.vmem [#allocation2], %s1219
          %v1221 = vld [vmem:[%s1220] sm:$0xff]
          %v1222 = vld [vmem:[%s1220 + $0x8] sm:$0xff]
          %s1223 = smul.addr %s1217, 8
          %s1224 = scalar_lea.vmem [#allocation3], %s1223
          %v1225 = vld [vmem:[%s1224] sm:$0xff]
          %v1226 = vld [vmem:[%s1224 + $0x8] sm:$0xff]
          %vm1227 = vcmask 261120
          %v1229 = vsel %vm1227, %v1185, 0
          %v1232 = vsel %vm1227, %v1221, 0
          %v1235 = vsel %vm1227, %v1222, 0
          %1237 = vmatprep.subr.bf16.mxu0 0
          %1238 = vmatpush1.bf16.xpose.msra.mxu0 %v1232
          %1239 = vmatprep.subr.bf16.mxu0 0
          %1240 = vmatpush1.bf16.xpose.msra.mxu0 %v1235
          %1241 = vmatprep.subr.bf16.mxu0 0
          %1242 = vmatpush1.bf16.xpose.msra.mxu0 0
          %1243 = vmatprep.subr.bf16.mxu0 0
          %1244 = vmatpush1.bf16.xpose.msra.mxu0 0
          %1245 = vmatprep.subr.bf16.mxu0 0
          %1246 = vmatpush1.bf16.xpose.msra.mxu0 0
          %1247 = vmatprep.subr.bf16.mxu0 0
          %1248 = vmatpush1.bf16.xpose.msra.mxu0 0
          %1249 = vmatprep.subr.bf16.mxu0 0
          %1250 = vmatpush1.bf16.xpose.msra.mxu0 0
          %1251 = vmatprep.subr.bf16.mxu0 0
          %1252 = vmatpush1.bf16.xpose.msra.mxu0 0
          %1253 = vmatprep.subr.bf16.mxu0 0
          %1254 = vmatpush1.bf16.xpose.msra.mxu0 0
          %1255 = vmatprep.subr.bf16.mxu0 0
          %1256 = vmatpush1.bf16.xpose.msra.mxu0 0
          %1257 = vmatprep.subr.bf16.mxu0 0
          %1258 = vmatpush1.bf16.xpose.msra.mxu0 0
          %1259 = vmatprep.subr.bf16.mxu0 0
          %1260 = vmatpush1.bf16.xpose.msra.mxu0 0
          %1261 = vmatprep.subr.bf16.mxu0 0
          %1262 = vmatpush1.bf16.xpose.msra.mxu0 0
          %1263 = vmatprep.subr.bf16.mxu0 0
          %1264 = vmatpush1.bf16.xpose.msra.mxu0 0
          %1265 = vmatprep.subr.bf16.mxu0 0
          %1266 = vmatpush1.bf16.xpose.msra.mxu0 0
          %1267 = vmatprep.subr.bf16.mxu0 0
          %1268 = vmatpush1.bf16.xpose.msra.mxu0 0
          %1269 = vmatprep.mubr.bf16.mxu0 0
          %1270 = vmatmul.mubr.bf16.gmra.mrb[0].mxu0 %v1229
          %v1271 = vpop.f32.mrb[0].mxu0
          %v1272 = vadd.f32 0.0, %v1271
          %v1273 = vpop.f32.mrb[0].mxu0
          %v1274 = vpop.f32.mrb[0].mxu0
          %v1275 = vadd.f32 0.0, %v1274
          %v1276 = vpop.f32.mrb[0].mxu0
          %1277 = vdwg.mxu0
          %v1278 = vsel %vm1227, %v1272, -inf
          %1279 = vmax.xlane.f32.xlu0 %v1278
          %v1280 = vpop.xlane.xlu0 %1279
          %v1281 = vsel %vm1227, %v1275, -inf
          %1282 = vmax.xlane.f32.xlu0 %v1281
          %v1283 = vpop.xlane.xlu0 %1282
          %v1284 = vmax.f32 %v1192, %v1280
          %v1285 = vmax.f32 %v1193, %v1283
          %v1286 = vsub.f32 %v1192, %v1284
          %v1287 = vsub.f32 %v1193, %v1285
          %v1288 = vmul.f32 %v1286, 1.442695
          %v1289 = vpow.pop %v1288
          %v1290 = vmul.f32 %v1287, 1.442695
          %v1291 = vpow.pop %v1290
          %v1292 = vsub.f32 %v1272, %v1284
          %v1293 = vsub.f32 %v1275, %v1285
          %v1294 = vmul.f32 %v1292, 1.442695
          %v1295 = vpow.pop %v1294
          %v1296 = vmul.f32 %v1293, 1.442695
          %v1297 = vpow.pop %v1296
          %v1298 = vmul.f32 %v1289, %v1194
          %v1299 = vmul.f32 %v1291, %v1195
          %v1300 = vsel %vm1227, %v1295, 0.0
          %1301 = vadd.xlane.f32.xlu0 %v1300
          %v1302 = vpop.xlane.xlu0 %1301
          %v1303 = vsel %vm1227, %v1297, 0.0
          %1304 = vadd.xlane.f32.xlu0 %v1303
          %v1305 = vpop.xlane.xlu0 %1304
          %v1306 = vadd.f32 %v1298, %v1302
          %v1307 = vadd.f32 %v1299, %v1305
          %v1308 = vmul.f32 %v1289, %v1196
          %v1309 = vmul.f32 %v1291, %v1197
          %v1310 = vpack.c.bf16 %v1297, %v1295
          %v1312 = vsel %vm1227, %v1310, 0
          %1314 = vmatprep.subr.bf16.mxu0 0
          %1315 = vmatpush1.bf16.msra.mxu0 %v1225
          %1316 = vmatprep.subr.bf16.mxu0 0
          %1317 = vmatpush1.bf16.msra.mxu0 %v1226
          %1318 = vmatprep.subr.bf16.mxu0 0
          %1319 = vmatpush1.bf16.msra.mxu0 0
          %1320 = vmatprep.subr.bf16.mxu0 0
          %1321 = vmatpush1.bf16.msra.mxu0 0
          %1322 = vmatprep.subr.bf16.mxu0 0
          %1323 = vmatpush1.bf16.msra.mxu0 0
          %1324 = vmatprep.subr.bf16.mxu0 0
          %1325 = vmatpush1.bf16.msra.mxu0 0
          %1326 = vmatprep.subr.bf16.mxu0 0
          %1327 = vmatpush1.bf16.msra.mxu0 0
          %1328 = vmatprep.subr.bf16.mxu0 0
          %1329 = vmatpush1.bf16.msra.mxu0 0
          %1330 = vmatprep.subr.bf16.mxu0 0
          %1331 = vmatpush1.bf16.msra.mxu0 0
          %1332 = vmatprep.subr.bf16.mxu0 0
          %1333 = vmatpush1.bf16.msra.mxu0 0
          %1334 = vmatprep.subr.bf16.mxu0 0
          %1335 = vmatpush1.bf16.msra.mxu0 0
          %1336 = vmatprep.subr.bf16.mxu0 0
          %1337 = vmatpush1.bf16.msra.mxu0 0
          %1338 = vmatprep.subr.bf16.mxu0 0
          %1339 = vmatpush1.bf16.msra.mxu0 0
          %1340 = vmatprep.subr.bf16.mxu0 0
          %1341 = vmatpush1.bf16.msra.mxu0 0
          %1342 = vmatprep.subr.bf16.mxu0 0
          %1343 = vmatpush1.bf16.msra.mxu0 0
          %1344 = vmatprep.subr.bf16.mxu0 0
          %1345 = vmatpush1.bf16.msra.mxu0 0
          %1346 = vmatprep.mubr.bf16.mxu0 0
          %1347 = vmatmul.mubr.bf16.gmra.mrb[0].mxu0 %v1312
          %v1348 = vpop.f32.mrb[0].mxu0
          %v1349 = vadd.f32 0.0, %v1348
          %v1350 = vpop.f32.mrb[0].mxu0
          %v1351 = vpop.f32.mrb[0].mxu0
          %v1352 = vadd.f32 0.0, %v1351
          %v1353 = vpop.f32.mrb[0].mxu0
          %1354 = vdwg.mxu0
          %v1355 = vadd.f32 %v1308, %v1349
          %v1356 = vadd.f32 %v1309, %v1352
          %1358 = vrot.lane.b32.xlu0 %v1185, 96
          %v1359 = vpop.permute.xlu0 %1358
          %1362 = vrot.lane.b32.xlu0 %v1221, 96
          %v1363 = vpop.permute.xlu0 %1362
          %1364 = vrot.lane.b32.xlu0 %v1222, 96
          %v1365 = vpop.permute.xlu0 %1364
          %v1367 = vsel %vm1227, %v1359, 0
          %v1370 = vsel %vm1227, %v1363, 0
          %v1373 = vsel %vm1227, %v1365, 0
          %1375 = vmatprep.subr.bf16.mxu0 0
          %1376 = vmatpush1.bf16.xpose.msra.mxu0 %v1370
          %1377 = vmatprep.subr.bf16.mxu0 0
          %1378 = vmatpush1.bf16.xpose.msra.mxu0 %v1373
          %1379 = vmatprep.subr.bf16.mxu0 0
          %1380 = vmatpush1.bf16.xpose.msra.mxu0 0
          %1381 = vmatprep.subr.bf16.mxu0 0
          %1382 = vmatpush1.bf16.xpose.msra.mxu0 0
          %1383 = vmatprep.subr.bf16.mxu0 0
          %1384 = vmatpush1.bf16.xpose.msra.mxu0 0
          %1385 = vmatprep.subr.bf16.mxu0 0
          %1386 = vmatpush1.bf16.xpose.msra.mxu0 0
          %1387 = vmatprep.subr.bf16.mxu0 0
          %1388 = vmatpush1.bf16.xpose.msra.mxu0 0
          %1389 = vmatprep.subr.bf16.mxu0 0
          %1390 = vmatpush1.bf16.xpose.msra.mxu0 0
          %1391 = vmatprep.subr.bf16.mxu0 0
          %1392 = vmatpush1.bf16.xpose.msra.mxu0 0
          %1393 = vmatprep.subr.bf16.mxu0 0
          %1394 = vmatpush1.bf16.xpose.msra.mxu0 0
          %1395 = vmatprep.subr.bf16.mxu0 0
          %1396 = vmatpush1.bf16.xpose.msra.mxu0 0
          %1397 = vmatprep.subr.bf16.mxu0 0
          %1398 = vmatpush1.bf16.xpose.msra.mxu0 0
          %1399 = vmatprep.subr.bf16.mxu0 0
          %1400 = vmatpush1.bf16.xpose.msra.mxu0 0
          %1401 = vmatprep.subr.bf16.mxu0 0
          %1402 = vmatpush1.bf16.xpose.msra.mxu0 0
          %1403 = vmatprep.subr.bf16.mxu0 0
          %1404 = vmatpush1.bf16.xpose.msra.mxu0 0
          %1405 = vmatprep.subr.bf16.mxu0 0
          %1406 = vmatpush1.bf16.xpose.msra.mxu0 0
          %1407 = vmatprep.mubr.bf16.mxu0 0
          %1408 = vmatmul.mubr.bf16.gmra.mrb[0].mxu0 %v1367
          %v1409 = vpop.f32.mrb[0].mxu0
          %v1410 = vadd.f32 0.0, %v1409
          %v1411 = vpop.f32.mrb[0].mxu0
          %v1412 = vpop.f32.mrb[0].mxu0
          %v1413 = vadd.f32 0.0, %v1412
          %v1414 = vpop.f32.mrb[0].mxu0
          %1415 = vdwg.mxu0
          %v1416 = vsel %vm1227, %v1410, -inf
          %1417 = vmax.xlane.f32.xlu0 %v1416
          %v1418 = vpop.xlane.xlu0 %1417
          %v1419 = vsel %vm1227, %v1413, -inf
          %1420 = vmax.xlane.f32.xlu0 %v1419
          %v1421 = vpop.xlane.xlu0 %1420
          %v1422 = vmax.f32 %v1198, %v1418
          %v1423 = vmax.f32 %v1199, %v1421
          %v1424 = vsub.f32 %v1198, %v1422
          %v1425 = vsub.f32 %v1199, %v1423
          %v1426 = vmul.f32 %v1424, 1.442695
          %v1427 = vpow.pop %v1426
          %v1428 = vmul.f32 %v1425, 1.442695
          %v1429 = vpow.pop %v1428
          %v1430 = vsub.f32 %v1410, %v1422
          %v1431 = vsub.f32 %v1413, %v1423
          %v1432 = vmul.f32 %v1430, 1.442695
          %v1433 = vpow.pop %v1432
          %v1434 = vmul.f32 %v1431, 1.442695
          %v1435 = vpow.pop %v1434
          %v1436 = vmul.f32 %v1427, %v1200
          %v1437 = vmul.f32 %v1429, %v1201
          %v1438 = vsel %vm1227, %v1433, 0.0
          %1439 = vadd.xlane.f32.xlu0 %v1438
          %v1440 = vpop.xlane.xlu0 %1439
          %v1441 = vsel %vm1227, %v1435, 0.0
          %1442 = vadd.xlane.f32.xlu0 %v1441
          %v1443 = vpop.xlane.xlu0 %1442
          %v1444 = vadd.f32 %v1436, %v1440
          %v1445 = vadd.f32 %v1437, %v1443
          %v1446 = vmul.f32 %v1427, %v1202
          %v1447 = vmul.f32 %v1429, %v1203
          %v1448 = vpack.c.bf16 %v1435, %v1433
          %1451 = vrot.lane.b32.xlu0 %v1225, 96
          %v1452 = vpop.permute.xlu0 %1451
          %1453 = vrot.lane.b32.xlu0 %v1226, 96
          %v1454 = vpop.permute.xlu0 %1453
          %v1458 = vsel %vm1227, %v1448, 0
          %1460 = vmatprep.subr.bf16.mxu0 0
          %1461 = vmatpush1.bf16.msra.mxu0 %v1452
          %1462 = vmatprep.subr.bf16.mxu0 0
          %1463 = vmatpush1.bf16.msra.mxu0 %v1454
          %1464 = vmatprep.subr.bf16.mxu0 0
          %1465 = vmatpush1.bf16.msra.mxu0 0
          %1466 = vmatprep.subr.bf16.mxu0 0
          %1467 = vmatpush1.bf16.msra.mxu0 0
          %1468 = vmatprep.subr.bf16.mxu0 0
          %1469 = vmatpush1.bf16.msra.mxu0 0
          %1470 = vmatprep.subr.bf16.mxu0 0
          %1471 = vmatpush1.bf16.msra.mxu0 0
          %1472 = vmatprep.subr.bf16.mxu0 0
          %1473 = vmatpush1.bf16.msra.mxu0 0
          %1474 = vmatprep.subr.bf16.mxu0 0
          %1475 = vmatpush1.bf16.msra.mxu0 0
          %1476 = vmatprep.subr.bf16.mxu0 0
          %1477 = vmatpush1.bf16.msra.mxu0 0
          %1478 = vmatprep.subr.bf16.mxu0 0
          %1479 = vmatpush1.bf16.msra.mxu0 0
          %1480 = vmatprep.subr.bf16.mxu0 0
          %1481 = vmatpush1.bf16.msra.mxu0 0
          %1482 = vmatprep.subr.bf16.mxu0 0
          %1483 = vmatpush1.bf16.msra.mxu0 0
          %1484 = vmatprep.subr.bf16.mxu0 0
          %1485 = vmatpush1.bf16.msra.mxu0 0
          %1486 = vmatprep.subr.bf16.mxu0 0
          %1487 = vmatpush1.bf16.msra.mxu0 0
          %1488 = vmatprep.subr.bf16.mxu0 0
          %1489 = vmatpush1.bf16.msra.mxu0 0
          %1490 = vmatprep.subr.bf16.mxu0 0
          %1491 = vmatpush1.bf16.msra.mxu0 0
          %1492 = vmatprep.mubr.bf16.mxu0 0
          %1493 = vmatmul.mubr.bf16.gmra.mrb[0].mxu0 %v1458
          %v1494 = vpop.f32.mrb[0].mxu0
          %v1495 = vadd.f32 0.0, %v1494
          %v1496 = vpop.f32.mrb[0].mxu0
          %v1497 = vpop.f32.mrb[0].mxu0
          %v1498 = vadd.f32 0.0, %v1497
          %v1499 = vpop.f32.mrb[0].mxu0
          %1500 = vdwg.mxu0
          %v1501 = vadd.f32 %v1446, %v1495
          %v1502 = vadd.f32 %v1447, %v1498
          %1503 = vrot.lane.b32.xlu0 %v1185, 64
          %v1504 = vpop.permute.xlu0 %1503
          %1505 = vrot.lane.b32.xlu0 %v1221, 64
          %v1506 = vpop.permute.xlu0 %1505
          %1507 = vrot.lane.b32.xlu0 %v1222, 64
          %v1508 = vpop.permute.xlu0 %1507
          %v1510 = vsel %vm1227, %v1504, 0
          %v1513 = vsel %vm1227, %v1506, 0
          %v1516 = vsel %vm1227, %v1508, 0
          %1518 = vmatprep.subr.bf16.mxu0 0
          %1519 = vmatpush1.bf16.xpose.msra.mxu0 %v1513
          %1520 = vmatprep.subr.bf16.mxu0 0
          %1521 = vmatpush1.bf16.xpose.msra.mxu0 %v1516
          %1522 = vmatprep.subr.bf16.mxu0 0
          %1523 = vmatpush1.bf16.xpose.msra.mxu0 0
          %1524 = vmatprep.subr.bf16.mxu0 0
          %1525 = vmatpush1.bf16.xpose.msra.mxu0 0
          %1526 = vmatprep.subr.bf16.mxu0 0
          %1527 = vmatpush1.bf16.xpose.msra.mxu0 0
          %1528 = vmatprep.subr.bf16.mxu0 0
          %1529 = vmatpush1.bf16.xpose.msra.mxu0 0
          %1530 = vmatprep.subr.bf16.mxu0 0
          %1531 = vmatpush1.bf16.xpose.msra.mxu0 0
          %1532 = vmatprep.subr.bf16.mxu0 0
          %1533 = vmatpush1.bf16.xpose.msra.mxu0 0
          %1534 = vmatprep.subr.bf16.mxu0 0
          %1535 = vmatpush1.bf16.xpose.msra.mxu0 0
          %1536 = vmatprep.subr.bf16.mxu0 0
          %1537 = vmatpush1.bf16.xpose.msra.mxu0 0
          %1538 = vmatprep.subr.bf16.mxu0 0
          %1539 = vmatpush1.bf16.xpose.msra.mxu0 0
          %1540 = vmatprep.subr.bf16.mxu0 0
          %1541 = vmatpush1.bf16.xpose.msra.mxu0 0
          %1542 = vmatprep.subr.bf16.mxu0 0
          %1543 = vmatpush1.bf16.xpose.msra.mxu0 0
          %1544 = vmatprep.subr.bf16.mxu0 0
          %1545 = vmatpush1.bf16.xpose.msra.mxu0 0
          %1546 = vmatprep.subr.bf16.mxu0 0
          %1547 = vmatpush1.bf16.xpose.msra.mxu0 0
          %1548 = vmatprep.subr.bf16.mxu0 0
          %1549 = vmatpush1.bf16.xpose.msra.mxu0 0
          %1550 = vmatprep.mubr.bf16.mxu0 0
          %1551 = vmatmul.mubr.bf16.gmra.mrb[0].mxu0 %v1510
          %v1552 = vpop.f32.mrb[0].mxu0
          %v1553 = vadd.f32 0.0, %v1552
          %v1554 = vpop.f32.mrb[0].mxu0
          %v1555 = vpop.f32.mrb[0].mxu0
          %v1556 = vadd.f32 0.0, %v1555
          %v1557 = vpop.f32.mrb[0].mxu0
          %1558 = vdwg.mxu0
          %v1559 = vsel %vm1227, %v1553, -inf
          %1560 = vmax.xlane.f32.xlu0 %v1559
          %v1561 = vpop.xlane.xlu0 %1560
          %v1562 = vsel %vm1227, %v1556, -inf
          %1563 = vmax.xlane.f32.xlu0 %v1562
          %v1564 = vpop.xlane.xlu0 %1563
          %v1565 = vmax.f32 %v1204, %v1561
          %v1566 = vmax.f32 %v1205, %v1564
          %v1567 = vsub.f32 %v1204, %v1565
          %v1568 = vsub.f32 %v1205, %v1566
          %v1569 = vmul.f32 %v1567, 1.442695
          %v1570 = vpow.pop %v1569
          %v1571 = vmul.f32 %v1568, 1.442695
          %v1572 = vpow.pop %v1571
          %v1573 = vsub.f32 %v1553, %v1565
          %v1574 = vsub.f32 %v1556, %v1566
          %v1575 = vmul.f32 %v1573, 1.442695
          %v1576 = vpow.pop %v1575
          %v1577 = vmul.f32 %v1574, 1.442695
          %v1578 = vpow.pop %v1577
          %v1579 = vmul.f32 %v1570, %v1206
          %v1580 = vmul.f32 %v1572, %v1207
          %v1581 = vsel %vm1227, %v1576, 0.0
          %1582 = vadd.xlane.f32.xlu0 %v1581
          %v1583 = vpop.xlane.xlu0 %1582
          %v1584 = vsel %vm1227, %v1578, 0.0
          %1585 = vadd.xlane.f32.xlu0 %v1584
          %v1586 = vpop.xlane.xlu0 %1585
          %v1587 = vadd.f32 %v1579, %v1583
          %v1588 = vadd.f32 %v1580, %v1586
          %v1589 = vmul.f32 %v1570, %v1208
          %v1590 = vmul.f32 %v1572, %v1209
          %v1591 = vpack.c.bf16 %v1578, %v1576
          %1592 = vrot.lane.b32.xlu0 %v1225, 64
          %v1593 = vpop.permute.xlu0 %1592
          %1594 = vrot.lane.b32.xlu0 %v1226, 64
          %v1595 = vpop.permute.xlu0 %1594
          %v1599 = vsel %vm1227, %v1591, 0
          %1601 = vmatprep.subr.bf16.mxu0 0
          %1602 = vmatpush1.bf16.msra.mxu0 %v1593
          %1603 = vmatprep.subr.bf16.mxu0 0
          %1604 = vmatpush1.bf16.msra.mxu0 %v1595
          %1605 = vmatprep.subr.bf16.mxu0 0
          %1606 = vmatpush1.bf16.msra.mxu0 0
          %1607 = vmatprep.subr.bf16.mxu0 0
          %1608 = vmatpush1.bf16.msra.mxu0 0
          %1609 = vmatprep.subr.bf16.mxu0 0
          %1610 = vmatpush1.bf16.msra.mxu0 0
          %1611 = vmatprep.subr.bf16.mxu0 0
          %1612 = vmatpush1.bf16.msra.mxu0 0
          %1613 = vmatprep.subr.bf16.mxu0 0
          %1614 = vmatpush1.bf16.msra.mxu0 0
          %1615 = vmatprep.subr.bf16.mxu0 0
          %1616 = vmatpush1.bf16.msra.mxu0 0
          %1617 = vmatprep.subr.bf16.mxu0 0
          %1618 = vmatpush1.bf16.msra.mxu0 0
          %1619 = vmatprep.subr.bf16.mxu0 0
          %1620 = vmatpush1.bf16.msra.mxu0 0
          %1621 = vmatprep.subr.bf16.mxu0 0
          %1622 = vmatpush1.bf16.msra.mxu0 0
          %1623 = vmatprep.subr.bf16.mxu0 0
          %1624 = vmatpush1.bf16.msra.mxu0 0
          %1625 = vmatprep.subr.bf16.mxu0 0
          %1626 = vmatpush1.bf16.msra.mxu0 0
          %1627 = vmatprep.subr.bf16.mxu0 0
          %1628 = vmatpush1.bf16.msra.mxu0 0
          %1629 = vmatprep.subr.bf16.mxu0 0
          %1630 = vmatpush1.bf16.msra.mxu0 0
          %1631 = vmatprep.subr.bf16.mxu0 0
          %1632 = vmatpush1.bf16.msra.mxu0 0
          %1633 = vmatprep.mubr.bf16.mxu0 0
          %1634 = vmatmul.mubr.bf16.gmra.mrb[0].mxu0 %v1599
          %v1635 = vpop.f32.mrb[0].mxu0
          %v1636 = vadd.f32 0.0, %v1635
          %v1637 = vpop.f32.mrb[0].mxu0
          %v1638 = vpop.f32.mrb[0].mxu0
          %v1639 = vadd.f32 0.0, %v1638
          %v1640 = vpop.f32.mrb[0].mxu0
          %1641 = vdwg.mxu0
          %v1642 = vadd.f32 %v1589, %v1636
          %v1643 = vadd.f32 %v1590, %v1639
          %1644 = vrot.lane.b32.xlu0 %v1185, 32
          %v1645 = vpop.permute.xlu0 %1644
          %1646 = vrot.lane.b32.xlu0 %v1221, 32
          %v1647 = vpop.permute.xlu0 %1646
          %1648 = vrot.lane.b32.xlu0 %v1222, 32
          %v1649 = vpop.permute.xlu0 %1648
          %v1651 = vsel %vm1227, %v1645, 0
          %v1654 = vsel %vm1227, %v1647, 0
          %v1657 = vsel %vm1227, %v1649, 0
          %1659 = vmatprep.subr.bf16.mxu0 0
          %1660 = vmatpush1.bf16.xpose.msra.mxu0 %v1654
          %1661 = vmatprep.subr.bf16.mxu0 0
          %1662 = vmatpush1.bf16.xpose.msra.mxu0 %v1657
          %1663 = vmatprep.subr.bf16.mxu0 0
          %1664 = vmatpush1.bf16.xpose.msra.mxu0 0
          %1665 = vmatprep.subr.bf16.mxu0 0
          %1666 = vmatpush1.bf16.xpose.msra.mxu0 0
          %1667 = vmatprep.subr.bf16.mxu0 0
          %1668 = vmatpush1.bf16.xpose.msra.mxu0 0
          %1669 = vmatprep.subr.bf16.mxu0 0
          %1670 = vmatpush1.bf16.xpose.msra.mxu0 0
          %1671 = vmatprep.subr.bf16.mxu0 0
          %1672 = vmatpush1.bf16.xpose.msra.mxu0 0
          %1673 = vmatprep.subr.bf16.mxu0 0
          %1674 = vmatpush1.bf16.xpose.msra.mxu0 0
          %1675 = vmatprep.subr.bf16.mxu0 0
          %1676 = vmatpush1.bf16.xpose.msra.mxu0 0
          %1677 = vmatprep.subr.bf16.mxu0 0
          %1678 = vmatpush1.bf16.xpose.msra.mxu0 0
          %1679 = vmatprep.subr.bf16.mxu0 0
          %1680 = vmatpush1.bf16.xpose.msra.mxu0 0
          %1681 = vmatprep.subr.bf16.mxu0 0
          %1682 = vmatpush1.bf16.xpose.msra.mxu0 0
          %1683 = vmatprep.subr.bf16.mxu0 0
          %1684 = vmatpush1.bf16.xpose.msra.mxu0 0
          %1685 = vmatprep.subr.bf16.mxu0 0
          %1686 = vmatpush1.bf16.xpose.msra.mxu0 0
          %1687 = vmatprep.subr.bf16.mxu0 0
          %1688 = vmatpush1.bf16.xpose.msra.mxu0 0
          %1689 = vmatprep.subr.bf16.mxu0 0
          %1690 = vmatpush1.bf16.xpose.msra.mxu0 0
          %1691 = vmatprep.mubr.bf16.mxu0 0
          %1692 = vmatmul.mubr.bf16.gmra.mrb[0].mxu0 %v1651
          %v1693 = vpop.f32.mrb[0].mxu0
          %v1694 = vadd.f32 0.0, %v1693
          %v1695 = vpop.f32.mrb[0].mxu0
          %v1696 = vpop.f32.mrb[0].mxu0
          %v1697 = vadd.f32 0.0, %v1696
          %v1698 = vpop.f32.mrb[0].mxu0
          %1699 = vdwg.mxu0
          %v1700 = vsel %vm1227, %v1694, -inf
          %1701 = vmax.xlane.f32.xlu0 %v1700
          %v1702 = vpop.xlane.xlu0 %1701
          %v1703 = vsel %vm1227, %v1697, -inf
          %1704 = vmax.xlane.f32.xlu0 %v1703
          %v1705 = vpop.xlane.xlu0 %1704
          %v1706 = vmax.f32 %v1210, %v1702
          %v1707 = vmax.f32 %v1211, %v1705
          %v1708 = vsub.f32 %v1210, %v1706
          %v1709 = vsub.f32 %v1211, %v1707
          %v1710 = vmul.f32 %v1708, 1.442695
          %v1711 = vpow.pop %v1710
          %v1712 = vmul.f32 %v1709, 1.442695
          %v1713 = vpow.pop %v1712
          %v1714 = vsub.f32 %v1694, %v1706
          %v1715 = vsub.f32 %v1697, %v1707
          %v1716 = vmul.f32 %v1714, 1.442695
          %v1717 = vpow.pop %v1716
          %v1718 = vmul.f32 %v1715, 1.442695
          %v1719 = vpow.pop %v1718
          %v1720 = vmul.f32 %v1711, %v1212
          %v1721 = vmul.f32 %v1713, %v1213
          %v1722 = vsel %vm1227, %v1717, 0.0
          %1723 = vadd.xlane.f32.xlu0 %v1722
          %v1724 = vpop.xlane.xlu0 %1723
          %v1725 = vsel %vm1227, %v1719, 0.0
          %1726 = vadd.xlane.f32.xlu0 %v1725
          %v1727 = vpop.xlane.xlu0 %1726
          %v1728 = vadd.f32 %v1720, %v1724
          %v1729 = vadd.f32 %v1721, %v1727
          %v1730 = vmul.f32 %v1711, %v1214
          %v1731 = vmul.f32 %v1713, %v1215
          %v1732 = vpack.c.bf16 %v1719, %v1717
          %1733 = vrot.lane.b32.xlu0 %v1225, 32
          %v1734 = vpop.permute.xlu0 %1733
          %1735 = vrot.lane.b32.xlu0 %v1226, 32
          %v1736 = vpop.permute.xlu0 %1735
          %v1740 = vsel %vm1227, %v1732, 0
          %1742 = vmatprep.subr.bf16.mxu0 0
          %1743 = vmatpush1.bf16.msra.mxu0 %v1734
          %1744 = vmatprep.subr.bf16.mxu0 0
          %1745 = vmatpush1.bf16.msra.mxu0 %v1736
          %1746 = vmatprep.subr.bf16.mxu0 0
          %1747 = vmatpush1.bf16.msra.mxu0 0
          %1748 = vmatprep.subr.bf16.mxu0 0
          %1749 = vmatpush1.bf16.msra.mxu0 0
          %1750 = vmatprep.subr.bf16.mxu0 0
          %1751 = vmatpush1.bf16.msra.mxu0 0
          %1752 = vmatprep.subr.bf16.mxu0 0
          %1753 = vmatpush1.bf16.msra.mxu0 0
          %1754 = vmatprep.subr.bf16.mxu0 0
          %1755 = vmatpush1.bf16.msra.mxu0 0
          %1756 = vmatprep.subr.bf16.mxu0 0
          %1757 = vmatpush1.bf16.msra.mxu0 0
          %1758 = vmatprep.subr.bf16.mxu0 0
          %1759 = vmatpush1.bf16.msra.mxu0 0
          %1760 = vmatprep.subr.bf16.mxu0 0
          %1761 = vmatpush1.bf16.msra.mxu0 0
          %1762 = vmatprep.subr.bf16.mxu0 0
          %1763 = vmatpush1.bf16.msra.mxu0 0
          %1764 = vmatprep.subr.bf16.mxu0 0
          %1765 = vmatpush1.bf16.msra.mxu0 0
          %1766 = vmatprep.subr.bf16.mxu0 0
          %1767 = vmatpush1.bf16.msra.mxu0 0
          %1768 = vmatprep.subr.bf16.mxu0 0
          %1769 = vmatpush1.bf16.msra.mxu0 0
          %1770 = vmatprep.subr.bf16.mxu0 0
          %1771 = vmatpush1.bf16.msra.mxu0 0
          %1772 = vmatprep.subr.bf16.mxu0 0
          %1773 = vmatpush1.bf16.msra.mxu0 0
          %1774 = vmatprep.mubr.bf16.mxu0 0
          %1775 = vmatmul.mubr.bf16.gmra.mrb[0].mxu0 %v1740
          %v1776 = vpop.f32.mrb[0].mxu0
          %v1777 = vadd.f32 0.0, %v1776
          %v1778 = vpop.f32.mrb[0].mxu0
          %v1779 = vpop.f32.mrb[0].mxu0
          %v1780 = vadd.f32 0.0, %v1779
          %v1781 = vpop.f32.mrb[0].mxu0
          %1782 = vdwg.mxu0
          %v1783 = vadd.f32 %v1730, %v1777
          %v1784 = vadd.f32 %v1731, %v1780
        $region172: #{tpu_custom_call.1} parent=87 // loop_footer
          %s1191 = sadd.s32 1, %s1187
        $region173: #{tpu_custom_call.1} parent=87 // loop_footer_branch
          %1186 = sbr.rel target = $region169
        $region174: #{tpu_custom_call.1} parent=87 // loop_exit
          _
        %v1785 = vrcp.pop %v1194
        %v1786 = vrcp.pop %v1195
        %v1787 = vmul.f32 %v1196, %v1785
        %v1788 = vmul.f32 %v1197, %v1786
        %v1789 = vrcp.pop %v1200
        %v1790 = vrcp.pop %v1201
        %v1791 = vmul.f32 %v1202, %v1789
        %v1792 = vmul.f32 %v1203, %v1790
        %v1793 = vrcp.pop %v1206
        %v1794 = vrcp.pop %v1207
        %v1795 = vmul.f32 %v1208, %v1793
        %v1796 = vmul.f32 %v1209, %v1794
        %v1797 = vrcp.pop %v1212
        %v1798 = vrcp.pop %v1213
        %v1799 = vmul.f32 %v1214, %v1797
        %v1800 = vmul.f32 %v1215, %v1798
        %1803 = vrot.lane.b32.xlu0 %v1791, 32
        %v1804 = vpop.permute.xlu0 %1803
        %1805 = vrot.lane.b32.xlu0 %v1792, 32
        %v1806 = vpop.permute.xlu0 %1805
        %1811 = vrot.lane.b32.xlu0 %v1795, 64
        %v1812 = vpop.permute.xlu0 %1811
        %1813 = vrot.lane.b32.xlu0 %v1796, 64
        %v1814 = vpop.permute.xlu0 %1813
        %1819 = vrot.lane.b32.xlu0 %v1799, 96
        %v1820 = vpop.permute.xlu0 %1819
        %1821 = vrot.lane.b32.xlu0 %v1800, 96
        %v1822 = vpop.permute.xlu0 %1821
        %vm1825 = vcmask 261120
        %v1826 = vsel %vm1825, %v1787, %v1804
        %v1827 = vsel %vm1825, %v1788, %v1806
        %vm1828 = vcmask 523264
        %v1829 = vsel %vm1828, %v1826, %v1812
        %v1830 = vsel %vm1828, %v1827, %v1814
        %vm1831 = vcmask 785408
        %v1832 = vsel %vm1831, %v1829, %v1820
        %v1833 = vsel %vm1831, %v1830, %v1822
        %v1834 = vpack.c.bf16 %v1833, %v1832
        %v1835 = vld [vmem:[#allocation16] sm:$0xf]
        %v1836 = vld [vmem:[#allocation16 + $0x4] sm:$0xf]
        %v1837 = vld [vmem:[#allocation16 + $0x8] sm:$0xf]
        %v1838 = vld [vmem:[#allocation16 + $0xc] sm:$0xf]
        %v1839 = vld [vmem:[#allocation16 + $0x10] sm:$0xf]
        %v1840 = vld [vmem:[#allocation16 + $0x14] sm:$0xf]
        %v1841 = vld [vmem:[#allocation16 + $0x18] sm:$0xf]
        %v1842 = vld [vmem:[#allocation16 + $0x1c] sm:$0xf]
        %v1843 = vld [vmem:[#allocation16 + $0x20] sm:$0xf]
        %v1844 = vld [vmem:[#allocation16 + $0x24] sm:$0xf]
        %v1845 = vld [vmem:[#allocation16 + $0x28] sm:$0xf]
        %v1846 = vld [vmem:[#allocation16 + $0x2c] sm:$0xf]
        %v1847 = vld [vmem:[#allocation16 + $0x30] sm:$0xf]
        %v1848 = vld [vmem:[#allocation16 + $0x34] sm:$0xf]
        %v1849 = vld [vmem:[#allocation16 + $0x38] sm:$0xf]
        %v1850 = vld [vmem:[#allocation16 + $0x3c] sm:$0xf]
        %v1851 = vld [vmem:[#allocation18] sm:$0x1]
        %v1853 = vlaneseq
        %v1854 = vshrl.u32 %v1853, 7
        %v1855 = vsub.s32 0, %v1854
        %v1856 = vrot.slane %v1851, %v1855
        %v1874 = vunpack.c.l.b16 %v1835
        %v1875 = vunpack.c.l.b16 %v1836
        %v1876 = vunpack.c.l.b16 %v1837
        %v1877 = vunpack.c.l.b16 %v1838
        %v1878 = vunpack.c.l.b16 %v1839
        %v1879 = vunpack.c.l.b16 %v1840
        %v1880 = vunpack.c.l.b16 %v1841
        %v1881 = vunpack.c.l.b16 %v1842
        %v1882 = vunpack.c.l.b16 %v1843
        %v1883 = vunpack.c.l.b16 %v1844
        %v1884 = vunpack.c.l.b16 %v1845
        %v1885 = vunpack.c.l.b16 %v1846
        %v1886 = vunpack.c.l.b16 %v1847
        %v1887 = vunpack.c.l.b16 %v1848
        %v1888 = vunpack.c.l.b16 %v1849
        %v1889 = vunpack.c.l.b16 %v1850
        %v1890 = vpack.c.b16 %v1875, %v1874
        %v1891 = vpack.c.b16 %v1877, %v1876
        %v1892 = vpack.c.b16 %v1879, %v1878
        %v1893 = vpack.c.b16 %v1881, %v1880
        %v1894 = vpack.c.b16 %v1883, %v1882
        %v1895 = vpack.c.b16 %v1885, %v1884
        %v1896 = vpack.c.b16 %v1887, %v1886
        %v1897 = vpack.c.b16 %v1889, %v1888
        %1906 = vmatprep.subr.bf16.mxu0 0
        %1907 = vmatpush1.bf16.msra.mxu0 %v1890
        %1908 = vmatprep.subr.bf16.mxu0 0
        %1909 = vmatpush1.bf16.msra.mxu0 %v1891
        %1910 = vmatprep.subr.bf16.mxu0 0
        %1911 = vmatpush1.bf16.msra.mxu0 %v1892
        %1912 = vmatprep.subr.bf16.mxu0 0
        %1913 = vmatpush1.bf16.msra.mxu0 %v1893
        %1914 = vmatprep.subr.bf16.mxu0 0
        %1915 = vmatpush1.bf16.msra.mxu0 %v1894
        %1916 = vmatprep.subr.bf16.mxu0 0
        %1917 = vmatpush1.bf16.msra.mxu0 %v1895
        %1918 = vmatprep.subr.bf16.mxu0 0
        %1919 = vmatpush1.bf16.msra.mxu0 %v1896
        %1920 = vmatprep.subr.bf16.mxu0 0
        %1921 = vmatpush1.bf16.msra.mxu0 %v1897
        %1922 = vmatprep.subr.bf16.mxu0 0
        %1923 = vmatpush1.bf16.msra.mxu0 0
        %1924 = vmatprep.subr.bf16.mxu0 0
        %1925 = vmatpush1.bf16.msra.mxu0 0
        %1926 = vmatprep.subr.bf16.mxu0 0
        %1927 = vmatpush1.bf16.msra.mxu0 0
        %1928 = vmatprep.subr.bf16.mxu0 0
        %1929 = vmatpush1.bf16.msra.mxu0 0
        %1930 = vmatprep.subr.bf16.mxu0 0
        %1931 = vmatpush1.bf16.msra.mxu0 0
        %1932 = vmatprep.subr.bf16.mxu0 0
        %1933 = vmatpush1.bf16.msra.mxu0 0
        %1934 = vmatprep.subr.bf16.mxu0 0
        %1935 = vmatpush1.bf16.msra.mxu0 0
        %1936 = vmatprep.subr.bf16.mxu0 0
        %1937 = vmatpush1.bf16.msra.mxu0 0
        %1938 = vmatprep.mubr.bf16.mxu0 0
        %1939 = vmatmul.mubr.bf16.gmra.mrb[0].mxu0 %v1834
        %v1940 = vpop.f32.mrb[0].mxu0
        %v1941 = vadd.f32 %v1856, %v1940
        %v1942 = vpop.f32.mrb[0].mxu0
        %v1943 = vpop.f32.mrb[0].mxu0
        %v1944 = vadd.f32 %v1856, %v1943
        %v1945 = vpop.f32.mrb[0].mxu0
        %1946 = vdwg.mxu0
        %v1947 = vadd.f32 %v1068, %v1941
        %v1948 = vadd.f32 %v1069, %v1944
        %1949 = vadd.xlane.f32.xlu0 %v1947
        %v1950 = vpop.xlane.xlu0 %1949
        %1951 = vadd.xlane.f32.xlu0 %v1948
        %v1952 = vpop.xlane.xlu0 %1951
        %v1953 = vrcp.pop 128.0
        %v1954 = vmul.f32 %v1950, %v1953
        %v1955 = vmul.f32 %v1952, %v1953
        %v1956 = vsub.f32 %v1947, %v1954
        %v1957 = vsub.f32 %v1948, %v1955
        %v1958 = vmul.f32 %v1956, %v1956
        %v1959 = vmul.f32 %v1957, %v1957
        %1960 = vadd.xlane.f32.xlu0 %v1958
        %v1961 = vpop.xlane.xlu0 %1960
        %1962 = vadd.xlane.f32.xlu0 %v1959
        %v1963 = vpop.xlane.xlu0 %1962
        %v1964 = vmul.f32 %v1961, %v1953
        %v1965 = vmul.f32 %v1963, %v1953
        %v1966 = vadd.f32 %v1964, 1e-05
        %v1967 = vadd.f32 %v1965, 1e-05
        %v1968 = vrsqrt.pop %v1966
        %v1969 = vrsqrt.pop %v1967
        %v1970 = vmul.f32 %v1956, %v1968
        %v1971 = vmul.f32 %v1957, %v1969
        %v1972 = vld [vmem:[#allocation19] sm:$0x1]
        %v1974 = vlaneseq
        %v1975 = vshrl.u32 %v1974, 7
        %v1976 = vsub.s32 0, %v1975
        %v1977 = vrot.slane %v1972, %v1976
        %v1979 = vmul.f32 %v1970, %v1977
        %v1980 = vmul.f32 %v1971, %v1977
        %v1981 = vld [vmem:[#allocation21] sm:$0x1]
        %v1983 = vlaneseq
        %v1984 = vshrl.u32 %v1983, 7
        %v1985 = vsub.s32 0, %v1984
        %v1986 = vrot.slane %v1981, %v1985
        %v1988 = vadd.f32 %v1979, %v1986
        %v1989 = vadd.f32 %v1980, %v1986
        %v1990 = vpack.c.bf16 %v1989, %v1988
        %v1991 = vld [vmem:[#allocation22] sm:$0xff]
        %v1992 = vld [vmem:[#allocation22 + $0x8] sm:$0xff]
        %v1993 = vld [vmem:[#allocation22 + $0x10] sm:$0xff]
        %v1994 = vld [vmem:[#allocation22 + $0x18] sm:$0xff]
        %v1995 = vld [vmem:[#allocation22 + $0x20] sm:$0xff]
        %v1996 = vld [vmem:[#allocation22 + $0x28] sm:$0xff]
        %v1997 = vld [vmem:[#allocation22 + $0x30] sm:$0xff]
        %v1998 = vld [vmem:[#allocation22 + $0x38] sm:$0xff]
        %v1999 = vld [vmem:[#allocation22 + $0x40] sm:$0xff]
        %v2000 = vld [vmem:[#allocation22 + $0x48] sm:$0xff]
        %v2001 = vld [vmem:[#allocation22 + $0x50] sm:$0xff]
        %v2002 = vld [vmem:[#allocation22 + $0x58] sm:$0xff]
        %v2003 = vld [vmem:[#allocation22 + $0x60] sm:$0xff]
        %v2004 = vld [vmem:[#allocation22 + $0x68] sm:$0xff]
        %v2005 = vld [vmem:[#allocation22 + $0x70] sm:$0xff]
        %v2006 = vld [vmem:[#allocation22 + $0x78] sm:$0xff]
        %v2007 = vld [vmem:[#allocation22 + $0x80] sm:$0xff]
        %v2008 = vld [vmem:[#allocation22 + $0x88] sm:$0xff]
        %v2009 = vld [vmem:[#allocation22 + $0x90] sm:$0xff]
        %v2010 = vld [vmem:[#allocation22 + $0x98] sm:$0xff]
        %v2011 = vld [vmem:[#allocation22 + $0xa0] sm:$0xff]
        %v2012 = vld [vmem:[#allocation22 + $0xa8] sm:$0xff]
        %v2013 = vld [vmem:[#allocation22 + $0xb0] sm:$0xff]
        %v2014 = vld [vmem:[#allocation22 + $0xb8] sm:$0xff]
        %v2015 = vld [vmem:[#allocation22 + $0xc0] sm:$0xff]
        %v2016 = vld [vmem:[#allocation22 + $0xc8] sm:$0xff]
        %v2017 = vld [vmem:[#allocation22 + $0xd0] sm:$0xff]
        %v2018 = vld [vmem:[#allocation22 + $0xd8] sm:$0xff]
        %v2019 = vld [vmem:[#allocation22 + $0xe0] sm:$0xff]
        %v2020 = vld [vmem:[#allocation22 + $0xe8] sm:$0xff]
        %v2021 = vld [vmem:[#allocation22 + $0xf0] sm:$0xff]
        %v2022 = vld [vmem:[#allocation22 + $0xf8] sm:$0xff]
        %v2023 = vld [vmem:[#allocation24] sm:$0xf]
        %v2025 = vlaneseq
        %v2026 = vshrl.u32 %v2025, 7
        %v2027 = vsub.s32 0, %v2026
        %v2028 = vrot.slane %v2023, %v2027
        %v2029 = vlaneseq
        %v2030 = vshrl.u32 %v2029, 7
        %v2031 = vsub.s32 1, %v2030
        %v2032 = vrot.slane %v2023, %v2031
        %v2033 = vlaneseq
        %v2034 = vshrl.u32 %v2033, 7
        %v2035 = vsub.s32 2, %v2034
        %v2036 = vrot.slane %v2023, %v2035
        %v2037 = vlaneseq
        %v2038 = vshrl.u32 %v2037, 7
        %v2039 = vsub.s32 3, %v2038
        %v2040 = vrot.slane %v2023, %v2039
        %v2077 = vunpack.c.l.b16 %v1991
        %v2078 = vunpack.c.h.b16 %v1991
        %v2079 = vunpack.c.l.b16 %v1992
        %v2080 = vunpack.c.h.b16 %v1992
        %v2081 = vunpack.c.l.b16 %v1993
        %v2082 = vunpack.c.h.b16 %v1993
        %v2083 = vunpack.c.l.b16 %v1994
        %v2084 = vunpack.c.h.b16 %v1994
        %v2085 = vunpack.c.l.b16 %v1995
        %v2086 = vunpack.c.h.b16 %v1995
        %v2087 = vunpack.c.l.b16 %v1996
        %v2088 = vunpack.c.h.b16 %v1996
        %v2089 = vunpack.c.l.b16 %v1997
        %v2090 = vunpack.c.h.b16 %v1997
        %v2091 = vunpack.c.l.b16 %v1998
        %v2092 = vunpack.c.h.b16 %v1998
        %v2093 = vunpack.c.l.b16 %v1999
        %v2094 = vunpack.c.h.b16 %v1999
        %v2095 = vunpack.c.l.b16 %v2000
        %v2096 = vunpack.c.h.b16 %v2000
        %v2097 = vunpack.c.l.b16 %v2001
        %v2098 = vunpack.c.h.b16 %v2001
        %v2099 = vunpack.c.l.b16 %v2002
        %v2100 = vunpack.c.h.b16 %v2002
        %v2101 = vunpack.c.l.b16 %v2003
        %v2102 = vunpack.c.h.b16 %v2003
        %v2103 = vunpack.c.l.b16 %v2004
        %v2104 = vunpack.c.h.b16 %v2004
        %v2105 = vunpack.c.l.b16 %v2005
        %v2106 = vunpack.c.h.b16 %v2005
        %v2107 = vunpack.c.l.b16 %v2006
        %v2108 = vunpack.c.h.b16 %v2006
        %v2109 = vunpack.c.l.b16 %v2007
        %v2110 = vunpack.c.h.b16 %v2007
        %v2111 = vunpack.c.l.b16 %v2008
        %v2112 = vunpack.c.h.b16 %v2008
        %v2113 = vunpack.c.l.b16 %v2009
        %v2114 = vunpack.c.h.b16 %v2009
        %v2115 = vunpack.c.l.b16 %v2010
        %v2116 = vunpack.c.h.b16 %v2010
        %v2117 = vunpack.c.l.b16 %v2011
        %v2118 = vunpack.c.h.b16 %v2011
        %v2119 = vunpack.c.l.b16 %v2012
        %v2120 = vunpack.c.h.b16 %v2012
        %v2121 = vunpack.c.l.b16 %v2013
        %v2122 = vunpack.c.h.b16 %v2013
        %v2123 = vunpack.c.l.b16 %v2014
        %v2124 = vunpack.c.h.b16 %v2014
        %v2125 = vunpack.c.l.b16 %v2015
        %v2126 = vunpack.c.h.b16 %v2015
        %v2127 = vunpack.c.l.b16 %v2016
        %v2128 = vunpack.c.h.b16 %v2016
        %v2129 = vunpack.c.l.b16 %v2017
        %v2130 = vunpack.c.h.b16 %v2017
        %v2131 = vunpack.c.l.b16 %v2018
        %v2132 = vunpack.c.h.b16 %v2018
        %v2133 = vunpack.c.l.b16 %v2019
        %v2134 = vunpack.c.h.b16 %v2019
        %v2135 = vunpack.c.l.b16 %v2020
        %v2136 = vunpack.c.h.b16 %v2020
        %v2137 = vunpack.c.l.b16 %v2021
        %v2138 = vunpack.c.h.b16 %v2021
        %v2139 = vunpack.c.l.b16 %v2022
        %v2140 = vunpack.c.h.b16 %v2022
        %v2141 = vpack.c.b16 %v2081, %v2077
        %v2142 = vpack.c.b16 %v2082, %v2078
        %v2143 = vpack.c.b16 %v2083, %v2079
        %v2144 = vpack.c.b16 %v2084, %v2080
        %v2145 = vpack.c.b16 %v2089, %v2085
        %v2146 = vpack.c.b16 %v2090, %v2086
        %v2147 = vpack.c.b16 %v2091, %v2087
        %v2148 = vpack.c.b16 %v2092, %v2088
        %v2149 = vpack.c.b16 %v2097, %v2093
        %v2150 = vpack.c.b16 %v2098, %v2094
        %v2151 = vpack.c.b16 %v2099, %v2095
        %v2152 = vpack.c.b16 %v2100, %v2096
        %v2153 = vpack.c.b16 %v2105, %v2101
        %v2154 = vpack.c.b16 %v2106, %v2102
        %v2155 = vpack.c.b16 %v2107, %v2103
        %v2156 = vpack.c.b16 %v2108, %v2104
        %v2157 = vpack.c.b16 %v2113, %v2109
        %v2158 = vpack.c.b16 %v2114, %v2110
        %v2159 = vpack.c.b16 %v2115, %v2111
        %v2160 = vpack.c.b16 %v2116, %v2112
        %v2161 = vpack.c.b16 %v2121, %v2117
        %v2162 = vpack.c.b16 %v2122, %v2118
        %v2163 = vpack.c.b16 %v2123, %v2119
        %v2164 = vpack.c.b16 %v2124, %v2120
        %v2165 = vpack.c.b16 %v2129, %v2125
        %v2166 = vpack.c.b16 %v2130, %v2126
        %v2167 = vpack.c.b16 %v2131, %v2127
        %v2168 = vpack.c.b16 %v2132, %v2128
        %v2169 = vpack.c.b16 %v2137, %v2133
        %v2170 = vpack.c.b16 %v2138, %v2134
        %v2171 = vpack.c.b16 %v2139, %v2135
        %v2172 = vpack.c.b16 %v2140, %v2136
        %2205 = vmatprep.subr.bf16.mxu0 %v2142
        %2206 = vmatpush1.bf16.msra.mxu0 %v2141
        %2207 = vmatprep.subr.bf16.mxu0 %v2146
        %2208 = vmatpush1.bf16.msra.mxu0 %v2145
        %2209 = vmatprep.subr.bf16.mxu0 %v2150
        %2210 = vmatpush1.bf16.msra.mxu0 %v2149
        %2211 = vmatprep.subr.bf16.mxu0 %v2154
        %2212 = vmatpush1.bf16.msra.mxu0 %v2153
        %2213 = vmatprep.subr.bf16.mxu0 %v2158
        %2214 = vmatpush1.bf16.msra.mxu0 %v2157
        %2215 = vmatprep.subr.bf16.mxu0 %v2162
        %2216 = vmatpush1.bf16.msra.mxu0 %v2161
        %2217 = vmatprep.subr.bf16.mxu0 %v2166
        %2218 = vmatpush1.bf16.msra.mxu0 %v2165
        %2219 = vmatprep.subr.bf16.mxu0 %v2170
        %2220 = vmatpush1.bf16.msra.mxu0 %v2169
        %2221 = vmatprep.subr.bf16.mxu0 0
        %2222 = vmatpush1.bf16.msra.mxu0 0
        %2223 = vmatprep.subr.bf16.mxu0 0
        %2224 = vmatpush1.bf16.msra.mxu0 0
        %2225 = vmatprep.subr.bf16.mxu0 0
        %2226 = vmatpush1.bf16.msra.mxu0 0
        %2227 = vmatprep.subr.bf16.mxu0 0
        %2228 = vmatpush1.bf16.msra.mxu0 0
        %2229 = vmatprep.subr.bf16.mxu0 0
        %2230 = vmatpush1.bf16.msra.mxu0 0
        %2231 = vmatprep.subr.bf16.mxu0 0
        %2232 = vmatpush1.bf16.msra.mxu0 0
        %2233 = vmatprep.subr.bf16.mxu0 0
        %2234 = vmatpush1.bf16.msra.mxu0 0
        %2235 = vmatprep.subr.bf16.mxu0 0
        %2236 = vmatpush1.bf16.msra.mxu0 0
        %2237 = vmatprep.mubr.bf16.mxu0 0
        %2238 = vmatmul.mubr.bf16.gmra.mrb[0].mxu0 %v1990
        %v2239 = vpop.f32.mrb[0].mxu0
        %v2240 = vadd.f32 %v2028, %v2239
        %v2241 = vpop.f32.mrb[0].mxu0
        %v2242 = vadd.f32 %v2032, %v2241
        %v2243 = vpop.f32.mrb[0].mxu0
        %v2244 = vadd.f32 %v2028, %v2243
        %v2245 = vpop.f32.mrb[0].mxu0
        %v2246 = vadd.f32 %v2032, %v2245
        %2247 = vdwg.mxu0
        %2248 = vmatprep.subr.bf16.mxu0 %v2144
        %2249 = vmatpush1.bf16.msra.mxu0 %v2143
        %2250 = vmatprep.subr.bf16.mxu0 %v2148
        %2251 = vmatpush1.bf16.msra.mxu0 %v2147
        %2252 = vmatprep.subr.bf16.mxu0 %v2152
        %2253 = vmatpush1.bf16.msra.mxu0 %v2151
        %2254 = vmatprep.subr.bf16.mxu0 %v2156
        %2255 = vmatpush1.bf16.msra.mxu0 %v2155
        %2256 = vmatprep.subr.bf16.mxu0 %v2160
        %2257 = vmatpush1.bf16.msra.mxu0 %v2159
        %2258 = vmatprep.subr.bf16.mxu0 %v2164
        %2259 = vmatpush1.bf16.msra.mxu0 %v2163
        %2260 = vmatprep.subr.bf16.mxu0 %v2168
        %2261 = vmatpush1.bf16.msra.mxu0 %v2167
        %2262 = vmatprep.subr.bf16.mxu0 %v2172
        %2263 = vmatpush1.bf16.msra.mxu0 %v2171
        %2264 = vmatprep.subr.bf16.mxu0 0
        %2265 = vmatpush1.bf16.msra.mxu0 0
        %2266 = vmatprep.subr.bf16.mxu0 0
        %2267 = vmatpush1.bf16.msra.mxu0 0
        %2268 = vmatprep.subr.bf16.mxu0 0
        %2269 = vmatpush1.bf16.msra.mxu0 0
        %2270 = vmatprep.subr.bf16.mxu0 0
        %2271 = vmatpush1.bf16.msra.mxu0 0
        %2272 = vmatprep.subr.bf16.mxu0 0
        %2273 = vmatpush1.bf16.msra.mxu0 0
        %2274 = vmatprep.subr.bf16.mxu0 0
        %2275 = vmatpush1.bf16.msra.mxu0 0
        %2276 = vmatprep.subr.bf16.mxu0 0
        %2277 = vmatpush1.bf16.msra.mxu0 0
        %2278 = vmatprep.subr.bf16.mxu0 0
        %2279 = vmatpush1.bf16.msra.mxu0 0
        %2280 = vmatprep.mubr.bf16.mxu0 0
        %2281 = vmatmul.mubr.bf16.gmra.mrb[0].mxu0 %v1990
        %v2282 = vpop.f32.mrb[0].mxu0
        %v2283 = vadd.f32 %v2036, %v2282
        %v2284 = vpop.f32.mrb[0].mxu0
        %v2285 = vadd.f32 %v2040, %v2284
        %v2286 = vpop.f32.mrb[0].mxu0
        %v2287 = vadd.f32 %v2036, %v2286
        %v2288 = vpop.f32.mrb[0].mxu0
        %v2289 = vadd.f32 %v2040, %v2288
        %2290 = vdwg.mxu0
        %v2291 = vmax.f32 %v2240, 0.0
        %v2292 = vmax.f32 %v2242, 0.0
        %v2293 = vmax.f32 %v2283, 0.0
        %v2294 = vmax.f32 %v2285, 0.0
        %v2295 = vmax.f32 %v2244, 0.0
        %v2296 = vmax.f32 %v2246, 0.0
        %v2297 = vmax.f32 %v2287, 0.0
        %v2298 = vmax.f32 %v2289, 0.0
        %v2299 = vpack.c.bf16 %v2295, %v2291
        %v2300 = vpack.c.bf16 %v2296, %v2292
        %v2301 = vpack.c.bf16 %v2297, %v2293
        %v2302 = vpack.c.bf16 %v2298, %v2294
        %v2303 = vld [vmem:[#allocation25] sm:$0xf]
        %v2304 = vld [vmem:[#allocation25 + $0x4] sm:$0xf]
        %v2305 = vld [vmem:[#allocation25 + $0x8] sm:$0xf]
        %v2306 = vld [vmem:[#allocation25 + $0xc] sm:$0xf]
        %v2307 = vld [vmem:[#allocation25 + $0x10] sm:$0xf]
        %v2308 = vld [vmem:[#allocation25 + $0x14] sm:$0xf]
        %v2309 = vld [vmem:[#allocation25 + $0x18] sm:$0xf]
        %v2310 = vld [vmem:[#allocation25 + $0x1c] sm:$0xf]
        %v2311 = vld [vmem:[#allocation25 + $0x20] sm:$0xf]
        %v2312 = vld [vmem:[#allocation25 + $0x24] sm:$0xf]
        %v2313 = vld [vmem:[#allocation25 + $0x28] sm:$0xf]
        %v2314 = vld [vmem:[#allocation25 + $0x2c] sm:$0xf]
        %v2315 = vld [vmem:[#allocation25 + $0x30] sm:$0xf]
        %v2316 = vld [vmem:[#allocation25 + $0x34] sm:$0xf]
        %v2317 = vld [vmem:[#allocation25 + $0x38] sm:$0xf]
        %v2318 = vld [vmem:[#allocation25 + $0x3c] sm:$0xf]
        %v2319 = vld [vmem:[#allocation25 + $0x40] sm:$0xf]
        %v2320 = vld [vmem:[#allocation25 + $0x44] sm:$0xf]
        %v2321 = vld [vmem:[#allocation25 + $0x48] sm:$0xf]
        %v2322 = vld [vmem:[#allocation25 + $0x4c] sm:$0xf]
        %v2323 = vld [vmem:[#allocation25 + $0x50] sm:$0xf]
        %v2324 = vld [vmem:[#allocation25 + $0x54] sm:$0xf]
        %v2325 = vld [vmem:[#allocation25 + $0x58] sm:$0xf]
        %v2326 = vld [vmem:[#allocation25 + $0x5c] sm:$0xf]
        %v2327 = vld [vmem:[#allocation25 + $0x60] sm:$0xf]
        %v2328 = vld [vmem:[#allocation25 + $0x64] sm:$0xf]
        %v2329 = vld [vmem:[#allocation25 + $0x68] sm:$0xf]
        %v2330 = vld [vmem:[#allocation25 + $0x6c] sm:$0xf]
        %v2331 = vld [vmem:[#allocation25 + $0x70] sm:$0xf]
        %v2332 = vld [vmem:[#allocation25 + $0x74] sm:$0xf]
        %v2333 = vld [vmem:[#allocation25 + $0x78] sm:$0xf]
        %v2334 = vld [vmem:[#allocation25 + $0x7c] sm:$0xf]
        %v2335 = vld [vmem:[#allocation25 + $0x80] sm:$0xf]
        %v2336 = vld [vmem:[#allocation25 + $0x84] sm:$0xf]
        %v2337 = vld [vmem:[#allocation25 + $0x88] sm:$0xf]
        %v2338 = vld [vmem:[#allocation25 + $0x8c] sm:$0xf]
        %v2339 = vld [vmem:[#allocation25 + $0x90] sm:$0xf]
        %v2340 = vld [vmem:[#allocation25 + $0x94] sm:$0xf]
        %v2341 = vld [vmem:[#allocation25 + $0x98] sm:$0xf]
        %v2342 = vld [vmem:[#allocation25 + $0x9c] sm:$0xf]
        %v2343 = vld [vmem:[#allocation25 + $0xa0] sm:$0xf]
        %v2344 = vld [vmem:[#allocation25 + $0xa4] sm:$0xf]
        %v2345 = vld [vmem:[#allocation25 + $0xa8] sm:$0xf]
        %v2346 = vld [vmem:[#allocation25 + $0xac] sm:$0xf]
        %v2347 = vld [vmem:[#allocation25 + $0xb0] sm:$0xf]
        %v2348 = vld [vmem:[#allocation25 + $0xb4] sm:$0xf]
        %v2349 = vld [vmem:[#allocation25 + $0xb8] sm:$0xf]
        %v2350 = vld [vmem:[#allocation25 + $0xbc] sm:$0xf]
        %v2351 = vld [vmem:[#allocation25 + $0xc0] sm:$0xf]
        %v2352 = vld [vmem:[#allocation25 + $0xc4] sm:$0xf]
        %v2353 = vld [vmem:[#allocation25 + $0xc8] sm:$0xf]
        %v2354 = vld [vmem:[#allocation25 + $0xcc] sm:$0xf]
        %v2355 = vld [vmem:[#allocation25 + $0xd0] sm:$0xf]
        %v2356 = vld [vmem:[#allocation25 + $0xd4] sm:$0xf]
        %v2357 = vld [vmem:[#allocation25 + $0xd8] sm:$0xf]
        %v2358 = vld [vmem:[#allocation25 + $0xdc] sm:$0xf]
        %v2359 = vld [vmem:[#allocation25 + $0xe0] sm:$0xf]
        %v2360 = vld [vmem:[#allocation25 + $0xe4] sm:$0xf]
        %v2361 = vld [vmem:[#allocation25 + $0xe8] sm:$0xf]
        %v2362 = vld [vmem:[#allocation25 + $0xec] sm:$0xf]
        %v2363 = vld [vmem:[#allocation25 + $0xf0] sm:$0xf]
        %v2364 = vld [vmem:[#allocation25 + $0xf4] sm:$0xf]
        %v2365 = vld [vmem:[#allocation25 + $0xf8] sm:$0xf]
        %v2366 = vld [vmem:[#allocation25 + $0xfc] sm:$0xf]
        %v2367 = vld [vmem:[#allocation27] sm:$0x1]
        %v2369 = vlaneseq
        %v2370 = vshrl.u32 %v2369, 7
        %v2371 = vsub.s32 0, %v2370
        %v2372 = vrot.slane %v2367, %v2371
        %v2438 = vunpack.c.l.b16 %v2303
        %v2439 = vunpack.c.l.b16 %v2304
        %v2440 = vunpack.c.l.b16 %v2305
        %v2441 = vunpack.c.l.b16 %v2306
        %v2442 = vunpack.c.l.b16 %v2307
        %v2443 = vunpack.c.l.b16 %v2308
        %v2444 = vunpack.c.l.b16 %v2309
        %v2445 = vunpack.c.l.b16 %v2310
        %v2446 = vunpack.c.l.b16 %v2311
        %v2447 = vunpack.c.l.b16 %v2312
        %v2448 = vunpack.c.l.b16 %v2313
        %v2449 = vunpack.c.l.b16 %v2314
        %v2450 = vunpack.c.l.b16 %v2315
        %v2451 = vunpack.c.l.b16 %v2316
        %v2452 = vunpack.c.l.b16 %v2317
        %v2453 = vunpack.c.l.b16 %v2318
        %v2454 = vunpack.c.l.b16 %v2319
        %v2455 = vunpack.c.l.b16 %v2320
        %v2456 = vunpack.c.l.b16 %v2321
        %v2457 = vunpack.c.l.b16 %v2322
        %v2458 = vunpack.c.l.b16 %v2323
        %v2459 = vunpack.c.l.b16 %v2324
        %v2460 = vunpack.c.l.b16 %v2325
        %v2461 = vunpack.c.l.b16 %v2326
        %v2462 = vunpack.c.l.b16 %v2327
        %v2463 = vunpack.c.l.b16 %v2328
        %v2464 = vunpack.c.l.b16 %v2329
        %v2465 = vunpack.c.l.b16 %v2330
        %v2466 = vunpack.c.l.b16 %v2331
        %v2467 = vunpack.c.l.b16 %v2332
        %v2468 = vunpack.c.l.b16 %v2333
        %v2469 = vunpack.c.l.b16 %v2334
        %v2470 = vunpack.c.l.b16 %v2335
        %v2471 = vunpack.c.l.b16 %v2336
        %v2472 = vunpack.c.l.b16 %v2337
        %v2473 = vunpack.c.l.b16 %v2338
        %v2474 = vunpack.c.l.b16 %v2339
        %v2475 = vunpack.c.l.b16 %v2340
        %v2476 = vunpack.c.l.b16 %v2341
        %v2477 = vunpack.c.l.b16 %v2342
        %v2478 = vunpack.c.l.b16 %v2343
        %v2479 = vunpack.c.l.b16 %v2344
        %v2480 = vunpack.c.l.b16 %v2345
        %v2481 = vunpack.c.l.b16 %v2346
        %v2482 = vunpack.c.l.b16 %v2347
        %v2483 = vunpack.c.l.b16 %v2348
        %v2484 = vunpack.c.l.b16 %v2349
        %v2485 = vunpack.c.l.b16 %v2350
        %v2486 = vunpack.c.l.b16 %v2351
        %v2487 = vunpack.c.l.b16 %v2352
        %v2488 = vunpack.c.l.b16 %v2353
        %v2489 = vunpack.c.l.b16 %v2354
        %v2490 = vunpack.c.l.b16 %v2355
        %v2491 = vunpack.c.l.b16 %v2356
        %v2492 = vunpack.c.l.b16 %v2357
        %v2493 = vunpack.c.l.b16 %v2358
        %v2494 = vunpack.c.l.b16 %v2359
        %v2495 = vunpack.c.l.b16 %v2360
        %v2496 = vunpack.c.l.b16 %v2361
        %v2497 = vunpack.c.l.b16 %v2362
        %v2498 = vunpack.c.l.b16 %v2363
        %v2499 = vunpack.c.l.b16 %v2364
        %v2500 = vunpack.c.l.b16 %v2365
        %v2501 = vunpack.c.l.b16 %v2366
        %v2502 = vpack.c.b16 %v2439, %v2438
        %v2503 = vpack.c.b16 %v2441, %v2440
        %v2504 = vpack.c.b16 %v2443, %v2442
        %v2505 = vpack.c.b16 %v2445, %v2444
        %v2506 = vpack.c.b16 %v2447, %v2446
        %v2507 = vpack.c.b16 %v2449, %v2448
        %v2508 = vpack.c.b16 %v2451, %v2450
        %v2509 = vpack.c.b16 %v2453, %v2452
        %v2510 = vpack.c.b16 %v2455, %v2454
        %v2511 = vpack.c.b16 %v2457, %v2456
        %v2512 = vpack.c.b16 %v2459, %v2458
        %v2513 = vpack.c.b16 %v2461, %v2460
        %v2514 = vpack.c.b16 %v2463, %v2462
        %v2515 = vpack.c.b16 %v2465, %v2464
        %v2516 = vpack.c.b16 %v2467, %v2466
        %v2517 = vpack.c.b16 %v2469, %v2468
        %v2518 = vpack.c.b16 %v2471, %v2470
        %v2519 = vpack.c.b16 %v2473, %v2472
        %v2520 = vpack.c.b16 %v2475, %v2474
        %v2521 = vpack.c.b16 %v2477, %v2476
        %v2522 = vpack.c.b16 %v2479, %v2478
        %v2523 = vpack.c.b16 %v2481, %v2480
        %v2524 = vpack.c.b16 %v2483, %v2482
        %v2525 = vpack.c.b16 %v2485, %v2484
        %v2526 = vpack.c.b16 %v2487, %v2486
        %v2527 = vpack.c.b16 %v2489, %v2488
        %v2528 = vpack.c.b16 %v2491, %v2490
        %v2529 = vpack.c.b16 %v2493, %v2492
        %v2530 = vpack.c.b16 %v2495, %v2494
        %v2531 = vpack.c.b16 %v2497, %v2496
        %v2532 = vpack.c.b16 %v2499, %v2498
        %v2533 = vpack.c.b16 %v2501, %v2500
        %2566 = vmatprep.subr.bf16.mxu0 0
        %2567 = vmatpush1.bf16.msra.mxu0 %v2502
        %2568 = vmatprep.subr.bf16.mxu0 0
        %2569 = vmatpush1.bf16.msra.mxu0 %v2503
        %2570 = vmatprep.subr.bf16.mxu0 0
        %2571 = vmatpush1.bf16.msra.mxu0 %v2504
        %2572 = vmatprep.subr.bf16.mxu0 0
        %2573 = vmatpush1.bf16.msra.mxu0 %v2505
        %2574 = vmatprep.subr.bf16.mxu0 0
        %2575 = vmatpush1.bf16.msra.mxu0 %v2506
        %2576 = vmatprep.subr.bf16.mxu0 0
        %2577 = vmatpush1.bf16.msra.mxu0 %v2507
        %2578 = vmatprep.subr.bf16.mxu0 0
        %2579 = vmatpush1.bf16.msra.mxu0 %v2508
        %2580 = vmatprep.subr.bf16.mxu0 0
        %2581 = vmatpush1.bf16.msra.mxu0 %v2509
        %2582 = vmatprep.subr.bf16.mxu0 0
        %2583 = vmatpush1.bf16.msra.mxu0 %v2510
        %2584 = vmatprep.subr.bf16.mxu0 0
        %2585 = vmatpush1.bf16.msra.mxu0 %v2511
        %2586 = vmatprep.subr.bf16.mxu0 0
        %2587 = vmatpush1.bf16.msra.mxu0 %v2512
        %2588 = vmatprep.subr.bf16.mxu0 0
        %2589 = vmatpush1.bf16.msra.mxu0 %v2513
        %2590 = vmatprep.subr.bf16.mxu0 0
        %2591 = vmatpush1.bf16.msra.mxu0 %v2514
        %2592 = vmatprep.subr.bf16.mxu0 0
        %2593 = vmatpush1.bf16.msra.mxu0 %v2515
        %2594 = vmatprep.subr.bf16.mxu0 0
        %2595 = vmatpush1.bf16.msra.mxu0 %v2516
        %2596 = vmatprep.subr.bf16.mxu0 0
        %2597 = vmatpush1.bf16.msra.mxu0 %v2517
        %2598 = vmatprep.mubr.bf16.mxu0 %v2300
        %2599 = vmatmul.mubr.bf16.gmra.mrb[0].mxu0 %v2299
        %v2600 = vpop.f32.mrb[0].mxu0
        %v2601 = vadd.f32 %v2372, %v2600
        %v2602 = vpop.f32.mrb[0].mxu0
        %v2603 = vpop.f32.mrb[0].mxu0
        %v2604 = vadd.f32 %v2372, %v2603
        %v2605 = vpop.f32.mrb[0].mxu0
        %2606 = vdwg.mxu0
        %2607 = vmatprep.subr.bf16.mxu0 0
        %2608 = vmatpush1.bf16.msra.mxu0 %v2518
        %2609 = vmatprep.subr.bf16.mxu0 0
        %2610 = vmatpush1.bf16.msra.mxu0 %v2519
        %2611 = vmatprep.subr.bf16.mxu0 0
        %2612 = vmatpush1.bf16.msra.mxu0 %v2520
        %2613 = vmatprep.subr.bf16.mxu0 0
        %2614 = vmatpush1.bf16.msra.mxu0 %v2521
        %2615 = vmatprep.subr.bf16.mxu0 0
        %2616 = vmatpush1.bf16.msra.mxu0 %v2522
        %2617 = vmatprep.subr.bf16.mxu0 0
        %2618 = vmatpush1.bf16.msra.mxu0 %v2523
        %2619 = vmatprep.subr.bf16.mxu0 0
        %2620 = vmatpush1.bf16.msra.mxu0 %v2524
        %2621 = vmatprep.subr.bf16.mxu0 0
        %2622 = vmatpush1.bf16.msra.mxu0 %v2525
        %2623 = vmatprep.subr.bf16.mxu0 0
        %2624 = vmatpush1.bf16.msra.mxu0 %v2526
        %2625 = vmatprep.subr.bf16.mxu0 0
        %2626 = vmatpush1.bf16.msra.mxu0 %v2527
        %2627 = vmatprep.subr.bf16.mxu0 0
        %2628 = vmatpush1.bf16.msra.mxu0 %v2528
        %2629 = vmatprep.subr.bf16.mxu0 0
        %2630 = vmatpush1.bf16.msra.mxu0 %v2529
        %2631 = vmatprep.subr.bf16.mxu0 0
        %2632 = vmatpush1.bf16.msra.mxu0 %v2530
        %2633 = vmatprep.subr.bf16.mxu0 0
        %2634 = vmatpush1.bf16.msra.mxu0 %v2531
        %2635 = vmatprep.subr.bf16.mxu0 0
        %2636 = vmatpush1.bf16.msra.mxu0 %v2532
        %2637 = vmatprep.subr.bf16.mxu0 0
        %2638 = vmatpush1.bf16.msra.mxu0 %v2533
        %2639 = vmatprep.mubr.bf16.mxu0 %v2302
        %2640 = vmatmul.mubr.bf16.gmra.mrb[0].mxu0 %v2301
        %v2641 = vpop.f32.mrb[0].mxu0
        %v2642 = vadd.f32 %v2601, %v2641
        %v2643 = vpop.f32.mrb[0].mxu0
        %v2644 = vpop.f32.mrb[0].mxu0
        %v2645 = vadd.f32 %v2604, %v2644
        %v2646 = vpop.f32.mrb[0].mxu0
        %2647 = vdwg.mxu0
        %v2648 = vadd.f32 %v1988, %v2642
        %v2649 = vadd.f32 %v1989, %v2645
        %2650 = vadd.xlane.f32.xlu0 %v2648
        %v2651 = vpop.xlane.xlu0 %2650
        %2652 = vadd.xlane.f32.xlu0 %v2649
        %v2653 = vpop.xlane.xlu0 %2652
        %v2654 = vmul.f32 %v2651, %v1953
        %v2655 = vmul.f32 %v2653, %v1953
        %v2656 = vsub.f32 %v2648, %v2654
        %v2657 = vsub.f32 %v2649, %v2655
        %v2658 = vmul.f32 %v2656, %v2656
        %v2659 = vmul.f32 %v2657, %v2657
        %2660 = vadd.xlane.f32.xlu0 %v2658
        %v2661 = vpop.xlane.xlu0 %2660
        %2662 = vadd.xlane.f32.xlu0 %v2659
        %v2663 = vpop.xlane.xlu0 %2662
        %v2664 = vmul.f32 %v2661, %v1953
        %v2665 = vmul.f32 %v2663, %v1953
        %v2666 = vadd.f32 %v2664, 1e-05
        %v2667 = vadd.f32 %v2665, 1e-05
        %v2668 = vrsqrt.pop %v2666
        %v2669 = vrsqrt.pop %v2667
        %v2670 = vmul.f32 %v2656, %v2668
        %v2671 = vmul.f32 %v2657, %v2669
        %v2672 = vld [vmem:[#allocation28] sm:$0x1]
        %v2674 = vlaneseq
        %v2675 = vshrl.u32 %v2674, 7
        %v2676 = vsub.s32 0, %v2675
        %v2677 = vrot.slane %v2672, %v2676
        %v2679 = vmul.f32 %v2670, %v2677
        %v2680 = vmul.f32 %v2671, %v2677
        %v2681 = vld [vmem:[#allocation30] sm:$0x1]
        %v2683 = vlaneseq
        %v2684 = vshrl.u32 %v2683, 7
        %v2685 = vsub.s32 0, %v2684
        %v2686 = vrot.slane %v2681, %v2685
        %v2688 = vadd.f32 %v2679, %v2686
        %v2689 = vadd.f32 %v2680, %v2686
        %2690 = vst [vmem:[%s791] sm:$0xff] %v2688
        %2691 = vst [vmem:[%s791 + $0x8] sm:$0xff] %v2689
        %s2692 = sand.u32 %s426, 1
        %s2693 = scalar_lea.sflag [#allocation6], %s2692
        %s2694 = sand.u32 %s426, 1
        %s2695 = smul.addr %s2694, 16
        %s2696 = scalar_lea.vmem [#allocation31], %s2695
        // Predicated region
        $region175: #{tpu_custom_call.1} parent=87 // pred_check
          %p2697 = pneg %p436
        $region176: #{tpu_custom_call.1} parent=87 // pred_check_branch
          %2699 = sbr.rel (%p2697) target = $region178
        $region177: #{tpu_custom_call.1} parent=87 // pred_region
          %s2700 = smul.u32 2, %s47
          %s2702 = ssub.s32 256, 256
          %2703 = vsyncadd %s2693, %s2702
          %s2704 = smul.addr %s2700, 2
          %s2705 = sadd.s32 %s46, %s2704
          %s2706 = smul.addr %s2705, 128
          %s2707 = scalar_lea.hbm %s17, %s2706
          %s2708 = sshll.u32 %s2696, 4
          %s2709 = int_to_ptr.vmem [resolvable:$true] %s2708
          %2714 = dma.vmem_to_hbm [thread:$0]  %s2709, 256, %s2707, %s2693, 128, 256, 8
        $region178: #{tpu_custom_call.1} parent=87 // pred_fallthru
          _
      $region88: #{tpu_custom_call.1} parent=5 // pred_fallthru
        _
      %p2715 = scmp.le.s32.totalorder 2, %s37
      // Predicated region
      $region179: #{tpu_custom_call.1} parent=5 // pred_check
        %p2716 = pneg %p2715
      $region180: #{tpu_custom_call.1} parent=5 // pred_check_branch
        %2718 = sbr.rel (%p2716) target = $region182
      $region181: #{tpu_custom_call.1} parent=5 // pred_region
        %s2719 = ssub.s32 %s37, 2
        // Predicated region
        $region183: #{tpu_custom_call.1} parent=181 // pred_check
          %p2720 = pneg %p442
        $region184: #{tpu_custom_call.1} parent=181 // pred_check_branch
          %2722 = sbr.rel (%p2720) target = $region186
        $region185: #{tpu_custom_call.1} parent=181 // pred_region
          %s2723 = sand.u32 %s427, 1
          %s2724 = scalar_lea.sflag [#allocation6], %s2723
          %s2725 = sand.u32 %s427, 1
          %s2726 = smul.addr %s2725, 16
          %s2727 = scalar_lea.vmem [#allocation31], %s2726
          %2728 = dma.done %s2724, 256
        $region186: #{tpu_custom_call.1} parent=181 // pred_fallthru
          _
      $region182: #{tpu_custom_call.1} parent=5 // pred_fallthru
        _
    $region6: #{tpu_custom_call.1} parent=1 // loop_footer
      %s41 = sadd.s32 1, %s37
    $region7: #{tpu_custom_call.1} parent=1 // loop_footer_branch
      %36 = sbr.rel target = $region3
    $region8: #{tpu_custom_call.1} parent=1 // loop_exit
      _
    %2729 = vsyncpa [#allocation5], 1
    %s2730 = scalar_lea.sflag [#allocation5], 1
    %2731 = vsyncpa %s2730, 1
    %2732 = vsyncpa [#allocation8], 1
    %2733 = vsyncpa [#allocation11], 1
    %2734 = vsyncpa [#allocation14], 1
    %2735 = vsyncpa [#allocation17], 1
    %2736 = vsyncpa [#allocation20], 1
    %2737 = vsyncpa [#allocation23], 1
    %2738 = vsyncpa [#allocation26], 1
    %2739 = vsyncpa [#allocation29], 1
    %2740 = vsyncpa [#allocation6], 1
    %s2741 = scalar_lea.sflag [#allocation6], 1
    %2742 = vsyncpa %s2741, 1

</llo_original>
